<compile_context>
chip_gen: v7x
topology: tpu7x:2x2x1
jax: 0.10.0
libtpu: 0.0.40
codegen_flags: <defaults>
</compile_context>

<pallas_src>
import numpy as np

import jax
import jax.numpy as jnp
from jax.experimental import pallas as pl
from jax.experimental.pallas import tpu as pltpu

# ----------------------------- configuration -------------------------------
NUM_FRAMES = 4
FRAME_SKIP = 1
H = W = 16
ACTION_DIM = 2
STATE_DIM = 3
ENC_NUM_FILTERS = 8
ENC_FEATURE_DIM = 32
TRUNK_LAYERS = 2
TRUNK_UNITS = 32
NUM_SIM_PARAMS = 3            # `shape` in the PyTorch module
OUT_PAD = 128                 # lane-dense padded width of the final layer

ENC_IN_CH = 3 * NUM_FRAMES    # non-share-encoder path: (3*num_frames, H, W)
ACT_FLAT_DIM = ACTION_DIM * NUM_FRAMES * FRAME_SKIP     # 8
STATE_FLAT_DIM = STATE_DIM * NUM_FRAMES                 # 12
TRUNK_IN_DIM = ENC_FEATURE_DIM + STATE_FLAT_DIM + ACT_FLAT_DIM   # 52

CONV1_OUT_HW = (H - 3) // 2 + 1        # 7
CONV2_OUT_HW = CONV1_OUT_HW - 3 + 1    # 5
FC_IN_DIM = ENC_NUM_FILTERS * CONV2_OUT_HW * CONV2_OUT_HW   # 200


# ------------------------------ fused kernel --------------------------------
def _fused_forward_kernel(
        obs_ref, act_ref, st_ref,
        c1w_ref, c1b_ref, c2w_ref, c2b_ref,
        fcw_ref, fcb_ref, lng_ref, lnb_ref,
        t1f_ref, t1a_ref, t1s_ref, t1b_ref,
        t2w_ref, t2b_ref, t3w_ref, t3b_ref,
        o_ref):
    f32 = jnp.float32

    # ---- pixel encoder (convs folded to dense matmuls at init time) ----
    x = obs_ref[...] * (1.0 / 255.0)                                  # [1, 3072]
    c1 = jnp.dot(x, c1w_ref[...], preferred_element_type=f32) + c1b_ref[...]
    c1 = jnp.maximum(c1, 0.0)                                         # [1, 392]
    c2 = jnp.dot(c1, c2w_ref[...], preferred_element_type=f32) + c2b_ref[...]
    c2 = jnp.maximum(c2, 0.0)                                         # [1, 200]
    h = jnp.dot(c2, fcw_ref[...], preferred_element_type=f32) + fcb_ref[...]   # [1, 32]
    mean = jnp.mean(h, axis=-1, keepdims=True)
    var = jnp.mean((h - mean) ** 2, axis=-1, keepdims=True)
    feat = (h - mean) * jax.lax.rsqrt(var + 1e-5) * lng_ref[...] + lnb_ref[...]

    # ---- trunk: layer 1 split over feat / actions / states (no concat) ----
    def elu(v):
        return jnp.where(v > 0.0, v, jnp.exp(v) - 1.0)

    h1 = (jnp.dot(feat, t1f_ref[...], preferred_element_type=f32)
          + jnp.dot(act_ref[...], t1a_ref[...], preferred_element_type=f32)
          + jnp.dot(st_ref[...], t1s_ref[...], preferred_element_type=f32)
          + t1b_ref[...])
    h1 = elu(h1)
    h2 = elu(jnp.dot(h1, t2w_ref[...], preferred_element_type=f32) + t2b_ref[...])
    # nn.Dropout(p=0.5) is identity in eval mode (deterministic forward).
    y = jnp.dot(h2, t3w_ref[...], preferred_element_type=f32) + t3b_ref[...]   # [1, 128]
    o_ref[...] = jnp.exp(y)        # torch.exp(self.trunk(fake_pred)), lane-dense


_KPARAM_ORDER = ("c1w", "c1b", "c2w", "c2b",
                 "fcw", "fcb", "lng", "lnb",
                 "t1f", "t1a", "t1s", "t1b",
                 "t2w", "t2b", "t3w", "t3b")


def sim_param_forward(kparams, obs, states, actions):
    """obs: [num_frames, 3, H, W] (pixels 0..255), states: [num_frames, state_dim],
       actions: [num_frames*frame_skip, action_dim].
       Returns exp(trunk(...)) of shape [num_sim_params]."""
    obs_flat = obs.reshape(1, ENC_IN_CH * H * W).astype(jnp.float32)
    act_flat = actions.reshape(1, ACT_FLAT_DIM).astype(jnp.float32)
    st_flat = states.reshape(1, STATE_FLAT_DIM).astype(jnp.float32)
    operands = (obs_flat, act_flat, st_flat) + tuple(kparams[k] for k in _KPARAM_ORDER)

    vmem = pltpu.MemorySpace.VMEM
    out = pl.pallas_call(
        _fused_forward_kernel,
        out_shape=jax.ShapeDtypeStruct((1, OUT_PAD), jnp.float32),
        in_specs=[pl.BlockSpec(memory_space=vmem)] * len(operands),
        out_specs=pl.BlockSpec(memory_space=vmem),
        compiler_params=pltpu.CompilerParams(vmem_limit_bytes=32 * 1024 * 1024),
    )(*operands)
    # TODO(synk): for >1 trajectory, stack trajectories on a batched M dim and
    # put the batch axis on a grid marked "parallel" (megacore on v7x).
    return out[0, :NUM_SIM_PARAMS]


# --------------------- host-side one-time parameter prep --------------------
def _conv_as_matmul(w_flat, b, cin, hin, win, k, stride):
    """Fold a VALID conv (NCHW, weight flattened as [cin*k*k, cout] with row
    index c*k*k + i*k + j) into an equivalent dense matmul such that
      flat_row_major([cin,hin,win]) @ T + Tb == channel_major_flat(conv(x)).
    Built once on the host with numpy; the kernel only sees plain dots."""
    w_flat = np.asarray(w_flat, np.float32)
    cout = w_flat.shape[1]
    hout = (hin - k) // stride + 1
    wout = (win - k) // stride + 1
    Wr = w_flat.reshape(cin, k, k, cout)
    T = np.zeros((cin * hin * win, cout * hout * wout), np.float32)
    for c in range(cin):
        for i in range(k):
            for j in range(k):
                for y in range(hout):
                    row = c * hin * win + (stride * y + i) * win
                    for x in range(wout):
                        in_idx = row + stride * x + j
                        # output column = f*hout*wout + y*wout + x, for all f
                        T[in_idx, y * wout + x::hout * wout] = Wr[c, i, j, :]
    Tb = np.repeat(np.asarray(b, np.float32).reshape(cout), hout * wout)[None, :]
    return jnp.asarray(T), jnp.asarray(Tb)


def prepare_kernel_params(params):
    """One-time transform of PyTorch-style params into the fused-kernel layout."""
    c1w, c1b = _conv_as_matmul(params["conv1_w"], params["conv1_b"],
                               ENC_IN_CH, H, W, 3, 2)
    c2w, c2b = _conv_as_matmul(params["conv2_w"], params["conv2_b"],
                               ENC_NUM_FILTERS, CONV1_OUT_HW, CONV1_OUT_HW, 3, 1)
    tw1 = params["t_w1"]
    t1f = tw1[:ENC_FEATURE_DIM]
    t1a = tw1[ENC_FEATURE_DIM:ENC_FEATURE_DIM + ACT_FLAT_DIM]
    t1s = tw1[ENC_FEATURE_DIM + ACT_FLAT_DIM:]
    t3w = jnp.zeros((TRUNK_UNITS, OUT_PAD), jnp.float32)
    t3w = t3w.at[:, :NUM_SIM_PARAMS].set(params["t_w3"])
    t3b = jnp.zeros((1, OUT_PAD), jnp.float32)
    t3b = t3b.at[:, :NUM_SIM_PARAMS].set(params["t_b3"])
    return {
        "c1w": c1w, "c1b": c1b, "c2w": c2w, "c2b": c2b,
        "fcw": params["fc_w"], "fcb": params["fc_b"],
        "lng": params["ln_g"], "lnb": params["ln_b"],
        "t1f": t1f, "t1a": t1a, "t1s": t1s, "t1b": params["t_b1"],
        "t2w": params["t_w2"], "t2b": params["t_b2"],
        "t3w": t3w, "t3b": t3b,
    }


# ---------------------------- params & reference ----------------------------
def init_params(key):
    ks = jax.random.split(key, 12)

    def lin(k, fan_in, fan_out):
        scale = 1.0 / jnp.sqrt(jnp.float32(fan_in))
        return jax.random.normal(k, (fan_in, fan_out), jnp.float32) * scale * 0.5

    return {
        # conv weights stored pre-flattened as [C_in*kh*kw, C_out]
        "conv1_w": lin(ks[0], ENC_IN_CH * 9, ENC_NUM_FILTERS),
        "conv1_b": jax.random.normal(ks[1], (1, ENC_NUM_FILTERS), jnp.float32) * 0.01,
        "conv2_w": lin(ks[2], ENC_NUM_FILTERS * 9, ENC_NUM_FILTERS),
        "conv2_b": jax.random.normal(ks[3], (1, ENC_NUM_FILTERS), jnp.float32) * 0.01,
        "fc_w": lin(ks[4], FC_IN_DIM, ENC_FEATURE_DIM),
        "fc_b": jax.random.normal(ks[5], (1, ENC_FEATURE_DIM), jnp.float32) * 0.01,
        "ln_g": jnp.ones((1, ENC_FEATURE_DIM), jnp.float32),
        "ln_b": jnp.zeros((1, ENC_FEATURE_DIM), jnp.float32),
        "t_w1": lin(ks[6], TRUNK_IN_DIM, TRUNK_UNITS),
        "t_b1": jax.random.normal(ks[7], (1, TRUNK_UNITS), jnp.float32) * 0.01,
        "t_w2": lin(ks[8], TRUNK_UNITS, TRUNK_UNITS),
        "t_b2": jax.random.normal(ks[9], (1, TRUNK_UNITS), jnp.float32) * 0.01,
        "t_w3": lin(ks[10], TRUNK_UNITS, NUM_SIM_PARAMS),
        "t_b3": jax.random.normal(ks[11], (1, NUM_SIM_PARAMS), jnp.float32) * 0.01,
    }


def im2col(x, kh, kw, stride):
    """x: [C, H, W] -> ([Ho*Wo, C*kh*kw], Ho, Wo); column order (c, i, j)."""
    c, h, w = x.shape
    ho = (h - kh) // stride + 1
    wo = (w - kw) // stride + 1
    cols = jnp.stack(
        [x[:, i:i + stride * ho:stride, j:j + stride * wo:stride]
         for i in range(kh) for j in range(kw)],
        axis=1)                                    # [C, kh*kw, Ho, Wo]
    patches = cols.reshape(c * kh * kw, ho * wo).T
    return patches, ho, wo


def reference_forward(params, obs, states, actions):
    """Pure-JAX reference (im2col + small conv weights) for correctness check."""
    x = obs.reshape(ENC_IN_CH, H, W) / 255.0
    p1, h1, w1 = im2col(x, 3, 3, 2)
    c1 = jnp.maximum(p1 @ params["conv1_w"] + params["conv1_b"], 0.0)
    c1 = c1.T.reshape(ENC_NUM_FILTERS, h1, w1)
    p2, h2, w2 = im2col(c1, 3, 3, 1)
    c2 = jnp.maximum(p2 @ params["conv2_w"] + params["conv2_b"], 0.0)
    c2 = c2.T.reshape(ENC_NUM_FILTERS, h2, w2)
    flat = c2.reshape(1, -1)
    h = flat @ params["fc_w"] + params["fc_b"]
    mean = jnp.mean(h, -1, keepdims=True)
    var = jnp.mean((h - mean) ** 2, -1, keepdims=True)
    feat = (h - mean) / jnp.sqrt(var + 1e-5) * params["ln_g"] + params["ln_b"]
    fp = jnp.concatenate([feat.reshape(-1), actions.reshape(-1),
                          states.reshape(-1)])[None, :]

    def elu(v):
        return jnp.where(v > 0.0, v, jnp.exp(v) - 1.0)

    hh = elu(fp @ params["t_w1"] + params["t_b1"])
    hh = elu(hh @ params["t_w2"] + params["t_b2"])
    return jnp.exp(hh @ params["t_w3"] + params["t_b3"]).reshape(-1)


# TODO(synk): host-side trajectory window sampling (np.random.choice), Dropout
# randomness, feature_norm bookkeeping and the Adam optimizer are training-time
# host logic, not kernel work (Dropout is identity in eval mode).

if __name__ == "__main__":
    key = jax.random.PRNGKey(0)
    k_obs, k_state, k_act, k_param = jax.random.split(key, 4)

    obs = jax.random.uniform(k_obs, (NUM_FRAMES, 3, H, W), jnp.float32,
                             minval=0.0, maxval=255.0)
    states = jax.random.normal(k_state, (NUM_FRAMES, STATE_DIM), jnp.float32)
    actions = jax.random.normal(
        k_act, (NUM_FRAMES * FRAME_SKIP, ACTION_DIM), jnp.float32)

    params = init_params(k_param)
    kparams = prepare_kernel_params(params)     # one-time host prep

    fwd = jax.jit(sim_param_forward)
    out = jax.block_until_ready(fwd(kparams, obs, states, actions))

    ref = reference_forward(params, obs, states, actions)
    assert out.shape == (NUM_SIM_PARAMS,)
    assert jnp.allclose(out, ref, rtol=2e-3, atol=2e-3), (out, ref)

    print("KERNEL_OK")
</pallas_src>

<mosaic_0001>
module attributes {stable_mosaic.version = 11 : i64} {
  func.func @_fused_forward_kernel(%arg0: memref<1x3072xf32, #tpu.memory_space<vmem>>, %arg1: memref<1x8xf32, #tpu.memory_space<vmem>>, %arg2: memref<1x12xf32, #tpu.memory_space<vmem>>, %arg3: memref<3072x392xf32, #tpu.memory_space<vmem>>, %arg4: memref<1x392xf32, #tpu.memory_space<vmem>>, %arg5: memref<392x200xf32, #tpu.memory_space<vmem>>, %arg6: memref<1x200xf32, #tpu.memory_space<vmem>>, %arg7: memref<200x32xf32, #tpu.memory_space<vmem>>, %arg8: memref<1x32xf32, #tpu.memory_space<vmem>>, %arg9: memref<1x32xf32, #tpu.memory_space<vmem>>, %arg10: memref<1x32xf32, #tpu.memory_space<vmem>>, %arg11: memref<32x32xf32, #tpu.memory_space<vmem>>, %arg12: memref<8x32xf32, #tpu.memory_space<vmem>>, %arg13: memref<12x32xf32, #tpu.memory_space<vmem>>, %arg14: memref<1x32xf32, #tpu.memory_space<vmem>>, %arg15: memref<32x32xf32, #tpu.memory_space<vmem>>, %arg16: memref<1x32xf32, #tpu.memory_space<vmem>>, %arg17: memref<32x128xf32, #tpu.memory_space<vmem>>, %arg18: memref<1x128xf32, #tpu.memory_space<vmem>>, %arg19: memref<1x128xf32, #tpu.memory_space<vmem>>) attributes {dimension_semantics = [], scalar_prefetch = 0 : i64, scratch_operands = 0 : i64, tpu.core_type = #tpu.core_type<tc>} {
    %c0 = arith.constant 0 : index
    %c0_0 = arith.constant 0 : index
    %0 = vector.load %arg0[%c0, %c0_0] : memref<1x3072xf32, #tpu.memory_space<vmem>>, vector<1x3072xf32>
    %cst = arith.constant 0.00392156886 : f32
    %1 = vector.broadcast %cst : f32 to vector<1x3072xf32>
    %2 = arith.mulf %0, %1 : vector<1x3072xf32>
    %c0_1 = arith.constant 0 : index
    %c0_2 = arith.constant 0 : index
    %3 = vector.load %arg3[%c0_1, %c0_2] : memref<3072x392xf32, #tpu.memory_space<vmem>>, vector<3072x392xf32>
    %cst_3 = arith.constant dense<0.000000e+00> : vector<1x392xf32>
    %4 = tpu.matmul %2, %3, %cst_3 {dimension_numbers = #tpu.dot_dimension_numbers<[1], [0], [0], [1], [0, 0, 1, 1], [], []>} : vector<1x3072xf32>, vector<3072x392xf32>, vector<1x392xf32> -> vector<1x392xf32>
    %c0_4 = arith.constant 0 : index
    %c0_5 = arith.constant 0 : index
    %5 = vector.load %arg4[%c0_4, %c0_5] : memref<1x392xf32, #tpu.memory_space<vmem>>, vector<1x392xf32>
    %6 = arith.addf %4, %5 : vector<1x392xf32>
    %cst_6 = arith.constant 0.000000e+00 : f32
    %7 = vector.broadcast %cst_6 : f32 to vector<1x392xf32>
    %8 = arith.maximumf %6, %7 : vector<1x392xf32>
    %c0_7 = arith.constant 0 : index
    %c0_8 = arith.constant 0 : index
    %9 = vector.load %arg5[%c0_7, %c0_8] : memref<392x200xf32, #tpu.memory_space<vmem>>, vector<392x200xf32>
    %cst_9 = arith.constant dense<0.000000e+00> : vector<1x200xf32>
    %10 = tpu.matmul %8, %9, %cst_9 {dimension_numbers = #tpu.dot_dimension_numbers<[1], [0], [0], [1], [0, 0, 1, 1], [], []>} : vector<1x392xf32>, vector<392x200xf32>, vector<1x200xf32> -> vector<1x200xf32>
    %c0_10 = arith.constant 0 : index
    %c0_11 = arith.constant 0 : index
    %11 = vector.load %arg6[%c0_10, %c0_11] : memref<1x200xf32, #tpu.memory_space<vmem>>, vector<1x200xf32>
    %12 = arith.addf %10, %11 : vector<1x200xf32>
    %cst_12 = arith.constant 0.000000e+00 : f32
    %13 = vector.broadcast %cst_12 : f32 to vector<1x200xf32>
    %14 = arith.maximumf %12, %13 : vector<1x200xf32>
    %c0_13 = arith.constant 0 : index
    %c0_14 = arith.constant 0 : index
    %15 = vector.load %arg7[%c0_13, %c0_14] : memref<200x32xf32, #tpu.memory_space<vmem>>, vector<200x32xf32>
    %cst_15 = arith.constant dense<0.000000e+00> : vector<1x32xf32>
    %16 = tpu.matmul %14, %15, %cst_15 {dimension_numbers = #tpu.dot_dimension_numbers<[1], [0], [0], [1], [0, 0, 1, 1], [], []>} : vector<1x200xf32>, vector<200x32xf32>, vector<1x32xf32> -> vector<1x32xf32>
    %c0_16 = arith.constant 0 : index
    %c0_17 = arith.constant 0 : index
    %17 = vector.load %arg8[%c0_16, %c0_17] : memref<1x32xf32, #tpu.memory_space<vmem>>, vector<1x32xf32>
    %18 = arith.addf %16, %17 : vector<1x32xf32>
    %cst_18 = arith.constant dense<0.000000e+00> : vector<1xf32>
    %19 = vector.multi_reduction <add>, %18, %cst_18 [1] : vector<1x32xf32> to vector<1xf32>
    %20 = vector.shape_cast %19 : vector<1xf32> to vector<1x1xf32>
    %cst_19 = arith.constant 3.200000e+01 : f32
    %21 = vector.broadcast %cst_19 : f32 to vector<1x1xf32>
    %22 = arith.divf %20, %21 : vector<1x1xf32>
    %23 = vector.broadcast %22 : vector<1x1xf32> to vector<1x32xf32>
    %24 = arith.subf %18, %23 : vector<1x32xf32>
    %25 = arith.mulf %24, %24 : vector<1x32xf32>
    %cst_20 = arith.constant dense<0.000000e+00> : vector<1xf32>
    %26 = vector.multi_reduction <add>, %25, %cst_20 [1] : vector<1x32xf32> to vector<1xf32>
    %27 = vector.shape_cast %26 : vector<1xf32> to vector<1x1xf32>
    %cst_21 = arith.constant 3.200000e+01 : f32
    %28 = vector.broadcast %cst_21 : f32 to vector<1x1xf32>
    %29 = arith.divf %27, %28 : vector<1x1xf32>
    %30 = vector.broadcast %22 : vector<1x1xf32> to vector<1x32xf32>
    %31 = arith.subf %18, %30 : vector<1x32xf32>
    %cst_22 = arith.constant 9.99999974E-6 : f32
    %32 = vector.broadcast %cst_22 : f32 to vector<1x1xf32>
    %33 = arith.addf %29, %32 : vector<1x1xf32>
    %34 = math.rsqrt %33 : vector<1x1xf32>
    %35 = vector.broadcast %34 : vector<1x1xf32> to vector<1x32xf32>
    %36 = arith.mulf %31, %35 : vector<1x32xf32>
    %c0_23 = arith.constant 0 : index
    %c0_24 = arith.constant 0 : index
    %37 = vector.load %arg9[%c0_23, %c0_24] : memref<1x32xf32, #tpu.memory_space<vmem>>, vector<1x32xf32>
    %38 = arith.mulf %36, %37 : vector<1x32xf32>
    %c0_25 = arith.constant 0 : index
    %c0_26 = arith.constant 0 : index
    %39 = vector.load %arg10[%c0_25, %c0_26] : memref<1x32xf32, #tpu.memory_space<vmem>>, vector<1x32xf32>
    %40 = arith.addf %38, %39 : vector<1x32xf32>
    %c0_27 = arith.constant 0 : index
    %c0_28 = arith.constant 0 : index
    %41 = vector.load %arg11[%c0_27, %c0_28] : memref<32x32xf32, #tpu.memory_space<vmem>>, vector<32x32xf32>
    %cst_29 = arith.constant dense<0.000000e+00> : vector<1x32xf32>
    %42 = tpu.matmul %40, %41, %cst_29 {dimension_numbers = #tpu.dot_dimension_numbers<[1], [0], [0], [1], [0, 0, 1, 1], [], []>} : vector<1x32xf32>, vector<32x32xf32>, vector<1x32xf32> -> vector<1x32xf32>
    %c0_30 = arith.constant 0 : index
    %c0_31 = arith.constant 0 : index
    %43 = vector.load %arg1[%c0_30, %c0_31] : memref<1x8xf32, #tpu.memory_space<vmem>>, vector<1x8xf32>
    %c0_32 = arith.constant 0 : index
    %c0_33 = arith.constant 0 : index
    %44 = vector.load %arg12[%c0_32, %c0_33] : memref<8x32xf32, #tpu.memory_space<vmem>>, vector<8x32xf32>
    %cst_34 = arith.constant dense<0.000000e+00> : vector<1x32xf32>
    %45 = tpu.matmul %43, %44, %cst_34 {dimension_numbers = #tpu.dot_dimension_numbers<[1], [0], [0], [1], [0, 0, 1, 1], [], []>} : vector<1x8xf32>, vector<8x32xf32>, vector<1x32xf32> -> vector<1x32xf32>
    %46 = arith.addf %42, %45 : vector<1x32xf32>
    %c0_35 = arith.constant 0 : index
    %c0_36 = arith.constant 0 : index
    %47 = vector.load %arg2[%c0_35, %c0_36] : memref<1x12xf32, #tpu.memory_space<vmem>>, vector<1x12xf32>
    %c0_37 = arith.constant 0 : index
    %c0_38 = arith.constant 0 : index
    %48 = vector.load %arg13[%c0_37, %c0_38] : memref<12x32xf32, #tpu.memory_space<vmem>>, vector<12x32xf32>
    %cst_39 = arith.constant dense<0.000000e+00> : vector<1x32xf32>
    %49 = tpu.matmul %47, %48, %cst_39 {dimension_numbers = #tpu.dot_dimension_numbers<[1], [0], [0], [1], [0, 0, 1, 1], [], []>} : vector<1x12xf32>, vector<12x32xf32>, vector<1x32xf32> -> vector<1x32xf32>
    %50 = arith.addf %46, %49 : vector<1x32xf32>
    %c0_40 = arith.constant 0 : index
    %c0_41 = arith.constant 0 : index
    %51 = vector.load %arg14[%c0_40, %c0_41] : memref<1x32xf32, #tpu.memory_space<vmem>>, vector<1x32xf32>
    %52 = arith.addf %50, %51 : vector<1x32xf32>
    %cst_42 = arith.constant 0.000000e+00 : f32
    %53 = vector.broadcast %cst_42 : f32 to vector<1x32xf32>
    %54 = arith.cmpf ogt, %52, %53 : vector<1x32xf32>
    %55 = math.exp %52 : vector<1x32xf32>
    %cst_43 = arith.constant 1.000000e+00 : f32
    %56 = vector.broadcast %cst_43 : f32 to vector<1x32xf32>
    %57 = arith.subf %55, %56 : vector<1x32xf32>
    %58 = arith.select %54, %52, %57 : vector<1x32xi1>, vector<1x32xf32>
    %c0_44 = arith.constant 0 : index
    %c0_45 = arith.constant 0 : index
    %59 = vector.load %arg15[%c0_44, %c0_45] : memref<32x32xf32, #tpu.memory_space<vmem>>, vector<32x32xf32>
    %cst_46 = arith.constant dense<0.000000e+00> : vector<1x32xf32>
    %60 = tpu.matmul %58, %59, %cst_46 {dimension_numbers = #tpu.dot_dimension_numbers<[1], [0], [0], [1], [0, 0, 1, 1], [], []>} : vector<1x32xf32>, vector<32x32xf32>, vector<1x32xf32> -> vector<1x32xf32>
    %c0_47 = arith.constant 0 : index
    %c0_48 = arith.constant 0 : index
    %61 = vector.load %arg16[%c0_47, %c0_48] : memref<1x32xf32, #tpu.memory_space<vmem>>, vector<1x32xf32>
    %62 = arith.addf %60, %61 : vector<1x32xf32>
    %cst_49 = arith.constant 0.000000e+00 : f32
    %63 = vector.broadcast %cst_49 : f32 to vector<1x32xf32>
    %64 = arith.cmpf ogt, %62, %63 : vector<1x32xf32>
    %65 = math.exp %62 : vector<1x32xf32>
    %cst_50 = arith.constant 1.000000e+00 : f32
    %66 = vector.broadcast %cst_50 : f32 to vector<1x32xf32>
    %67 = arith.subf %65, %66 : vector<1x32xf32>
    %68 = arith.select %64, %62, %67 : vector<1x32xi1>, vector<1x32xf32>
    %c0_51 = arith.constant 0 : index
    %c0_52 = arith.constant 0 : index
    %69 = vector.load %arg17[%c0_51, %c0_52] : memref<32x128xf32, #tpu.memory_space<vmem>>, vector<32x128xf32>
    %cst_53 = arith.constant dense<0.000000e+00> : vector<1x128xf32>
    %70 = tpu.matmul %68, %69, %cst_53 {dimension_numbers = #tpu.dot_dimension_numbers<[1], [0], [0], [1], [0, 0, 1, 1], [], []>} : vector<1x32xf32>, vector<32x128xf32>, vector<1x128xf32> -> vector<1x128xf32>
    %c0_54 = arith.constant 0 : index
    %c0_55 = arith.constant 0 : index
    %71 = vector.load %arg18[%c0_54, %c0_55] : memref<1x128xf32, #tpu.memory_space<vmem>>, vector<1x128xf32>
    %72 = arith.addf %70, %71 : vector<1x128xf32>
    %73 = math.exp %72 : vector<1x128xf32>
    %c0_56 = arith.constant 0 : index
    %c0_57 = arith.constant 0 : index
    %74 = vector.load %arg19[%c0_56, %c0_57] : memref<1x128xf32, #tpu.memory_space<vmem>>, vector<1x128xf32>
    tpu.vector_store %arg19[%c0_56, %c0_57], %73 {strides = array<i32>} : memref<1x128xf32, #tpu.memory_space<vmem>>, vector<1x128xf32>,
    return
  }
}

</mosaic_0001>

<llo_original>
// kernel: sim_param_forward.1
$region0: #{sim_param_forward.1}
  #allocation0 [shape = 'u32[]', space=smem, size = 0x4, offset = 0x4, fixed_abs, tag = 'smem constant byte address 0x4 - core index']
  #allocation1 [shape = 'u32[144,128]{1,0:T(1,128)}', space=vmem, size = 0x12000, scoped, tag = 'internal scratch']
  %s0 = inlined_call_operand.vmem [shape: f32[1,3072], index: 0, kind: input, shape index: {}]
  %s1 = inlined_call_operand.vmem [shape: f32[1,8], index: 1, kind: input, shape index: {}]
  %s2 = inlined_call_operand.vmem [shape: f32[1,12], index: 2, kind: input, shape index: {}]
  %s3 = inlined_call_operand.vmem [shape: f32[3072,392], index: 3, kind: input, shape index: {}]
  %s4 = inlined_call_operand.vmem [shape: f32[1,392], index: 4, kind: input, shape index: {}]
  %s5 = inlined_call_operand.vmem [shape: f32[392,200], index: 5, kind: input, shape index: {}]
  %s6 = inlined_call_operand.vmem [shape: f32[1,200], index: 6, kind: input, shape index: {}]
  %s7 = inlined_call_operand.vmem [shape: f32[200,32], index: 7, kind: input, shape index: {}]
  %s8 = inlined_call_operand.vmem [shape: f32[1,32], index: 8, kind: input, shape index: {}]
  %s9 = inlined_call_operand.vmem [shape: f32[1,32], index: 9, kind: input, shape index: {}]
  %s10 = inlined_call_operand.vmem [shape: f32[1,32], index: 10, kind: input, shape index: {}]
  %s11 = inlined_call_operand.vmem [shape: f32[32,32], index: 11, kind: input, shape index: {}]
  %s12 = inlined_call_operand.vmem [shape: f32[8,32], index: 12, kind: input, shape index: {}]
  %s13 = inlined_call_operand.vmem [shape: f32[12,32], index: 13, kind: input, shape index: {}]
  %s14 = inlined_call_operand.vmem [shape: f32[1,32], index: 14, kind: input, shape index: {}]
  %s15 = inlined_call_operand.vmem [shape: f32[32,32], index: 15, kind: input, shape index: {}]
  %s16 = inlined_call_operand.vmem [shape: f32[1,32], index: 16, kind: input, shape index: {}]
  %s17 = inlined_call_operand.vmem [shape: f32[32,128], index: 17, kind: input, shape index: {}]
  %s18 = inlined_call_operand.vmem [shape: f32[1,128], index: 18, kind: input, shape index: {}]
  %s19 = inlined_call_operand.vmem [shape: f32[1,128], index: 19, kind: output, shape index: {}]
  %s20 = sld [smem:[#allocation0]]
  $region86: #{sim_param_forward.1} parent=0
    _
  %s22 = ssub.s32 1, %s20
  %s23 = scalar_select 0, %s22, %s20
  // Predicated region
  $region2: #{sim_param_forward.1} parent=0 // pred_check
    _
  $region3: #{sim_param_forward.1} parent=0 // pred_check_branch
    %25 = sbr.rel (0) target = $region5
  $region4: #{sim_param_forward.1} parent=0 // pred_region
    _
  $region5: #{sim_param_forward.1} parent=0 // pred_fallthru
    _
  // Predicated region
  $region6: #{sim_param_forward.1} parent=0 // pred_check
    _
  $region7: #{sim_param_forward.1} parent=0 // pred_check_branch
    %27 = sbr.rel (0) target = $region9
  $region8: #{sim_param_forward.1} parent=0 // pred_region
    _
  $region9: #{sim_param_forward.1} parent=0 // pred_fallthru
    _
  // Predicated region
  $region10: #{sim_param_forward.1} parent=0 // pred_check
    _
  $region11: #{sim_param_forward.1} parent=0 // pred_check_branch
    %29 = sbr.rel (0) target = $region13
  $region12: #{sim_param_forward.1} parent=0 // pred_region
    _
  $region13: #{sim_param_forward.1} parent=0 // pred_fallthru
    _
  // Predicated region
  $region14: #{sim_param_forward.1} parent=0 // pred_check
    _
  $region15: #{sim_param_forward.1} parent=0 // pred_check_branch
    %31 = sbr.rel (0) target = $region17
  $region16: #{sim_param_forward.1} parent=0 // pred_region
    _
  $region17: #{sim_param_forward.1} parent=0 // pred_fallthru
    _
  // Predicated region
  $region18: #{sim_param_forward.1} parent=0 // pred_check
    _
  $region19: #{sim_param_forward.1} parent=0 // pred_check_branch
    %33 = sbr.rel (0) target = $region21
  $region20: #{sim_param_forward.1} parent=0 // pred_region
    _
  $region21: #{sim_param_forward.1} parent=0 // pred_fallthru
    _
  // Predicated region
  $region22: #{sim_param_forward.1} parent=0 // pred_check
    _
  $region23: #{sim_param_forward.1} parent=0 // pred_check_branch
    %35 = sbr.rel (0) target = $region25
  $region24: #{sim_param_forward.1} parent=0 // pred_region
    _
  $region25: #{sim_param_forward.1} parent=0 // pred_fallthru
    _
  // Predicated region
  $region26: #{sim_param_forward.1} parent=0 // pred_check
    _
  $region27: #{sim_param_forward.1} parent=0 // pred_check_branch
    %37 = sbr.rel (0) target = $region29
  $region28: #{sim_param_forward.1} parent=0 // pred_region
    _
  $region29: #{sim_param_forward.1} parent=0 // pred_fallthru
    _
  // Predicated region
  $region30: #{sim_param_forward.1} parent=0 // pred_check
    _
  $region31: #{sim_param_forward.1} parent=0 // pred_check_branch
    %39 = sbr.rel (0) target = $region33
  $region32: #{sim_param_forward.1} parent=0 // pred_region
    _
  $region33: #{sim_param_forward.1} parent=0 // pred_fallthru
    _
  // Predicated region
  $region34: #{sim_param_forward.1} parent=0 // pred_check
    _
  $region35: #{sim_param_forward.1} parent=0 // pred_check_branch
    %41 = sbr.rel (0) target = $region37
  $region36: #{sim_param_forward.1} parent=0 // pred_region
    _
  $region37: #{sim_param_forward.1} parent=0 // pred_fallthru
    _
  // Predicated region
  $region38: #{sim_param_forward.1} parent=0 // pred_check
    _
  $region39: #{sim_param_forward.1} parent=0 // pred_check_branch
    %43 = sbr.rel (0) target = $region41
  $region40: #{sim_param_forward.1} parent=0 // pred_region
    _
  $region41: #{sim_param_forward.1} parent=0 // pred_fallthru
    _
  // Predicated region
  $region42: #{sim_param_forward.1} parent=0 // pred_check
    _
  $region43: #{sim_param_forward.1} parent=0 // pred_check_branch
    %45 = sbr.rel (0) target = $region45
  $region44: #{sim_param_forward.1} parent=0 // pred_region
    _
  $region45: #{sim_param_forward.1} parent=0 // pred_fallthru
    _
  // Predicated region
  $region46: #{sim_param_forward.1} parent=0 // pred_check
    _
  $region47: #{sim_param_forward.1} parent=0 // pred_check_branch
    %47 = sbr.rel (0) target = $region49
  $region48: #{sim_param_forward.1} parent=0 // pred_region
    _
  $region49: #{sim_param_forward.1} parent=0 // pred_fallthru
    _
  // Predicated region
  $region50: #{sim_param_forward.1} parent=0 // pred_check
    _
  $region51: #{sim_param_forward.1} parent=0 // pred_check_branch
    %49 = sbr.rel (0) target = $region53
  $region52: #{sim_param_forward.1} parent=0 // pred_region
    _
  $region53: #{sim_param_forward.1} parent=0 // pred_fallthru
    _
  // Predicated region
  $region54: #{sim_param_forward.1} parent=0 // pred_check
    _
  $region55: #{sim_param_forward.1} parent=0 // pred_check_branch
    %51 = sbr.rel (0) target = $region57
  $region56: #{sim_param_forward.1} parent=0 // pred_region
    _
  $region57: #{sim_param_forward.1} parent=0 // pred_fallthru
    _
  // Predicated region
  $region58: #{sim_param_forward.1} parent=0 // pred_check
    _
  $region59: #{sim_param_forward.1} parent=0 // pred_check_branch
    %53 = sbr.rel (0) target = $region61
  $region60: #{sim_param_forward.1} parent=0 // pred_region
    _
  $region61: #{sim_param_forward.1} parent=0 // pred_fallthru
    _
  // Predicated region
  $region62: #{sim_param_forward.1} parent=0 // pred_check
    _
  $region63: #{sim_param_forward.1} parent=0 // pred_check_branch
    %55 = sbr.rel (0) target = $region65
  $region64: #{sim_param_forward.1} parent=0 // pred_region
    _
  $region65: #{sim_param_forward.1} parent=0 // pred_fallthru
    _
  // Predicated region
  $region66: #{sim_param_forward.1} parent=0 // pred_check
    _
  $region67: #{sim_param_forward.1} parent=0 // pred_check_branch
    %57 = sbr.rel (0) target = $region69
  $region68: #{sim_param_forward.1} parent=0 // pred_region
    _
  $region69: #{sim_param_forward.1} parent=0 // pred_fallthru
    _
  // Predicated region
  $region70: #{sim_param_forward.1} parent=0 // pred_check
    _
  $region71: #{sim_param_forward.1} parent=0 // pred_check_branch
    %59 = sbr.rel (0) target = $region73
  $region72: #{sim_param_forward.1} parent=0 // pred_region
    _
  $region73: #{sim_param_forward.1} parent=0 // pred_fallthru
    _
  // Predicated region
  $region74: #{sim_param_forward.1} parent=0 // pred_check
    _
  $region75: #{sim_param_forward.1} parent=0 // pred_check_branch
    %61 = sbr.rel (0) target = $region77
  $region76: #{sim_param_forward.1} parent=0 // pred_region
    _
  $region77: #{sim_param_forward.1} parent=0 // pred_fallthru
    _
  %v62 = vld [vmem:[%s0] sm:$0xff]
  %v63 = vld [vmem:[%s0 + $0x8] sm:$0xff]
  %v64 = vld [vmem:[%s0 + $0x10] sm:$0xff]
  %v65 = vmul.f32 %v62, 0.003921569
  %v66 = vmul.f32 %v63, 0.003921569
  %v67 = vmul.f32 %v64, 0.003921569
  %v68 = vld [vmem:[%s3] sm:$0xff]
  %v69 = vld [vmem:[%s3 + $0x8] sm:$0xff]
  %v70 = vld [vmem:[%s3 + $0x10] sm:$0xff]
  %v71 = vld [vmem:[%s3 + $0x18] sm:$0xff]
  %v72 = vld [vmem:[%s3 + $0x20] sm:$0xff]
  %v73 = vld [vmem:[%s3 + $0x28] sm:$0xff]
  %v74 = vld [vmem:[%s3 + $0x30] sm:$0xff]
  %v75 = vld [vmem:[%s3 + $0x38] sm:$0xff]
  %v76 = vld [vmem:[%s3 + $0x40] sm:$0xff]
  %v77 = vld [vmem:[%s3 + $0x48] sm:$0xff]
  %v78 = vld [vmem:[%s3 + $0x50] sm:$0xff]
  %v79 = vld [vmem:[%s3 + $0x58] sm:$0xff]
  %v80 = vld [vmem:[%s3 + $0x60] sm:$0xff]
  %v81 = vld [vmem:[%s3 + $0x68] sm:$0xff]
  %v82 = vld [vmem:[%s3 + $0x70] sm:$0xff]
  %v83 = vld [vmem:[%s3 + $0x78] sm:$0xff]
  %v84 = vld [vmem:[%s3 + $0x80] sm:$0xff]
  %v85 = vld [vmem:[%s3 + $0x88] sm:$0xff]
  %v86 = vld [vmem:[%s3 + $0x90] sm:$0xff]
  %v87 = vld [vmem:[%s3 + $0x98] sm:$0xff]
  %v88 = vld [vmem:[%s3 + $0xa0] sm:$0xff]
  %v89 = vld [vmem:[%s3 + $0xa8] sm:$0xff]
  %v90 = vld [vmem:[%s3 + $0xb0] sm:$0xff]
  %v91 = vld [vmem:[%s3 + $0xb8] sm:$0xff]
  %v92 = vld [vmem:[%s3 + $0xc0] sm:$0xff]
  %v93 = vld [vmem:[%s3 + $0xc8] sm:$0xff]
  %v94 = vld [vmem:[%s3 + $0xd0] sm:$0xff]
  %v95 = vld [vmem:[%s3 + $0xd8] sm:$0xff]
  %v96 = vld [vmem:[%s3 + $0xe0] sm:$0xff]
  %v97 = vld [vmem:[%s3 + $0xe8] sm:$0xff]
  %v98 = vld [vmem:[%s3 + $0xf0] sm:$0xff]
  %v99 = vld [vmem:[%s3 + $0xf8] sm:$0xff]
  %v100 = vld [vmem:[%s3 + $0x100] sm:$0xff]
  %v101 = vld [vmem:[%s3 + $0x108] sm:$0xff]
  %v102 = vld [vmem:[%s3 + $0x110] sm:$0xff]
  %v103 = vld [vmem:[%s3 + $0x118] sm:$0xff]
  %v104 = vld [vmem:[%s3 + $0x120] sm:$0xff]
  %v105 = vld [vmem:[%s3 + $0x128] sm:$0xff]
  %v106 = vld [vmem:[%s3 + $0x130] sm:$0xff]
  %v107 = vld [vmem:[%s3 + $0x138] sm:$0xff]
  %v108 = vld [vmem:[%s3 + $0x140] sm:$0xff]
  %v109 = vld [vmem:[%s3 + $0x148] sm:$0xff]
  %v110 = vld [vmem:[%s3 + $0x150] sm:$0xff]
  %v111 = vld [vmem:[%s3 + $0x158] sm:$0xff]
  %v112 = vld [vmem:[%s3 + $0x160] sm:$0xff]
  %v113 = vld [vmem:[%s3 + $0x168] sm:$0xff]
  %v114 = vld [vmem:[%s3 + $0x170] sm:$0xff]
  %v115 = vld [vmem:[%s3 + $0x178] sm:$0xff]
  %v116 = vld [vmem:[%s3 + $0x180] sm:$0xff]
  %v117 = vld [vmem:[%s3 + $0x188] sm:$0xff]
  %v118 = vld [vmem:[%s3 + $0x190] sm:$0xff]
  %v119 = vld [vmem:[%s3 + $0x198] sm:$0xff]
  %v120 = vld [vmem:[%s3 + $0x1a0] sm:$0xff]
  %v121 = vld [vmem:[%s3 + $0x1a8] sm:$0xff]
  %v122 = vld [vmem:[%s3 + $0x1b0] sm:$0xff]
  %v123 = vld [vmem:[%s3 + $0x1b8] sm:$0xff]
  %v124 = vld [vmem:[%s3 + $0x1c0] sm:$0xff]
  %v125 = vld [vmem:[%s3 + $0x1c8] sm:$0xff]
  %v126 = vld [vmem:[%s3 + $0x1d0] sm:$0xff]
  %v127 = vld [vmem:[%s3 + $0x1d8] sm:$0xff]
  %v128 = vld [vmem:[%s3 + $0x1e0] sm:$0xff]
  %v129 = vld [vmem:[%s3 + $0x1e8] sm:$0xff]
  %v130 = vld [vmem:[%s3 + $0x1f0] sm:$0xff]
  %v131 = vld [vmem:[%s3 + $0x1f8] sm:$0xff]
  %v132 = vld [vmem:[%s3 + $0x200] sm:$0xff]
  %v133 = vld [vmem:[%s3 + $0x208] sm:$0xff]
  %v134 = vld [vmem:[%s3 + $0x210] sm:$0xff]
  %v135 = vld [vmem:[%s3 + $0x218] sm:$0xff]
  %v136 = vld [vmem:[%s3 + $0x220] sm:$0xff]
  %v137 = vld [vmem:[%s3 + $0x228] sm:$0xff]
  %v138 = vld [vmem:[%s3 + $0x230] sm:$0xff]
  %v139 = vld [vmem:[%s3 + $0x238] sm:$0xff]
  %v140 = vld [vmem:[%s3 + $0x240] sm:$0xff]
  %v141 = vld [vmem:[%s3 + $0x248] sm:$0xff]
  %v142 = vld [vmem:[%s3 + $0x250] sm:$0xff]
  %v143 = vld [vmem:[%s3 + $0x258] sm:$0xff]
  %v144 = vld [vmem:[%s3 + $0x260] sm:$0xff]
  %v145 = vld [vmem:[%s3 + $0x268] sm:$0xff]
  %v146 = vld [vmem:[%s3 + $0x270] sm:$0xff]
  %v147 = vld [vmem:[%s3 + $0x278] sm:$0xff]
  %v148 = vld [vmem:[%s3 + $0x280] sm:$0xff]
  %v149 = vld [vmem:[%s3 + $0x288] sm:$0xff]
  %v150 = vld [vmem:[%s3 + $0x290] sm:$0xff]
  %v151 = vld [vmem:[%s3 + $0x298] sm:$0xff]
  %v152 = vld [vmem:[%s3 + $0x2a0] sm:$0xff]
  %v153 = vld [vmem:[%s3 + $0x2a8] sm:$0xff]
  %v154 = vld [vmem:[%s3 + $0x2b0] sm:$0xff]
  %v155 = vld [vmem:[%s3 + $0x2b8] sm:$0xff]
  %v156 = vld [vmem:[%s3 + $0x2c0] sm:$0xff]
  %v157 = vld [vmem:[%s3 + $0x2c8] sm:$0xff]
  %v158 = vld [vmem:[%s3 + $0x2d0] sm:$0xff]
  %v159 = vld [vmem:[%s3 + $0x2d8] sm:$0xff]
  %v160 = vld [vmem:[%s3 + $0x2e0] sm:$0xff]
  %v161 = vld [vmem:[%s3 + $0x2e8] sm:$0xff]
  %v162 = vld [vmem:[%s3 + $0x2f0] sm:$0xff]
  %v163 = vld [vmem:[%s3 + $0x2f8] sm:$0xff]
  %v164 = vld [vmem:[%s3 + $0x300] sm:$0xff]
  %v165 = vld [vmem:[%s3 + $0x308] sm:$0xff]
  %v166 = vld [vmem:[%s3 + $0x310] sm:$0xff]
  %v167 = vld [vmem:[%s3 + $0x318] sm:$0xff]
  %v168 = vld [vmem:[%s3 + $0x320] sm:$0xff]
  %v169 = vld [vmem:[%s3 + $0x328] sm:$0xff]
  %v170 = vld [vmem:[%s3 + $0x330] sm:$0xff]
  %v171 = vld [vmem:[%s3 + $0x338] sm:$0xff]
  %v172 = vld [vmem:[%s3 + $0x340] sm:$0xff]
  %v173 = vld [vmem:[%s3 + $0x348] sm:$0xff]
  %v174 = vld [vmem:[%s3 + $0x350] sm:$0xff]
  %v175 = vld [vmem:[%s3 + $0x358] sm:$0xff]
  %v176 = vld [vmem:[%s3 + $0x360] sm:$0xff]
  %v177 = vld [vmem:[%s3 + $0x368] sm:$0xff]
  %v178 = vld [vmem:[%s3 + $0x370] sm:$0xff]
  %v179 = vld [vmem:[%s3 + $0x378] sm:$0xff]
  %v180 = vld [vmem:[%s3 + $0x380] sm:$0xff]
  %v181 = vld [vmem:[%s3 + $0x388] sm:$0xff]
  %v182 = vld [vmem:[%s3 + $0x390] sm:$0xff]
  %v183 = vld [vmem:[%s3 + $0x398] sm:$0xff]
  %v184 = vld [vmem:[%s3 + $0x3a0] sm:$0xff]
  %v185 = vld [vmem:[%s3 + $0x3a8] sm:$0xff]
  %v186 = vld [vmem:[%s3 + $0x3b0] sm:$0xff]
  %v187 = vld [vmem:[%s3 + $0x3b8] sm:$0xff]
  %v188 = vld [vmem:[%s3 + $0x3c0] sm:$0xff]
  %v189 = vld [vmem:[%s3 + $0x3c8] sm:$0xff]
  %v190 = vld [vmem:[%s3 + $0x3d0] sm:$0xff]
  %v191 = vld [vmem:[%s3 + $0x3d8] sm:$0xff]
  %v192 = vld [vmem:[%s3 + $0x3e0] sm:$0xff]
  %v193 = vld [vmem:[%s3 + $0x3e8] sm:$0xff]
  %v194 = vld [vmem:[%s3 + $0x3f0] sm:$0xff]
  %v195 = vld [vmem:[%s3 + $0x3f8] sm:$0xff]
  %v196 = vld [vmem:[%s3 + $0x400] sm:$0xff]
  %v197 = vld [vmem:[%s3 + $0x408] sm:$0xff]
  %v198 = vld [vmem:[%s3 + $0x410] sm:$0xff]
  %v199 = vld [vmem:[%s3 + $0x418] sm:$0xff]
  %v200 = vld [vmem:[%s3 + $0x420] sm:$0xff]
  %v201 = vld [vmem:[%s3 + $0x428] sm:$0xff]
  %v202 = vld [vmem:[%s3 + $0x430] sm:$0xff]
  %v203 = vld [vmem:[%s3 + $0x438] sm:$0xff]
  %v204 = vld [vmem:[%s3 + $0x440] sm:$0xff]
  %v205 = vld [vmem:[%s3 + $0x448] sm:$0xff]
  %v206 = vld [vmem:[%s3 + $0x450] sm:$0xff]
  %v207 = vld [vmem:[%s3 + $0x458] sm:$0xff]
  %v208 = vld [vmem:[%s3 + $0x460] sm:$0xff]
  %v209 = vld [vmem:[%s3 + $0x468] sm:$0xff]
  %v210 = vld [vmem:[%s3 + $0x470] sm:$0xff]
  %v211 = vld [vmem:[%s3 + $0x478] sm:$0xff]
  %v212 = vld [vmem:[%s3 + $0x480] sm:$0xff]
  %v213 = vld [vmem:[%s3 + $0x488] sm:$0xff]
  %v214 = vld [vmem:[%s3 + $0x490] sm:$0xff]
  %v215 = vld [vmem:[%s3 + $0x498] sm:$0xff]
  %v216 = vld [vmem:[%s3 + $0x4a0] sm:$0xff]
  %v217 = vld [vmem:[%s3 + $0x4a8] sm:$0xff]
  %v218 = vld [vmem:[%s3 + $0x4b0] sm:$0xff]
  %v219 = vld [vmem:[%s3 + $0x4b8] sm:$0xff]
  %v220 = vld [vmem:[%s3 + $0x4c0] sm:$0xff]
  %v221 = vld [vmem:[%s3 + $0x4c8] sm:$0xff]
  %v222 = vld [vmem:[%s3 + $0x4d0] sm:$0xff]
  %v223 = vld [vmem:[%s3 + $0x4d8] sm:$0xff]
  %v224 = vld [vmem:[%s3 + $0x4e0] sm:$0xff]
  %v225 = vld [vmem:[%s3 + $0x4e8] sm:$0xff]
  %v226 = vld [vmem:[%s3 + $0x4f0] sm:$0xff]
  %v227 = vld [vmem:[%s3 + $0x4f8] sm:$0xff]
  %v228 = vld [vmem:[%s3 + $0x500] sm:$0xff]
  %v229 = vld [vmem:[%s3 + $0x508] sm:$0xff]
  %v230 = vld [vmem:[%s3 + $0x510] sm:$0xff]
  %v231 = vld [vmem:[%s3 + $0x518] sm:$0xff]
  %v232 = vld [vmem:[%s3 + $0x520] sm:$0xff]
  %v233 = vld [vmem:[%s3 + $0x528] sm:$0xff]
  %v234 = vld [vmem:[%s3 + $0x530] sm:$0xff]
  %v235 = vld [vmem:[%s3 + $0x538] sm:$0xff]
  %v236 = vld [vmem:[%s3 + $0x540] sm:$0xff]
  %v237 = vld [vmem:[%s3 + $0x548] sm:$0xff]
  %v238 = vld [vmem:[%s3 + $0x550] sm:$0xff]
  %v239 = vld [vmem:[%s3 + $0x558] sm:$0xff]
  %v240 = vld [vmem:[%s3 + $0x560] sm:$0xff]
  %v241 = vld [vmem:[%s3 + $0x568] sm:$0xff]
  %v242 = vld [vmem:[%s3 + $0x570] sm:$0xff]
  %v243 = vld [vmem:[%s3 + $0x578] sm:$0xff]
  %v244 = vld [vmem:[%s3 + $0x580] sm:$0xff]
  %v245 = vld [vmem:[%s3 + $0x588] sm:$0xff]
  %v246 = vld [vmem:[%s3 + $0x590] sm:$0xff]
  %v247 = vld [vmem:[%s3 + $0x598] sm:$0xff]
  %v248 = vld [vmem:[%s3 + $0x5a0] sm:$0xff]
  %v249 = vld [vmem:[%s3 + $0x5a8] sm:$0xff]
  %v250 = vld [vmem:[%s3 + $0x5b0] sm:$0xff]
  %v251 = vld [vmem:[%s3 + $0x5b8] sm:$0xff]
  %v252 = vld [vmem:[%s3 + $0x5c0] sm:$0xff]
  %v253 = vld [vmem:[%s3 + $0x5c8] sm:$0xff]
  %v254 = vld [vmem:[%s3 + $0x5d0] sm:$0xff]
  %v255 = vld [vmem:[%s3 + $0x5d8] sm:$0xff]
  %v256 = vld [vmem:[%s3 + $0x5e0] sm:$0xff]
  %v257 = vld [vmem:[%s3 + $0x5e8] sm:$0xff]
  %v258 = vld [vmem:[%s3 + $0x5f0] sm:$0xff]
  %v259 = vld [vmem:[%s3 + $0x5f8] sm:$0xff]
  %v260 = vld [vmem:[%s3 + $0x600] sm:$0xff]
  %v261 = vld [vmem:[%s3 + $0x608] sm:$0xff]
  %v262 = vld [vmem:[%s3 + $0x610] sm:$0xff]
  %v263 = vld [vmem:[%s3 + $0x618] sm:$0xff]
  %v264 = vld [vmem:[%s3 + $0x620] sm:$0xff]
  %v265 = vld [vmem:[%s3 + $0x628] sm:$0xff]
  %v266 = vld [vmem:[%s3 + $0x630] sm:$0xff]
  %v267 = vld [vmem:[%s3 + $0x638] sm:$0xff]
  %v268 = vld [vmem:[%s3 + $0x640] sm:$0xff]
  %v269 = vld [vmem:[%s3 + $0x648] sm:$0xff]
  %v270 = vld [vmem:[%s3 + $0x650] sm:$0xff]
  %v271 = vld [vmem:[%s3 + $0x658] sm:$0xff]
  %v272 = vld [vmem:[%s3 + $0x660] sm:$0xff]
  %v273 = vld [vmem:[%s3 + $0x668] sm:$0xff]
  %v274 = vld [vmem:[%s3 + $0x670] sm:$0xff]
  %v275 = vld [vmem:[%s3 + $0x678] sm:$0xff]
  %v276 = vld [vmem:[%s3 + $0x680] sm:$0xff]
  %v277 = vld [vmem:[%s3 + $0x688] sm:$0xff]
  %v278 = vld [vmem:[%s3 + $0x690] sm:$0xff]
  %v279 = vld [vmem:[%s3 + $0x698] sm:$0xff]
  %v280 = vld [vmem:[%s3 + $0x6a0] sm:$0xff]
  %v281 = vld [vmem:[%s3 + $0x6a8] sm:$0xff]
  %v282 = vld [vmem:[%s3 + $0x6b0] sm:$0xff]
  %v283 = vld [vmem:[%s3 + $0x6b8] sm:$0xff]
  %v284 = vld [vmem:[%s3 + $0x6c0] sm:$0xff]
  %v285 = vld [vmem:[%s3 + $0x6c8] sm:$0xff]
  %v286 = vld [vmem:[%s3 + $0x6d0] sm:$0xff]
  %v287 = vld [vmem:[%s3 + $0x6d8] sm:$0xff]
  %v288 = vld [vmem:[%s3 + $0x6e0] sm:$0xff]
  %v289 = vld [vmem:[%s3 + $0x6e8] sm:$0xff]
  %v290 = vld [vmem:[%s3 + $0x6f0] sm:$0xff]
  %v291 = vld [vmem:[%s3 + $0x6f8] sm:$0xff]
  %v292 = vld [vmem:[%s3 + $0x700] sm:$0xff]
  %v293 = vld [vmem:[%s3 + $0x708] sm:$0xff]
  %v294 = vld [vmem:[%s3 + $0x710] sm:$0xff]
  %v295 = vld [vmem:[%s3 + $0x718] sm:$0xff]
  %v296 = vld [vmem:[%s3 + $0x720] sm:$0xff]
  %v297 = vld [vmem:[%s3 + $0x728] sm:$0xff]
  %v298 = vld [vmem:[%s3 + $0x730] sm:$0xff]
  %v299 = vld [vmem:[%s3 + $0x738] sm:$0xff]
  %v300 = vld [vmem:[%s3 + $0x740] sm:$0xff]
  %v301 = vld [vmem:[%s3 + $0x748] sm:$0xff]
  %v302 = vld [vmem:[%s3 + $0x750] sm:$0xff]
  %v303 = vld [vmem:[%s3 + $0x758] sm:$0xff]
  %v304 = vld [vmem:[%s3 + $0x760] sm:$0xff]
  %v305 = vld [vmem:[%s3 + $0x768] sm:$0xff]
  %v306 = vld [vmem:[%s3 + $0x770] sm:$0xff]
  %v307 = vld [vmem:[%s3 + $0x778] sm:$0xff]
  %v308 = vld [vmem:[%s3 + $0x780] sm:$0xff]
  %v309 = vld [vmem:[%s3 + $0x788] sm:$0xff]
  %v310 = vld [vmem:[%s3 + $0x790] sm:$0xff]
  %v311 = vld [vmem:[%s3 + $0x798] sm:$0xff]
  %v312 = vld [vmem:[%s3 + $0x7a0] sm:$0xff]
  %v313 = vld [vmem:[%s3 + $0x7a8] sm:$0xff]
  %v314 = vld [vmem:[%s3 + $0x7b0] sm:$0xff]
  %v315 = vld [vmem:[%s3 + $0x7b8] sm:$0xff]
  %v316 = vld [vmem:[%s3 + $0x7c0] sm:$0xff]
  %v317 = vld [vmem:[%s3 + $0x7c8] sm:$0xff]
  %v318 = vld [vmem:[%s3 + $0x7d0] sm:$0xff]
  %v319 = vld [vmem:[%s3 + $0x7d8] sm:$0xff]
  %v320 = vld [vmem:[%s3 + $0x7e0] sm:$0xff]
  %v321 = vld [vmem:[%s3 + $0x7e8] sm:$0xff]
  %v322 = vld [vmem:[%s3 + $0x7f0] sm:$0xff]
  %v323 = vld [vmem:[%s3 + $0x7f8] sm:$0xff]
  %v324 = vld [vmem:[%s3 + $0x800] sm:$0xff]
  %v325 = vld [vmem:[%s3 + $0x808] sm:$0xff]
  %v326 = vld [vmem:[%s3 + $0x810] sm:$0xff]
  %v327 = vld [vmem:[%s3 + $0x818] sm:$0xff]
  %v328 = vld [vmem:[%s3 + $0x820] sm:$0xff]
  %v329 = vld [vmem:[%s3 + $0x828] sm:$0xff]
  %v330 = vld [vmem:[%s3 + $0x830] sm:$0xff]
  %v331 = vld [vmem:[%s3 + $0x838] sm:$0xff]
  %v332 = vld [vmem:[%s3 + $0x840] sm:$0xff]
  %v333 = vld [vmem:[%s3 + $0x848] sm:$0xff]
  %v334 = vld [vmem:[%s3 + $0x850] sm:$0xff]
  %v335 = vld [vmem:[%s3 + $0x858] sm:$0xff]
  %v336 = vld [vmem:[%s3 + $0x860] sm:$0xff]
  %v337 = vld [vmem:[%s3 + $0x868] sm:$0xff]
  %v338 = vld [vmem:[%s3 + $0x870] sm:$0xff]
  %v339 = vld [vmem:[%s3 + $0x878] sm:$0xff]
  %v340 = vld [vmem:[%s3 + $0x880] sm:$0xff]
  %v341 = vld [vmem:[%s3 + $0x888] sm:$0xff]
  %v342 = vld [vmem:[%s3 + $0x890] sm:$0xff]
  %v343 = vld [vmem:[%s3 + $0x898] sm:$0xff]
  %v344 = vld [vmem:[%s3 + $0x8a0] sm:$0xff]
  %v345 = vld [vmem:[%s3 + $0x8a8] sm:$0xff]
  %v346 = vld [vmem:[%s3 + $0x8b0] sm:$0xff]
  %v347 = vld [vmem:[%s3 + $0x8b8] sm:$0xff]
  %v348 = vld [vmem:[%s3 + $0x8c0] sm:$0xff]
  %v349 = vld [vmem:[%s3 + $0x8c8] sm:$0xff]
  %v350 = vld [vmem:[%s3 + $0x8d0] sm:$0xff]
  %v351 = vld [vmem:[%s3 + $0x8d8] sm:$0xff]
  %v352 = vld [vmem:[%s3 + $0x8e0] sm:$0xff]
  %v353 = vld [vmem:[%s3 + $0x8e8] sm:$0xff]
  %v354 = vld [vmem:[%s3 + $0x8f0] sm:$0xff]
  %v355 = vld [vmem:[%s3 + $0x8f8] sm:$0xff]
  %v356 = vld [vmem:[%s3 + $0x900] sm:$0xff]
  %v357 = vld [vmem:[%s3 + $0x908] sm:$0xff]
  %v358 = vld [vmem:[%s3 + $0x910] sm:$0xff]
  %v359 = vld [vmem:[%s3 + $0x918] sm:$0xff]
  %v360 = vld [vmem:[%s3 + $0x920] sm:$0xff]
  %v361 = vld [vmem:[%s3 + $0x928] sm:$0xff]
  %v362 = vld [vmem:[%s3 + $0x930] sm:$0xff]
  %v363 = vld [vmem:[%s3 + $0x938] sm:$0xff]
  %v364 = vld [vmem:[%s3 + $0x940] sm:$0xff]
  %v365 = vld [vmem:[%s3 + $0x948] sm:$0xff]
  %v366 = vld [vmem:[%s3 + $0x950] sm:$0xff]
  %v367 = vld [vmem:[%s3 + $0x958] sm:$0xff]
  %v368 = vld [vmem:[%s3 + $0x960] sm:$0xff]
  %v369 = vld [vmem:[%s3 + $0x968] sm:$0xff]
  %v370 = vld [vmem:[%s3 + $0x970] sm:$0xff]
  %v371 = vld [vmem:[%s3 + $0x978] sm:$0xff]
  %v372 = vld [vmem:[%s3 + $0x980] sm:$0xff]
  %v373 = vld [vmem:[%s3 + $0x988] sm:$0xff]
  %v374 = vld [vmem:[%s3 + $0x990] sm:$0xff]
  %v375 = vld [vmem:[%s3 + $0x998] sm:$0xff]
  %v376 = vld [vmem:[%s3 + $0x9a0] sm:$0xff]
  %v377 = vld [vmem:[%s3 + $0x9a8] sm:$0xff]
  %v378 = vld [vmem:[%s3 + $0x9b0] sm:$0xff]
  %v379 = vld [vmem:[%s3 + $0x9b8] sm:$0xff]
  %v380 = vld [vmem:[%s3 + $0x9c0] sm:$0xff]
  %v381 = vld [vmem:[%s3 + $0x9c8] sm:$0xff]
  %v382 = vld [vmem:[%s3 + $0x9d0] sm:$0xff]
  %v383 = vld [vmem:[%s3 + $0x9d8] sm:$0xff]
  %v384 = vld [vmem:[%s3 + $0x9e0] sm:$0xff]
  %v385 = vld [vmem:[%s3 + $0x9e8] sm:$0xff]
  %v386 = vld [vmem:[%s3 + $0x9f0] sm:$0xff]
  %v387 = vld [vmem:[%s3 + $0x9f8] sm:$0xff]
  %v388 = vld [vmem:[%s3 + $0xa00] sm:$0xff]
  %v389 = vld [vmem:[%s3 + $0xa08] sm:$0xff]
  %v390 = vld [vmem:[%s3 + $0xa10] sm:$0xff]
  %v391 = vld [vmem:[%s3 + $0xa18] sm:$0xff]
  %v392 = vld [vmem:[%s3 + $0xa20] sm:$0xff]
  %v393 = vld [vmem:[%s3 + $0xa28] sm:$0xff]
  %v394 = vld [vmem:[%s3 + $0xa30] sm:$0xff]
  %v395 = vld [vmem:[%s3 + $0xa38] sm:$0xff]
  %v396 = vld [vmem:[%s3 + $0xa40] sm:$0xff]
  %v397 = vld [vmem:[%s3 + $0xa48] sm:$0xff]
  %v398 = vld [vmem:[%s3 + $0xa50] sm:$0xff]
  %v399 = vld [vmem:[%s3 + $0xa58] sm:$0xff]
  %v400 = vld [vmem:[%s3 + $0xa60] sm:$0xff]
  %v401 = vld [vmem:[%s3 + $0xa68] sm:$0xff]
  %v402 = vld [vmem:[%s3 + $0xa70] sm:$0xff]
  %v403 = vld [vmem:[%s3 + $0xa78] sm:$0xff]
  %v404 = vld [vmem:[%s3 + $0xa80] sm:$0xff]
  %v405 = vld [vmem:[%s3 + $0xa88] sm:$0xff]
  %v406 = vld [vmem:[%s3 + $0xa90] sm:$0xff]
  %v407 = vld [vmem:[%s3 + $0xa98] sm:$0xff]
  %v408 = vld [vmem:[%s3 + $0xaa0] sm:$0xff]
  %v409 = vld [vmem:[%s3 + $0xaa8] sm:$0xff]
  %v410 = vld [vmem:[%s3 + $0xab0] sm:$0xff]
  %v411 = vld [vmem:[%s3 + $0xab8] sm:$0xff]
  %v412 = vld [vmem:[%s3 + $0xac0] sm:$0xff]
  %v413 = vld [vmem:[%s3 + $0xac8] sm:$0xff]
  %v414 = vld [vmem:[%s3 + $0xad0] sm:$0xff]
  %v415 = vld [vmem:[%s3 + $0xad8] sm:$0xff]
  %v416 = vld [vmem:[%s3 + $0xae0] sm:$0xff]
  %v417 = vld [vmem:[%s3 + $0xae8] sm:$0xff]
  %v418 = vld [vmem:[%s3 + $0xaf0] sm:$0xff]
  %v419 = vld [vmem:[%s3 + $0xaf8] sm:$0xff]
  %v420 = vld [vmem:[%s3 + $0xb00] sm:$0xff]
  %v421 = vld [vmem:[%s3 + $0xb08] sm:$0xff]
  %v422 = vld [vmem:[%s3 + $0xb10] sm:$0xff]
  %v423 = vld [vmem:[%s3 + $0xb18] sm:$0xff]
  %v424 = vld [vmem:[%s3 + $0xb20] sm:$0xff]
  %v425 = vld [vmem:[%s3 + $0xb28] sm:$0xff]
  %v426 = vld [vmem:[%s3 + $0xb30] sm:$0xff]
  %v427 = vld [vmem:[%s3 + $0xb38] sm:$0xff]
  %v428 = vld [vmem:[%s3 + $0xb40] sm:$0xff]
  %v429 = vld [vmem:[%s3 + $0xb48] sm:$0xff]
  %v430 = vld [vmem:[%s3 + $0xb50] sm:$0xff]
  %v431 = vld [vmem:[%s3 + $0xb58] sm:$0xff]
  %v432 = vld [vmem:[%s3 + $0xb60] sm:$0xff]
  %v433 = vld [vmem:[%s3 + $0xb68] sm:$0xff]
  %v434 = vld [vmem:[%s3 + $0xb70] sm:$0xff]
  %v435 = vld [vmem:[%s3 + $0xb78] sm:$0xff]
  %v436 = vld [vmem:[%s3 + $0xb80] sm:$0xff]
  %v437 = vld [vmem:[%s3 + $0xb88] sm:$0xff]
  %v438 = vld [vmem:[%s3 + $0xb90] sm:$0xff]
  %v439 = vld [vmem:[%s3 + $0xb98] sm:$0xff]
  %v440 = vld [vmem:[%s3 + $0xba0] sm:$0xff]
  %v441 = vld [vmem:[%s3 + $0xba8] sm:$0xff]
  %v442 = vld [vmem:[%s3 + $0xbb0] sm:$0xff]
  %v443 = vld [vmem:[%s3 + $0xbb8] sm:$0xff]
  %v444 = vld [vmem:[%s3 + $0xbc0] sm:$0xff]
  %v445 = vld [vmem:[%s3 + $0xbc8] sm:$0xff]
  %v446 = vld [vmem:[%s3 + $0xbd0] sm:$0xff]
  %v447 = vld [vmem:[%s3 + $0xbd8] sm:$0xff]
  %v448 = vld [vmem:[%s3 + $0xbe0] sm:$0xff]
  %v449 = vld [vmem:[%s3 + $0xbe8] sm:$0xff]
  %v450 = vld [vmem:[%s3 + $0xbf0] sm:$0xff]
  %v451 = vld [vmem:[%s3 + $0xbf8] sm:$0xff]
  %v452 = vld [vmem:[%s3 + $0xc00] sm:$0xff]
  %v453 = vld [vmem:[%s3 + $0xc08] sm:$0xff]
  %v454 = vld [vmem:[%s3 + $0xc10] sm:$0xff]
  %v455 = vld [vmem:[%s3 + $0xc18] sm:$0xff]
  %v456 = vld [vmem:[%s3 + $0xc20] sm:$0xff]
  %v457 = vld [vmem:[%s3 + $0xc28] sm:$0xff]
  %v458 = vld [vmem:[%s3 + $0xc30] sm:$0xff]
  %v459 = vld [vmem:[%s3 + $0xc38] sm:$0xff]
  %v460 = vld [vmem:[%s3 + $0xc40] sm:$0xff]
  %v461 = vld [vmem:[%s3 + $0xc48] sm:$0xff]
  %v462 = vld [vmem:[%s3 + $0xc50] sm:$0xff]
  %v463 = vld [vmem:[%s3 + $0xc58] sm:$0xff]
  %v464 = vld [vmem:[%s3 + $0xc60] sm:$0xff]
  %v465 = vld [vmem:[%s3 + $0xc68] sm:$0xff]
  %v466 = vld [vmem:[%s3 + $0xc70] sm:$0xff]
  %v467 = vld [vmem:[%s3 + $0xc78] sm:$0xff]
  %v468 = vld [vmem:[%s3 + $0xc80] sm:$0xff]
  %v469 = vld [vmem:[%s3 + $0xc88] sm:$0xff]
  %v470 = vld [vmem:[%s3 + $0xc90] sm:$0xff]
  %v471 = vld [vmem:[%s3 + $0xc98] sm:$0xff]
  %v472 = vld [vmem:[%s3 + $0xca0] sm:$0xff]
  %v473 = vld [vmem:[%s3 + $0xca8] sm:$0xff]
  %v474 = vld [vmem:[%s3 + $0xcb0] sm:$0xff]
  %v475 = vld [vmem:[%s3 + $0xcb8] sm:$0xff]
  %v476 = vld [vmem:[%s3 + $0xcc0] sm:$0xff]
  %v477 = vld [vmem:[%s3 + $0xcc8] sm:$0xff]
  %v478 = vld [vmem:[%s3 + $0xcd0] sm:$0xff]
  %v479 = vld [vmem:[%s3 + $0xcd8] sm:$0xff]
  %v480 = vld [vmem:[%s3 + $0xce0] sm:$0xff]
  %v481 = vld [vmem:[%s3 + $0xce8] sm:$0xff]
  %v482 = vld [vmem:[%s3 + $0xcf0] sm:$0xff]
  %v483 = vld [vmem:[%s3 + $0xcf8] sm:$0xff]
  %v484 = vld [vmem:[%s3 + $0xd00] sm:$0xff]
  %v485 = vld [vmem:[%s3 + $0xd08] sm:$0xff]
  %v486 = vld [vmem:[%s3 + $0xd10] sm:$0xff]
  %v487 = vld [vmem:[%s3 + $0xd18] sm:$0xff]
  %v488 = vld [vmem:[%s3 + $0xd20] sm:$0xff]
  %v489 = vld [vmem:[%s3 + $0xd28] sm:$0xff]
  %v490 = vld [vmem:[%s3 + $0xd30] sm:$0xff]
  %v491 = vld [vmem:[%s3 + $0xd38] sm:$0xff]
  %v492 = vld [vmem:[%s3 + $0xd40] sm:$0xff]
  %v493 = vld [vmem:[%s3 + $0xd48] sm:$0xff]
  %v494 = vld [vmem:[%s3 + $0xd50] sm:$0xff]
  %v495 = vld [vmem:[%s3 + $0xd58] sm:$0xff]
  %v496 = vld [vmem:[%s3 + $0xd60] sm:$0xff]
  %v497 = vld [vmem:[%s3 + $0xd68] sm:$0xff]
  %v498 = vld [vmem:[%s3 + $0xd70] sm:$0xff]
  %v499 = vld [vmem:[%s3 + $0xd78] sm:$0xff]
  %v500 = vld [vmem:[%s3 + $0xd80] sm:$0xff]
  %v501 = vld [vmem:[%s3 + $0xd88] sm:$0xff]
  %v502 = vld [vmem:[%s3 + $0xd90] sm:$0xff]
  %v503 = vld [vmem:[%s3 + $0xd98] sm:$0xff]
  %v504 = vld [vmem:[%s3 + $0xda0] sm:$0xff]
  %v505 = vld [vmem:[%s3 + $0xda8] sm:$0xff]
  %v506 = vld [vmem:[%s3 + $0xdb0] sm:$0xff]
  %v507 = vld [vmem:[%s3 + $0xdb8] sm:$0xff]
  %v508 = vld [vmem:[%s3 + $0xdc0] sm:$0xff]
  %v509 = vld [vmem:[%s3 + $0xdc8] sm:$0xff]
  %v510 = vld [vmem:[%s3 + $0xdd0] sm:$0xff]
  %v511 = vld [vmem:[%s3 + $0xdd8] sm:$0xff]
  %v512 = vld [vmem:[%s3 + $0xde0] sm:$0xff]
  %v513 = vld [vmem:[%s3 + $0xde8] sm:$0xff]
  %v514 = vld [vmem:[%s3 + $0xdf0] sm:$0xff]
  %v515 = vld [vmem:[%s3 + $0xdf8] sm:$0xff]
  %v516 = vld [vmem:[%s3 + $0xe00] sm:$0xff]
  %v517 = vld [vmem:[%s3 + $0xe08] sm:$0xff]
  %v518 = vld [vmem:[%s3 + $0xe10] sm:$0xff]
  %v519 = vld [vmem:[%s3 + $0xe18] sm:$0xff]
  %v520 = vld [vmem:[%s3 + $0xe20] sm:$0xff]
  %v521 = vld [vmem:[%s3 + $0xe28] sm:$0xff]
  %v522 = vld [vmem:[%s3 + $0xe30] sm:$0xff]
  %v523 = vld [vmem:[%s3 + $0xe38] sm:$0xff]
  %v524 = vld [vmem:[%s3 + $0xe40] sm:$0xff]
  %v525 = vld [vmem:[%s3 + $0xe48] sm:$0xff]
  %v526 = vld [vmem:[%s3 + $0xe50] sm:$0xff]
  %v527 = vld [vmem:[%s3 + $0xe58] sm:$0xff]
  %v528 = vld [vmem:[%s3 + $0xe60] sm:$0xff]
  %v529 = vld [vmem:[%s3 + $0xe68] sm:$0xff]
  %v530 = vld [vmem:[%s3 + $0xe70] sm:$0xff]
  %v531 = vld [vmem:[%s3 + $0xe78] sm:$0xff]
  %v532 = vld [vmem:[%s3 + $0xe80] sm:$0xff]
  %v533 = vld [vmem:[%s3 + $0xe88] sm:$0xff]
  %v534 = vld [vmem:[%s3 + $0xe90] sm:$0xff]
  %v535 = vld [vmem:[%s3 + $0xe98] sm:$0xff]
  %v536 = vld [vmem:[%s3 + $0xea0] sm:$0xff]
  %v537 = vld [vmem:[%s3 + $0xea8] sm:$0xff]
  %v538 = vld [vmem:[%s3 + $0xeb0] sm:$0xff]
  %v539 = vld [vmem:[%s3 + $0xeb8] sm:$0xff]
  %v540 = vld [vmem:[%s3 + $0xec0] sm:$0xff]
  %v541 = vld [vmem:[%s3 + $0xec8] sm:$0xff]
  %v542 = vld [vmem:[%s3 + $0xed0] sm:$0xff]
  %v543 = vld [vmem:[%s3 + $0xed8] sm:$0xff]
  %v544 = vld [vmem:[%s3 + $0xee0] sm:$0xff]
  %v545 = vld [vmem:[%s3 + $0xee8] sm:$0xff]
  %v546 = vld [vmem:[%s3 + $0xef0] sm:$0xff]
  %v547 = vld [vmem:[%s3 + $0xef8] sm:$0xff]
  %v548 = vld [vmem:[%s3 + $0xf00] sm:$0xff]
  %v549 = vld [vmem:[%s3 + $0xf08] sm:$0xff]
  %v550 = vld [vmem:[%s3 + $0xf10] sm:$0xff]
  %v551 = vld [vmem:[%s3 + $0xf18] sm:$0xff]
  %v552 = vld [vmem:[%s3 + $0xf20] sm:$0xff]
  %v553 = vld [vmem:[%s3 + $0xf28] sm:$0xff]
  %v554 = vld [vmem:[%s3 + $0xf30] sm:$0xff]
  %v555 = vld [vmem:[%s3 + $0xf38] sm:$0xff]
  %v556 = vld [vmem:[%s3 + $0xf40] sm:$0xff]
  %v557 = vld [vmem:[%s3 + $0xf48] sm:$0xff]
  %v558 = vld [vmem:[%s3 + $0xf50] sm:$0xff]
  %v559 = vld [vmem:[%s3 + $0xf58] sm:$0xff]
  %v560 = vld [vmem:[%s3 + $0xf60] sm:$0xff]
  %v561 = vld [vmem:[%s3 + $0xf68] sm:$0xff]
  %v562 = vld [vmem:[%s3 + $0xf70] sm:$0xff]
  %v563 = vld [vmem:[%s3 + $0xf78] sm:$0xff]
  %v564 = vld [vmem:[%s3 + $0xf80] sm:$0xff]
  %v565 = vld [vmem:[%s3 + $0xf88] sm:$0xff]
  %v566 = vld [vmem:[%s3 + $0xf90] sm:$0xff]
  %v567 = vld [vmem:[%s3 + $0xf98] sm:$0xff]
  %v568 = vld [vmem:[%s3 + $0xfa0] sm:$0xff]
  %v569 = vld [vmem:[%s3 + $0xfa8] sm:$0xff]
  %v570 = vld [vmem:[%s3 + $0xfb0] sm:$0xff]
  %v571 = vld [vmem:[%s3 + $0xfb8] sm:$0xff]
  %v572 = vld [vmem:[%s3 + $0xfc0] sm:$0xff]
  %v573 = vld [vmem:[%s3 + $0xfc8] sm:$0xff]
  %v574 = vld [vmem:[%s3 + $0xfd0] sm:$0xff]
  %v575 = vld [vmem:[%s3 + $0xfd8] sm:$0xff]
  %v576 = vld [vmem:[%s3 + $0xfe0] sm:$0xff]
  %v577 = vld [vmem:[%s3 + $0xfe8] sm:$0xff]
  %v578 = vld [vmem:[%s3 + $0xff0] sm:$0xff]
  %v579 = vld [vmem:[%s3 + $0xff8] sm:$0xff]
  %v580 = vld [vmem:[%s3 + $0x1000] sm:$0xff]
  %v581 = vld [vmem:[%s3 + $0x1008] sm:$0xff]
  %v582 = vld [vmem:[%s3 + $0x1010] sm:$0xff]
  %v583 = vld [vmem:[%s3 + $0x1018] sm:$0xff]
  %v584 = vld [vmem:[%s3 + $0x1020] sm:$0xff]
  %v585 = vld [vmem:[%s3 + $0x1028] sm:$0xff]
  %v586 = vld [vmem:[%s3 + $0x1030] sm:$0xff]
  %v587 = vld [vmem:[%s3 + $0x1038] sm:$0xff]
  %v588 = vld [vmem:[%s3 + $0x1040] sm:$0xff]
  %v589 = vld [vmem:[%s3 + $0x1048] sm:$0xff]
  %v590 = vld [vmem:[%s3 + $0x1050] sm:$0xff]
  %v591 = vld [vmem:[%s3 + $0x1058] sm:$0xff]
  %v592 = vld [vmem:[%s3 + $0x1060] sm:$0xff]
  %v593 = vld [vmem:[%s3 + $0x1068] sm:$0xff]
  %v594 = vld [vmem:[%s3 + $0x1070] sm:$0xff]
  %v595 = vld [vmem:[%s3 + $0x1078] sm:$0xff]
  %v596 = vld [vmem:[%s3 + $0x1080] sm:$0xff]
  %v597 = vld [vmem:[%s3 + $0x1088] sm:$0xff]
  %v598 = vld [vmem:[%s3 + $0x1090] sm:$0xff]
  %v599 = vld [vmem:[%s3 + $0x1098] sm:$0xff]
  %v600 = vld [vmem:[%s3 + $0x10a0] sm:$0xff]
  %v601 = vld [vmem:[%s3 + $0x10a8] sm:$0xff]
  %v602 = vld [vmem:[%s3 + $0x10b0] sm:$0xff]
  %v603 = vld [vmem:[%s3 + $0x10b8] sm:$0xff]
  %v604 = vld [vmem:[%s3 + $0x10c0] sm:$0xff]
  %v605 = vld [vmem:[%s3 + $0x10c8] sm:$0xff]
  %v606 = vld [vmem:[%s3 + $0x10d0] sm:$0xff]
  %v607 = vld [vmem:[%s3 + $0x10d8] sm:$0xff]
  %v608 = vld [vmem:[%s3 + $0x10e0] sm:$0xff]
  %v609 = vld [vmem:[%s3 + $0x10e8] sm:$0xff]
  %v610 = vld [vmem:[%s3 + $0x10f0] sm:$0xff]
  %v611 = vld [vmem:[%s3 + $0x10f8] sm:$0xff]
  %v612 = vld [vmem:[%s3 + $0x1100] sm:$0xff]
  %v613 = vld [vmem:[%s3 + $0x1108] sm:$0xff]
  %v614 = vld [vmem:[%s3 + $0x1110] sm:$0xff]
  %v615 = vld [vmem:[%s3 + $0x1118] sm:$0xff]
  %v616 = vld [vmem:[%s3 + $0x1120] sm:$0xff]
  %v617 = vld [vmem:[%s3 + $0x1128] sm:$0xff]
  %v618 = vld [vmem:[%s3 + $0x1130] sm:$0xff]
  %v619 = vld [vmem:[%s3 + $0x1138] sm:$0xff]
  %v620 = vld [vmem:[%s3 + $0x1140] sm:$0xff]
  %v621 = vld [vmem:[%s3 + $0x1148] sm:$0xff]
  %v622 = vld [vmem:[%s3 + $0x1150] sm:$0xff]
  %v623 = vld [vmem:[%s3 + $0x1158] sm:$0xff]
  %v624 = vld [vmem:[%s3 + $0x1160] sm:$0xff]
  %v625 = vld [vmem:[%s3 + $0x1168] sm:$0xff]
  %v626 = vld [vmem:[%s3 + $0x1170] sm:$0xff]
  %v627 = vld [vmem:[%s3 + $0x1178] sm:$0xff]
  %v628 = vld [vmem:[%s3 + $0x1180] sm:$0xff]
  %v629 = vld [vmem:[%s3 + $0x1188] sm:$0xff]
  %v630 = vld [vmem:[%s3 + $0x1190] sm:$0xff]
  %v631 = vld [vmem:[%s3 + $0x1198] sm:$0xff]
  %v632 = vld [vmem:[%s3 + $0x11a0] sm:$0xff]
  %v633 = vld [vmem:[%s3 + $0x11a8] sm:$0xff]
  %v634 = vld [vmem:[%s3 + $0x11b0] sm:$0xff]
  %v635 = vld [vmem:[%s3 + $0x11b8] sm:$0xff]
  %v636 = vld [vmem:[%s3 + $0x11c0] sm:$0xff]
  %v637 = vld [vmem:[%s3 + $0x11c8] sm:$0xff]
  %v638 = vld [vmem:[%s3 + $0x11d0] sm:$0xff]
  %v639 = vld [vmem:[%s3 + $0x11d8] sm:$0xff]
  %v640 = vld [vmem:[%s3 + $0x11e0] sm:$0xff]
  %v641 = vld [vmem:[%s3 + $0x11e8] sm:$0xff]
  %v642 = vld [vmem:[%s3 + $0x11f0] sm:$0xff]
  %v643 = vld [vmem:[%s3 + $0x11f8] sm:$0xff]
  %v644 = vld [vmem:[%s3 + $0x1200] sm:$0xff]
  %v645 = vld [vmem:[%s3 + $0x1208] sm:$0xff]
  %v646 = vld [vmem:[%s3 + $0x1210] sm:$0xff]
  %v647 = vld [vmem:[%s3 + $0x1218] sm:$0xff]
  %v648 = vld [vmem:[%s3 + $0x1220] sm:$0xff]
  %v649 = vld [vmem:[%s3 + $0x1228] sm:$0xff]
  %v650 = vld [vmem:[%s3 + $0x1230] sm:$0xff]
  %v651 = vld [vmem:[%s3 + $0x1238] sm:$0xff]
  %v652 = vld [vmem:[%s3 + $0x1240] sm:$0xff]
  %v653 = vld [vmem:[%s3 + $0x1248] sm:$0xff]
  %v654 = vld [vmem:[%s3 + $0x1250] sm:$0xff]
  %v655 = vld [vmem:[%s3 + $0x1258] sm:$0xff]
  %v656 = vld [vmem:[%s3 + $0x1260] sm:$0xff]
  %v657 = vld [vmem:[%s3 + $0x1268] sm:$0xff]
  %v658 = vld [vmem:[%s3 + $0x1270] sm:$0xff]
  %v659 = vld [vmem:[%s3 + $0x1278] sm:$0xff]
  %v660 = vld [vmem:[%s3 + $0x1280] sm:$0xff]
  %v661 = vld [vmem:[%s3 + $0x1288] sm:$0xff]
  %v662 = vld [vmem:[%s3 + $0x1290] sm:$0xff]
  %v663 = vld [vmem:[%s3 + $0x1298] sm:$0xff]
  %v664 = vld [vmem:[%s3 + $0x12a0] sm:$0xff]
  %v665 = vld [vmem:[%s3 + $0x12a8] sm:$0xff]
  %v666 = vld [vmem:[%s3 + $0x12b0] sm:$0xff]
  %v667 = vld [vmem:[%s3 + $0x12b8] sm:$0xff]
  %v668 = vld [vmem:[%s3 + $0x12c0] sm:$0xff]
  %v669 = vld [vmem:[%s3 + $0x12c8] sm:$0xff]
  %v670 = vld [vmem:[%s3 + $0x12d0] sm:$0xff]
  %v671 = vld [vmem:[%s3 + $0x12d8] sm:$0xff]
  %v672 = vld [vmem:[%s3 + $0x12e0] sm:$0xff]
  %v673 = vld [vmem:[%s3 + $0x12e8] sm:$0xff]
  %v674 = vld [vmem:[%s3 + $0x12f0] sm:$0xff]
  %v675 = vld [vmem:[%s3 + $0x12f8] sm:$0xff]
  %v676 = vld [vmem:[%s3 + $0x1300] sm:$0xff]
  %v677 = vld [vmem:[%s3 + $0x1308] sm:$0xff]
  %v678 = vld [vmem:[%s3 + $0x1310] sm:$0xff]
  %v679 = vld [vmem:[%s3 + $0x1318] sm:$0xff]
  %v680 = vld [vmem:[%s3 + $0x1320] sm:$0xff]
  %v681 = vld [vmem:[%s3 + $0x1328] sm:$0xff]
  %v682 = vld [vmem:[%s3 + $0x1330] sm:$0xff]
  %v683 = vld [vmem:[%s3 + $0x1338] sm:$0xff]
  %v684 = vld [vmem:[%s3 + $0x1340] sm:$0xff]
  %v685 = vld [vmem:[%s3 + $0x1348] sm:$0xff]
  %v686 = vld [vmem:[%s3 + $0x1350] sm:$0xff]
  %v687 = vld [vmem:[%s3 + $0x1358] sm:$0xff]
  %v688 = vld [vmem:[%s3 + $0x1360] sm:$0xff]
  %v689 = vld [vmem:[%s3 + $0x1368] sm:$0xff]
  %v690 = vld [vmem:[%s3 + $0x1370] sm:$0xff]
  %v691 = vld [vmem:[%s3 + $0x1378] sm:$0xff]
  %v692 = vld [vmem:[%s3 + $0x1380] sm:$0xff]
  %v693 = vld [vmem:[%s3 + $0x1388] sm:$0xff]
  %v694 = vld [vmem:[%s3 + $0x1390] sm:$0xff]
  %v695 = vld [vmem:[%s3 + $0x1398] sm:$0xff]
  %v696 = vld [vmem:[%s3 + $0x13a0] sm:$0xff]
  %v697 = vld [vmem:[%s3 + $0x13a8] sm:$0xff]
  %v698 = vld [vmem:[%s3 + $0x13b0] sm:$0xff]
  %v699 = vld [vmem:[%s3 + $0x13b8] sm:$0xff]
  %v700 = vld [vmem:[%s3 + $0x13c0] sm:$0xff]
  %v701 = vld [vmem:[%s3 + $0x13c8] sm:$0xff]
  %v702 = vld [vmem:[%s3 + $0x13d0] sm:$0xff]
  %v703 = vld [vmem:[%s3 + $0x13d8] sm:$0xff]
  %v704 = vld [vmem:[%s3 + $0x13e0] sm:$0xff]
  %v705 = vld [vmem:[%s3 + $0x13e8] sm:$0xff]
  %v706 = vld [vmem:[%s3 + $0x13f0] sm:$0xff]
  %v707 = vld [vmem:[%s3 + $0x13f8] sm:$0xff]
  %v708 = vld [vmem:[%s3 + $0x1400] sm:$0xff]
  %v709 = vld [vmem:[%s3 + $0x1408] sm:$0xff]
  %v710 = vld [vmem:[%s3 + $0x1410] sm:$0xff]
  %v711 = vld [vmem:[%s3 + $0x1418] sm:$0xff]
  %v712 = vld [vmem:[%s3 + $0x1420] sm:$0xff]
  %v713 = vld [vmem:[%s3 + $0x1428] sm:$0xff]
  %v714 = vld [vmem:[%s3 + $0x1430] sm:$0xff]
  %v715 = vld [vmem:[%s3 + $0x1438] sm:$0xff]
  %v716 = vld [vmem:[%s3 + $0x1440] sm:$0xff]
  %v717 = vld [vmem:[%s3 + $0x1448] sm:$0xff]
  %v718 = vld [vmem:[%s3 + $0x1450] sm:$0xff]
  %v719 = vld [vmem:[%s3 + $0x1458] sm:$0xff]
  %v720 = vld [vmem:[%s3 + $0x1460] sm:$0xff]
  %v721 = vld [vmem:[%s3 + $0x1468] sm:$0xff]
  %v722 = vld [vmem:[%s3 + $0x1470] sm:$0xff]
  %v723 = vld [vmem:[%s3 + $0x1478] sm:$0xff]
  %v724 = vld [vmem:[%s3 + $0x1480] sm:$0xff]
  %v725 = vld [vmem:[%s3 + $0x1488] sm:$0xff]
  %v726 = vld [vmem:[%s3 + $0x1490] sm:$0xff]
  %v727 = vld [vmem:[%s3 + $0x1498] sm:$0xff]
  %v728 = vld [vmem:[%s3 + $0x14a0] sm:$0xff]
  %v729 = vld [vmem:[%s3 + $0x14a8] sm:$0xff]
  %v730 = vld [vmem:[%s3 + $0x14b0] sm:$0xff]
  %v731 = vld [vmem:[%s3 + $0x14b8] sm:$0xff]
  %v732 = vld [vmem:[%s3 + $0x14c0] sm:$0xff]
  %v733 = vld [vmem:[%s3 + $0x14c8] sm:$0xff]
  %v734 = vld [vmem:[%s3 + $0x14d0] sm:$0xff]
  %v735 = vld [vmem:[%s3 + $0x14d8] sm:$0xff]
  %v736 = vld [vmem:[%s3 + $0x14e0] sm:$0xff]
  %v737 = vld [vmem:[%s3 + $0x14e8] sm:$0xff]
  %v738 = vld [vmem:[%s3 + $0x14f0] sm:$0xff]
  %v739 = vld [vmem:[%s3 + $0x14f8] sm:$0xff]
  %v740 = vld [vmem:[%s3 + $0x1500] sm:$0xff]
  %v741 = vld [vmem:[%s3 + $0x1508] sm:$0xff]
  %v742 = vld [vmem:[%s3 + $0x1510] sm:$0xff]
  %v743 = vld [vmem:[%s3 + $0x1518] sm:$0xff]
  %v744 = vld [vmem:[%s3 + $0x1520] sm:$0xff]
  %v745 = vld [vmem:[%s3 + $0x1528] sm:$0xff]
  %v746 = vld [vmem:[%s3 + $0x1530] sm:$0xff]
  %v747 = vld [vmem:[%s3 + $0x1538] sm:$0xff]
  %v748 = vld [vmem:[%s3 + $0x1540] sm:$0xff]
  %v749 = vld [vmem:[%s3 + $0x1548] sm:$0xff]
  %v750 = vld [vmem:[%s3 + $0x1550] sm:$0xff]
  %v751 = vld [vmem:[%s3 + $0x1558] sm:$0xff]
  %v752 = vld [vmem:[%s3 + $0x1560] sm:$0xff]
  %v753 = vld [vmem:[%s3 + $0x1568] sm:$0xff]
  %v754 = vld [vmem:[%s3 + $0x1570] sm:$0xff]
  %v755 = vld [vmem:[%s3 + $0x1578] sm:$0xff]
  %v756 = vld [vmem:[%s3 + $0x1580] sm:$0xff]
  %v757 = vld [vmem:[%s3 + $0x1588] sm:$0xff]
  %v758 = vld [vmem:[%s3 + $0x1590] sm:$0xff]
  %v759 = vld [vmem:[%s3 + $0x1598] sm:$0xff]
  %v760 = vld [vmem:[%s3 + $0x15a0] sm:$0xff]
  %v761 = vld [vmem:[%s3 + $0x15a8] sm:$0xff]
  %v762 = vld [vmem:[%s3 + $0x15b0] sm:$0xff]
  %v763 = vld [vmem:[%s3 + $0x15b8] sm:$0xff]
  %v764 = vld [vmem:[%s3 + $0x15c0] sm:$0xff]
  %v765 = vld [vmem:[%s3 + $0x15c8] sm:$0xff]
  %v766 = vld [vmem:[%s3 + $0x15d0] sm:$0xff]
  %v767 = vld [vmem:[%s3 + $0x15d8] sm:$0xff]
  %v768 = vld [vmem:[%s3 + $0x15e0] sm:$0xff]
  %v769 = vld [vmem:[%s3 + $0x15e8] sm:$0xff]
  %v770 = vld [vmem:[%s3 + $0x15f0] sm:$0xff]
  %v771 = vld [vmem:[%s3 + $0x15f8] sm:$0xff]
  %v772 = vld [vmem:[%s3 + $0x1600] sm:$0xff]
  %v773 = vld [vmem:[%s3 + $0x1608] sm:$0xff]
  %v774 = vld [vmem:[%s3 + $0x1610] sm:$0xff]
  %v775 = vld [vmem:[%s3 + $0x1618] sm:$0xff]
  %v776 = vld [vmem:[%s3 + $0x1620] sm:$0xff]
  %v777 = vld [vmem:[%s3 + $0x1628] sm:$0xff]
  %v778 = vld [vmem:[%s3 + $0x1630] sm:$0xff]
  %v779 = vld [vmem:[%s3 + $0x1638] sm:$0xff]
  %v780 = vld [vmem:[%s3 + $0x1640] sm:$0xff]
  %v781 = vld [vmem:[%s3 + $0x1648] sm:$0xff]
  %v782 = vld [vmem:[%s3 + $0x1650] sm:$0xff]
  %v783 = vld [vmem:[%s3 + $0x1658] sm:$0xff]
  %v784 = vld [vmem:[%s3 + $0x1660] sm:$0xff]
  %v785 = vld [vmem:[%s3 + $0x1668] sm:$0xff]
  %v786 = vld [vmem:[%s3 + $0x1670] sm:$0xff]
  %v787 = vld [vmem:[%s3 + $0x1678] sm:$0xff]
  %v788 = vld [vmem:[%s3 + $0x1680] sm:$0xff]
  %v789 = vld [vmem:[%s3 + $0x1688] sm:$0xff]
  %v790 = vld [vmem:[%s3 + $0x1690] sm:$0xff]
  %v791 = vld [vmem:[%s3 + $0x1698] sm:$0xff]
  %v792 = vld [vmem:[%s3 + $0x16a0] sm:$0xff]
  %v793 = vld [vmem:[%s3 + $0x16a8] sm:$0xff]
  %v794 = vld [vmem:[%s3 + $0x16b0] sm:$0xff]
  %v795 = vld [vmem:[%s3 + $0x16b8] sm:$0xff]
  %v796 = vld [vmem:[%s3 + $0x16c0] sm:$0xff]
  %v797 = vld [vmem:[%s3 + $0x16c8] sm:$0xff]
  %v798 = vld [vmem:[%s3 + $0x16d0] sm:$0xff]
  %v799 = vld [vmem:[%s3 + $0x16d8] sm:$0xff]
  %v800 = vld [vmem:[%s3 + $0x16e0] sm:$0xff]
  %v801 = vld [vmem:[%s3 + $0x16e8] sm:$0xff]
  %v802 = vld [vmem:[%s3 + $0x16f0] sm:$0xff]
  %v803 = vld [vmem:[%s3 + $0x16f8] sm:$0xff]
  %v804 = vld [vmem:[%s3 + $0x1700] sm:$0xff]
  %v805 = vld [vmem:[%s3 + $0x1708] sm:$0xff]
  %v806 = vld [vmem:[%s3 + $0x1710] sm:$0xff]
  %v807 = vld [vmem:[%s3 + $0x1718] sm:$0xff]
  %v808 = vld [vmem:[%s3 + $0x1720] sm:$0xff]
  %v809 = vld [vmem:[%s3 + $0x1728] sm:$0xff]
  %v810 = vld [vmem:[%s3 + $0x1730] sm:$0xff]
  %v811 = vld [vmem:[%s3 + $0x1738] sm:$0xff]
  %v812 = vld [vmem:[%s3 + $0x1740] sm:$0xff]
  %v813 = vld [vmem:[%s3 + $0x1748] sm:$0xff]
  %v814 = vld [vmem:[%s3 + $0x1750] sm:$0xff]
  %v815 = vld [vmem:[%s3 + $0x1758] sm:$0xff]
  %v816 = vld [vmem:[%s3 + $0x1760] sm:$0xff]
  %v817 = vld [vmem:[%s3 + $0x1768] sm:$0xff]
  %v818 = vld [vmem:[%s3 + $0x1770] sm:$0xff]
  %v819 = vld [vmem:[%s3 + $0x1778] sm:$0xff]
  %v820 = vld [vmem:[%s3 + $0x1780] sm:$0xff]
  %v821 = vld [vmem:[%s3 + $0x1788] sm:$0xff]
  %v822 = vld [vmem:[%s3 + $0x1790] sm:$0xff]
  %v823 = vld [vmem:[%s3 + $0x1798] sm:$0xff]
  %v824 = vld [vmem:[%s3 + $0x17a0] sm:$0xff]
  %v825 = vld [vmem:[%s3 + $0x17a8] sm:$0xff]
  %v826 = vld [vmem:[%s3 + $0x17b0] sm:$0xff]
  %v827 = vld [vmem:[%s3 + $0x17b8] sm:$0xff]
  %v828 = vld [vmem:[%s3 + $0x17c0] sm:$0xff]
  %v829 = vld [vmem:[%s3 + $0x17c8] sm:$0xff]
  %v830 = vld [vmem:[%s3 + $0x17d0] sm:$0xff]
  %v831 = vld [vmem:[%s3 + $0x17d8] sm:$0xff]
  %v832 = vld [vmem:[%s3 + $0x17e0] sm:$0xff]
  %v833 = vld [vmem:[%s3 + $0x17e8] sm:$0xff]
  %v834 = vld [vmem:[%s3 + $0x17f0] sm:$0xff]
  %v835 = vld [vmem:[%s3 + $0x17f8] sm:$0xff]
  %v836 = vld [vmem:[%s3 + $0x1800] sm:$0xff]
  %v837 = vld [vmem:[%s3 + $0x1808] sm:$0xff]
  %v838 = vld [vmem:[%s3 + $0x1810] sm:$0xff]
  %v839 = vld [vmem:[%s3 + $0x1818] sm:$0xff]
  %v840 = vld [vmem:[%s3 + $0x1820] sm:$0xff]
  %v841 = vld [vmem:[%s3 + $0x1828] sm:$0xff]
  %v842 = vld [vmem:[%s3 + $0x1830] sm:$0xff]
  %v843 = vld [vmem:[%s3 + $0x1838] sm:$0xff]
  %v844 = vld [vmem:[%s3 + $0x1840] sm:$0xff]
  %v845 = vld [vmem:[%s3 + $0x1848] sm:$0xff]
  %v846 = vld [vmem:[%s3 + $0x1850] sm:$0xff]
  %v847 = vld [vmem:[%s3 + $0x1858] sm:$0xff]
  %v848 = vld [vmem:[%s3 + $0x1860] sm:$0xff]
  %v849 = vld [vmem:[%s3 + $0x1868] sm:$0xff]
  %v850 = vld [vmem:[%s3 + $0x1870] sm:$0xff]
  %v851 = vld [vmem:[%s3 + $0x1878] sm:$0xff]
  %v852 = vld [vmem:[%s3 + $0x1880] sm:$0xff]
  %v853 = vld [vmem:[%s3 + $0x1888] sm:$0xff]
  %v854 = vld [vmem:[%s3 + $0x1890] sm:$0xff]
  %v855 = vld [vmem:[%s3 + $0x1898] sm:$0xff]
  %v856 = vld [vmem:[%s3 + $0x18a0] sm:$0xff]
  %v857 = vld [vmem:[%s3 + $0x18a8] sm:$0xff]
  %v858 = vld [vmem:[%s3 + $0x18b0] sm:$0xff]
  %v859 = vld [vmem:[%s3 + $0x18b8] sm:$0xff]
  %v860 = vld [vmem:[%s3 + $0x18c0] sm:$0xff]
  %v861 = vld [vmem:[%s3 + $0x18c8] sm:$0xff]
  %v862 = vld [vmem:[%s3 + $0x18d0] sm:$0xff]
  %v863 = vld [vmem:[%s3 + $0x18d8] sm:$0xff]
  %v864 = vld [vmem:[%s3 + $0x18e0] sm:$0xff]
  %v865 = vld [vmem:[%s3 + $0x18e8] sm:$0xff]
  %v866 = vld [vmem:[%s3 + $0x18f0] sm:$0xff]
  %v867 = vld [vmem:[%s3 + $0x18f8] sm:$0xff]
  %v868 = vld [vmem:[%s3 + $0x1900] sm:$0xff]
  %v869 = vld [vmem:[%s3 + $0x1908] sm:$0xff]
  %v870 = vld [vmem:[%s3 + $0x1910] sm:$0xff]
  %v871 = vld [vmem:[%s3 + $0x1918] sm:$0xff]
  %v872 = vld [vmem:[%s3 + $0x1920] sm:$0xff]
  %v873 = vld [vmem:[%s3 + $0x1928] sm:$0xff]
  %v874 = vld [vmem:[%s3 + $0x1930] sm:$0xff]
  %v875 = vld [vmem:[%s3 + $0x1938] sm:$0xff]
  %v876 = vld [vmem:[%s3 + $0x1940] sm:$0xff]
  %v877 = vld [vmem:[%s3 + $0x1948] sm:$0xff]
  %v878 = vld [vmem:[%s3 + $0x1950] sm:$0xff]
  %v879 = vld [vmem:[%s3 + $0x1958] sm:$0xff]
  %v880 = vld [vmem:[%s3 + $0x1960] sm:$0xff]
  %v881 = vld [vmem:[%s3 + $0x1968] sm:$0xff]
  %v882 = vld [vmem:[%s3 + $0x1970] sm:$0xff]
  %v883 = vld [vmem:[%s3 + $0x1978] sm:$0xff]
  %v884 = vld [vmem:[%s3 + $0x1980] sm:$0xff]
  %v885 = vld [vmem:[%s3 + $0x1988] sm:$0xff]
  %v886 = vld [vmem:[%s3 + $0x1990] sm:$0xff]
  %v887 = vld [vmem:[%s3 + $0x1998] sm:$0xff]
  %v888 = vld [vmem:[%s3 + $0x19a0] sm:$0xff]
  %v889 = vld [vmem:[%s3 + $0x19a8] sm:$0xff]
  %v890 = vld [vmem:[%s3 + $0x19b0] sm:$0xff]
  %v891 = vld [vmem:[%s3 + $0x19b8] sm:$0xff]
  %v892 = vld [vmem:[%s3 + $0x19c0] sm:$0xff]
  %v893 = vld [vmem:[%s3 + $0x19c8] sm:$0xff]
  %v894 = vld [vmem:[%s3 + $0x19d0] sm:$0xff]
  %v895 = vld [vmem:[%s3 + $0x19d8] sm:$0xff]
  %v896 = vld [vmem:[%s3 + $0x19e0] sm:$0xff]
  %v897 = vld [vmem:[%s3 + $0x19e8] sm:$0xff]
  %v898 = vld [vmem:[%s3 + $0x19f0] sm:$0xff]
  %v899 = vld [vmem:[%s3 + $0x19f8] sm:$0xff]
  %v900 = vld [vmem:[%s3 + $0x1a00] sm:$0xff]
  %v901 = vld [vmem:[%s3 + $0x1a08] sm:$0xff]
  %v902 = vld [vmem:[%s3 + $0x1a10] sm:$0xff]
  %v903 = vld [vmem:[%s3 + $0x1a18] sm:$0xff]
  %v904 = vld [vmem:[%s3 + $0x1a20] sm:$0xff]
  %v905 = vld [vmem:[%s3 + $0x1a28] sm:$0xff]
  %v906 = vld [vmem:[%s3 + $0x1a30] sm:$0xff]
  %v907 = vld [vmem:[%s3 + $0x1a38] sm:$0xff]
  %v908 = vld [vmem:[%s3 + $0x1a40] sm:$0xff]
  %v909 = vld [vmem:[%s3 + $0x1a48] sm:$0xff]
  %v910 = vld [vmem:[%s3 + $0x1a50] sm:$0xff]
  %v911 = vld [vmem:[%s3 + $0x1a58] sm:$0xff]
  %v912 = vld [vmem:[%s3 + $0x1a60] sm:$0xff]
  %v913 = vld [vmem:[%s3 + $0x1a68] sm:$0xff]
  %v914 = vld [vmem:[%s3 + $0x1a70] sm:$0xff]
  %v915 = vld [vmem:[%s3 + $0x1a78] sm:$0xff]
  %v916 = vld [vmem:[%s3 + $0x1a80] sm:$0xff]
  %v917 = vld [vmem:[%s3 + $0x1a88] sm:$0xff]
  %v918 = vld [vmem:[%s3 + $0x1a90] sm:$0xff]
  %v919 = vld [vmem:[%s3 + $0x1a98] sm:$0xff]
  %v920 = vld [vmem:[%s3 + $0x1aa0] sm:$0xff]
  %v921 = vld [vmem:[%s3 + $0x1aa8] sm:$0xff]
  %v922 = vld [vmem:[%s3 + $0x1ab0] sm:$0xff]
  %v923 = vld [vmem:[%s3 + $0x1ab8] sm:$0xff]
  %v924 = vld [vmem:[%s3 + $0x1ac0] sm:$0xff]
  %v925 = vld [vmem:[%s3 + $0x1ac8] sm:$0xff]
  %v926 = vld [vmem:[%s3 + $0x1ad0] sm:$0xff]
  %v927 = vld [vmem:[%s3 + $0x1ad8] sm:$0xff]
  %v928 = vld [vmem:[%s3 + $0x1ae0] sm:$0xff]
  %v929 = vld [vmem:[%s3 + $0x1ae8] sm:$0xff]
  %v930 = vld [vmem:[%s3 + $0x1af0] sm:$0xff]
  %v931 = vld [vmem:[%s3 + $0x1af8] sm:$0xff]
  %v932 = vld [vmem:[%s3 + $0x1b00] sm:$0xff]
  %v933 = vld [vmem:[%s3 + $0x1b08] sm:$0xff]
  %v934 = vld [vmem:[%s3 + $0x1b10] sm:$0xff]
  %v935 = vld [vmem:[%s3 + $0x1b18] sm:$0xff]
  %v936 = vld [vmem:[%s3 + $0x1b20] sm:$0xff]
  %v937 = vld [vmem:[%s3 + $0x1b28] sm:$0xff]
  %v938 = vld [vmem:[%s3 + $0x1b30] sm:$0xff]
  %v939 = vld [vmem:[%s3 + $0x1b38] sm:$0xff]
  %v940 = vld [vmem:[%s3 + $0x1b40] sm:$0xff]
  %v941 = vld [vmem:[%s3 + $0x1b48] sm:$0xff]
  %v942 = vld [vmem:[%s3 + $0x1b50] sm:$0xff]
  %v943 = vld [vmem:[%s3 + $0x1b58] sm:$0xff]
  %v944 = vld [vmem:[%s3 + $0x1b60] sm:$0xff]
  %v945 = vld [vmem:[%s3 + $0x1b68] sm:$0xff]
  %v946 = vld [vmem:[%s3 + $0x1b70] sm:$0xff]
  %v947 = vld [vmem:[%s3 + $0x1b78] sm:$0xff]
  %v948 = vld [vmem:[%s3 + $0x1b80] sm:$0xff]
  %v949 = vld [vmem:[%s3 + $0x1b88] sm:$0xff]
  %v950 = vld [vmem:[%s3 + $0x1b90] sm:$0xff]
  %v951 = vld [vmem:[%s3 + $0x1b98] sm:$0xff]
  %v952 = vld [vmem:[%s3 + $0x1ba0] sm:$0xff]
  %v953 = vld [vmem:[%s3 + $0x1ba8] sm:$0xff]
  %v954 = vld [vmem:[%s3 + $0x1bb0] sm:$0xff]
  %v955 = vld [vmem:[%s3 + $0x1bb8] sm:$0xff]
  %v956 = vld [vmem:[%s3 + $0x1bc0] sm:$0xff]
  %v957 = vld [vmem:[%s3 + $0x1bc8] sm:$0xff]
  %v958 = vld [vmem:[%s3 + $0x1bd0] sm:$0xff]
  %v959 = vld [vmem:[%s3 + $0x1bd8] sm:$0xff]
  %v960 = vld [vmem:[%s3 + $0x1be0] sm:$0xff]
  %v961 = vld [vmem:[%s3 + $0x1be8] sm:$0xff]
  %v962 = vld [vmem:[%s3 + $0x1bf0] sm:$0xff]
  %v963 = vld [vmem:[%s3 + $0x1bf8] sm:$0xff]
  %v964 = vld [vmem:[%s3 + $0x1c00] sm:$0xff]
  %v965 = vld [vmem:[%s3 + $0x1c08] sm:$0xff]
  %v966 = vld [vmem:[%s3 + $0x1c10] sm:$0xff]
  %v967 = vld [vmem:[%s3 + $0x1c18] sm:$0xff]
  %v968 = vld [vmem:[%s3 + $0x1c20] sm:$0xff]
  %v969 = vld [vmem:[%s3 + $0x1c28] sm:$0xff]
  %v970 = vld [vmem:[%s3 + $0x1c30] sm:$0xff]
  %v971 = vld [vmem:[%s3 + $0x1c38] sm:$0xff]
  %v972 = vld [vmem:[%s3 + $0x1c40] sm:$0xff]
  %v973 = vld [vmem:[%s3 + $0x1c48] sm:$0xff]
  %v974 = vld [vmem:[%s3 + $0x1c50] sm:$0xff]
  %v975 = vld [vmem:[%s3 + $0x1c58] sm:$0xff]
  %v976 = vld [vmem:[%s3 + $0x1c60] sm:$0xff]
  %v977 = vld [vmem:[%s3 + $0x1c68] sm:$0xff]
  %v978 = vld [vmem:[%s3 + $0x1c70] sm:$0xff]
  %v979 = vld [vmem:[%s3 + $0x1c78] sm:$0xff]
  %v980 = vld [vmem:[%s3 + $0x1c80] sm:$0xff]
  %v981 = vld [vmem:[%s3 + $0x1c88] sm:$0xff]
  %v982 = vld [vmem:[%s3 + $0x1c90] sm:$0xff]
  %v983 = vld [vmem:[%s3 + $0x1c98] sm:$0xff]
  %v984 = vld [vmem:[%s3 + $0x1ca0] sm:$0xff]
  %v985 = vld [vmem:[%s3 + $0x1ca8] sm:$0xff]
  %v986 = vld [vmem:[%s3 + $0x1cb0] sm:$0xff]
  %v987 = vld [vmem:[%s3 + $0x1cb8] sm:$0xff]
  %v988 = vld [vmem:[%s3 + $0x1cc0] sm:$0xff]
  %v989 = vld [vmem:[%s3 + $0x1cc8] sm:$0xff]
  %v990 = vld [vmem:[%s3 + $0x1cd0] sm:$0xff]
  %v991 = vld [vmem:[%s3 + $0x1cd8] sm:$0xff]
  %v992 = vld [vmem:[%s3 + $0x1ce0] sm:$0xff]
  %v993 = vld [vmem:[%s3 + $0x1ce8] sm:$0xff]
  %v994 = vld [vmem:[%s3 + $0x1cf0] sm:$0xff]
  %v995 = vld [vmem:[%s3 + $0x1cf8] sm:$0xff]
  %v996 = vld [vmem:[%s3 + $0x1d00] sm:$0xff]
  %v997 = vld [vmem:[%s3 + $0x1d08] sm:$0xff]
  %v998 = vld [vmem:[%s3 + $0x1d10] sm:$0xff]
  %v999 = vld [vmem:[%s3 + $0x1d18] sm:$0xff]
  %v1000 = vld [vmem:[%s3 + $0x1d20] sm:$0xff]
  %v1001 = vld [vmem:[%s3 + $0x1d28] sm:$0xff]
  %v1002 = vld [vmem:[%s3 + $0x1d30] sm:$0xff]
  %v1003 = vld [vmem:[%s3 + $0x1d38] sm:$0xff]
  %v1004 = vld [vmem:[%s3 + $0x1d40] sm:$0xff]
  %v1005 = vld [vmem:[%s3 + $0x1d48] sm:$0xff]
  %v1006 = vld [vmem:[%s3 + $0x1d50] sm:$0xff]
  %v1007 = vld [vmem:[%s3 + $0x1d58] sm:$0xff]
  %v1008 = vld [vmem:[%s3 + $0x1d60] sm:$0xff]
  %v1009 = vld [vmem:[%s3 + $0x1d68] sm:$0xff]
  %v1010 = vld [vmem:[%s3 + $0x1d70] sm:$0xff]
  %v1011 = vld [vmem:[%s3 + $0x1d78] sm:$0xff]
  %v1012 = vld [vmem:[%s3 + $0x1d80] sm:$0xff]
  %v1013 = vld [vmem:[%s3 + $0x1d88] sm:$0xff]
  %v1014 = vld [vmem:[%s3 + $0x1d90] sm:$0xff]
  %v1015 = vld [vmem:[%s3 + $0x1d98] sm:$0xff]
  %v1016 = vld [vmem:[%s3 + $0x1da0] sm:$0xff]
  %v1017 = vld [vmem:[%s3 + $0x1da8] sm:$0xff]
  %v1018 = vld [vmem:[%s3 + $0x1db0] sm:$0xff]
  %v1019 = vld [vmem:[%s3 + $0x1db8] sm:$0xff]
  %v1020 = vld [vmem:[%s3 + $0x1dc0] sm:$0xff]
  %v1021 = vld [vmem:[%s3 + $0x1dc8] sm:$0xff]
  %v1022 = vld [vmem:[%s3 + $0x1dd0] sm:$0xff]
  %v1023 = vld [vmem:[%s3 + $0x1dd8] sm:$0xff]
  %v1024 = vld [vmem:[%s3 + $0x1de0] sm:$0xff]
  %v1025 = vld [vmem:[%s3 + $0x1de8] sm:$0xff]
  %v1026 = vld [vmem:[%s3 + $0x1df0] sm:$0xff]
  %v1027 = vld [vmem:[%s3 + $0x1df8] sm:$0xff]
  %v1028 = vld [vmem:[%s3 + $0x1e00] sm:$0xff]
  %v1029 = vld [vmem:[%s3 + $0x1e08] sm:$0xff]
  %v1030 = vld [vmem:[%s3 + $0x1e10] sm:$0xff]
  %v1031 = vld [vmem:[%s3 + $0x1e18] sm:$0xff]
  %v1032 = vld [vmem:[%s3 + $0x1e20] sm:$0xff]
  %v1033 = vld [vmem:[%s3 + $0x1e28] sm:$0xff]
  %v1034 = vld [vmem:[%s3 + $0x1e30] sm:$0xff]
  %v1035 = vld [vmem:[%s3 + $0x1e38] sm:$0xff]
  %v1036 = vld [vmem:[%s3 + $0x1e40] sm:$0xff]
  %v1037 = vld [vmem:[%s3 + $0x1e48] sm:$0xff]
  %v1038 = vld [vmem:[%s3 + $0x1e50] sm:$0xff]
  %v1039 = vld [vmem:[%s3 + $0x1e58] sm:$0xff]
  %v1040 = vld [vmem:[%s3 + $0x1e60] sm:$0xff]
  %v1041 = vld [vmem:[%s3 + $0x1e68] sm:$0xff]
  %v1042 = vld [vmem:[%s3 + $0x1e70] sm:$0xff]
  %v1043 = vld [vmem:[%s3 + $0x1e78] sm:$0xff]
  %v1044 = vld [vmem:[%s3 + $0x1e80] sm:$0xff]
  %v1045 = vld [vmem:[%s3 + $0x1e88] sm:$0xff]
  %v1046 = vld [vmem:[%s3 + $0x1e90] sm:$0xff]
  %v1047 = vld [vmem:[%s3 + $0x1e98] sm:$0xff]
  %v1048 = vld [vmem:[%s3 + $0x1ea0] sm:$0xff]
  %v1049 = vld [vmem:[%s3 + $0x1ea8] sm:$0xff]
  %v1050 = vld [vmem:[%s3 + $0x1eb0] sm:$0xff]
  %v1051 = vld [vmem:[%s3 + $0x1eb8] sm:$0xff]
  %v1052 = vld [vmem:[%s3 + $0x1ec0] sm:$0xff]
  %v1053 = vld [vmem:[%s3 + $0x1ec8] sm:$0xff]
  %v1054 = vld [vmem:[%s3 + $0x1ed0] sm:$0xff]
  %v1055 = vld [vmem:[%s3 + $0x1ed8] sm:$0xff]
  %v1056 = vld [vmem:[%s3 + $0x1ee0] sm:$0xff]
  %v1057 = vld [vmem:[%s3 + $0x1ee8] sm:$0xff]
  %v1058 = vld [vmem:[%s3 + $0x1ef0] sm:$0xff]
  %v1059 = vld [vmem:[%s3 + $0x1ef8] sm:$0xff]
  %v1060 = vld [vmem:[%s3 + $0x1f00] sm:$0xff]
  %v1061 = vld [vmem:[%s3 + $0x1f08] sm:$0xff]
  %v1062 = vld [vmem:[%s3 + $0x1f10] sm:$0xff]
  %v1063 = vld [vmem:[%s3 + $0x1f18] sm:$0xff]
  %v1064 = vld [vmem:[%s3 + $0x1f20] sm:$0xff]
  %v1065 = vld [vmem:[%s3 + $0x1f28] sm:$0xff]
  %v1066 = vld [vmem:[%s3 + $0x1f30] sm:$0xff]
  %v1067 = vld [vmem:[%s3 + $0x1f38] sm:$0xff]
  %v1068 = vld [vmem:[%s3 + $0x1f40] sm:$0xff]
  %v1069 = vld [vmem:[%s3 + $0x1f48] sm:$0xff]
  %v1070 = vld [vmem:[%s3 + $0x1f50] sm:$0xff]
  %v1071 = vld [vmem:[%s3 + $0x1f58] sm:$0xff]
  %v1072 = vld [vmem:[%s3 + $0x1f60] sm:$0xff]
  %v1073 = vld [vmem:[%s3 + $0x1f68] sm:$0xff]
  %v1074 = vld [vmem:[%s3 + $0x1f70] sm:$0xff]
  %v1075 = vld [vmem:[%s3 + $0x1f78] sm:$0xff]
  %v1076 = vld [vmem:[%s3 + $0x1f80] sm:$0xff]
  %v1077 = vld [vmem:[%s3 + $0x1f88] sm:$0xff]
  %v1078 = vld [vmem:[%s3 + $0x1f90] sm:$0xff]
  %v1079 = vld [vmem:[%s3 + $0x1f98] sm:$0xff]
  %v1080 = vld [vmem:[%s3 + $0x1fa0] sm:$0xff]
  %v1081 = vld [vmem:[%s3 + $0x1fa8] sm:$0xff]
  %v1082 = vld [vmem:[%s3 + $0x1fb0] sm:$0xff]
  %v1083 = vld [vmem:[%s3 + $0x1fb8] sm:$0xff]
  %v1084 = vld [vmem:[%s3 + $0x1fc0] sm:$0xff]
  %v1085 = vld [vmem:[%s3 + $0x1fc8] sm:$0xff]
  %v1086 = vld [vmem:[%s3 + $0x1fd0] sm:$0xff]
  %v1087 = vld [vmem:[%s3 + $0x1fd8] sm:$0xff]
  %v1088 = vld [vmem:[%s3 + $0x1fe0] sm:$0xff]
  %v1089 = vld [vmem:[%s3 + $0x1fe8] sm:$0xff]
  %v1090 = vld [vmem:[%s3 + $0x1ff0] sm:$0xff]
  %v1091 = vld [vmem:[%s3 + $0x1ff8] sm:$0xff]
  %v1092 = vld [vmem:[%s3 + $0x2000] sm:$0xff]
  %v1093 = vld [vmem:[%s3 + $0x2008] sm:$0xff]
  %v1094 = vld [vmem:[%s3 + $0x2010] sm:$0xff]
  %v1095 = vld [vmem:[%s3 + $0x2018] sm:$0xff]
  %v1096 = vld [vmem:[%s3 + $0x2020] sm:$0xff]
  %v1097 = vld [vmem:[%s3 + $0x2028] sm:$0xff]
  %v1098 = vld [vmem:[%s3 + $0x2030] sm:$0xff]
  %v1099 = vld [vmem:[%s3 + $0x2038] sm:$0xff]
  %v1100 = vld [vmem:[%s3 + $0x2040] sm:$0xff]
  %v1101 = vld [vmem:[%s3 + $0x2048] sm:$0xff]
  %v1102 = vld [vmem:[%s3 + $0x2050] sm:$0xff]
  %v1103 = vld [vmem:[%s3 + $0x2058] sm:$0xff]
  %v1104 = vld [vmem:[%s3 + $0x2060] sm:$0xff]
  %v1105 = vld [vmem:[%s3 + $0x2068] sm:$0xff]
  %v1106 = vld [vmem:[%s3 + $0x2070] sm:$0xff]
  %v1107 = vld [vmem:[%s3 + $0x2078] sm:$0xff]
  %v1108 = vld [vmem:[%s3 + $0x2080] sm:$0xff]
  %v1109 = vld [vmem:[%s3 + $0x2088] sm:$0xff]
  %v1110 = vld [vmem:[%s3 + $0x2090] sm:$0xff]
  %v1111 = vld [vmem:[%s3 + $0x2098] sm:$0xff]
  %v1112 = vld [vmem:[%s3 + $0x20a0] sm:$0xff]
  %v1113 = vld [vmem:[%s3 + $0x20a8] sm:$0xff]
  %v1114 = vld [vmem:[%s3 + $0x20b0] sm:$0xff]
  %v1115 = vld [vmem:[%s3 + $0x20b8] sm:$0xff]
  %v1116 = vld [vmem:[%s3 + $0x20c0] sm:$0xff]
  %v1117 = vld [vmem:[%s3 + $0x20c8] sm:$0xff]
  %v1118 = vld [vmem:[%s3 + $0x20d0] sm:$0xff]
  %v1119 = vld [vmem:[%s3 + $0x20d8] sm:$0xff]
  %v1120 = vld [vmem:[%s3 + $0x20e0] sm:$0xff]
  %v1121 = vld [vmem:[%s3 + $0x20e8] sm:$0xff]
  %v1122 = vld [vmem:[%s3 + $0x20f0] sm:$0xff]
  %v1123 = vld [vmem:[%s3 + $0x20f8] sm:$0xff]
  %v1124 = vld [vmem:[%s3 + $0x2100] sm:$0xff]
  %v1125 = vld [vmem:[%s3 + $0x2108] sm:$0xff]
  %v1126 = vld [vmem:[%s3 + $0x2110] sm:$0xff]
  %v1127 = vld [vmem:[%s3 + $0x2118] sm:$0xff]
  %v1128 = vld [vmem:[%s3 + $0x2120] sm:$0xff]
  %v1129 = vld [vmem:[%s3 + $0x2128] sm:$0xff]
  %v1130 = vld [vmem:[%s3 + $0x2130] sm:$0xff]
  %v1131 = vld [vmem:[%s3 + $0x2138] sm:$0xff]
  %v1132 = vld [vmem:[%s3 + $0x2140] sm:$0xff]
  %v1133 = vld [vmem:[%s3 + $0x2148] sm:$0xff]
  %v1134 = vld [vmem:[%s3 + $0x2150] sm:$0xff]
  %v1135 = vld [vmem:[%s3 + $0x2158] sm:$0xff]
  %v1136 = vld [vmem:[%s3 + $0x2160] sm:$0xff]
  %v1137 = vld [vmem:[%s3 + $0x2168] sm:$0xff]
  %v1138 = vld [vmem:[%s3 + $0x2170] sm:$0xff]
  %v1139 = vld [vmem:[%s3 + $0x2178] sm:$0xff]
  %v1140 = vld [vmem:[%s3 + $0x2180] sm:$0xff]
  %v1141 = vld [vmem:[%s3 + $0x2188] sm:$0xff]
  %v1142 = vld [vmem:[%s3 + $0x2190] sm:$0xff]
  %v1143 = vld [vmem:[%s3 + $0x2198] sm:$0xff]
  %v1144 = vld [vmem:[%s3 + $0x21a0] sm:$0xff]
  %v1145 = vld [vmem:[%s3 + $0x21a8] sm:$0xff]
  %v1146 = vld [vmem:[%s3 + $0x21b0] sm:$0xff]
  %v1147 = vld [vmem:[%s3 + $0x21b8] sm:$0xff]
  %v1148 = vld [vmem:[%s3 + $0x21c0] sm:$0xff]
  %v1149 = vld [vmem:[%s3 + $0x21c8] sm:$0xff]
  %v1150 = vld [vmem:[%s3 + $0x21d0] sm:$0xff]
  %v1151 = vld [vmem:[%s3 + $0x21d8] sm:$0xff]
  %v1152 = vld [vmem:[%s3 + $0x21e0] sm:$0xff]
  %v1153 = vld [vmem:[%s3 + $0x21e8] sm:$0xff]
  %v1154 = vld [vmem:[%s3 + $0x21f0] sm:$0xff]
  %v1155 = vld [vmem:[%s3 + $0x21f8] sm:$0xff]
  %v1156 = vld [vmem:[%s3 + $0x2200] sm:$0xff]
  %v1157 = vld [vmem:[%s3 + $0x2208] sm:$0xff]
  %v1158 = vld [vmem:[%s3 + $0x2210] sm:$0xff]
  %v1159 = vld [vmem:[%s3 + $0x2218] sm:$0xff]
  %v1160 = vld [vmem:[%s3 + $0x2220] sm:$0xff]
  %v1161 = vld [vmem:[%s3 + $0x2228] sm:$0xff]
  %v1162 = vld [vmem:[%s3 + $0x2230] sm:$0xff]
  %v1163 = vld [vmem:[%s3 + $0x2238] sm:$0xff]
  %v1164 = vld [vmem:[%s3 + $0x2240] sm:$0xff]
  %v1165 = vld [vmem:[%s3 + $0x2248] sm:$0xff]
  %v1166 = vld [vmem:[%s3 + $0x2250] sm:$0xff]
  %v1167 = vld [vmem:[%s3 + $0x2258] sm:$0xff]
  %v1168 = vld [vmem:[%s3 + $0x2260] sm:$0xff]
  %v1169 = vld [vmem:[%s3 + $0x2268] sm:$0xff]
  %v1170 = vld [vmem:[%s3 + $0x2270] sm:$0xff]
  %v1171 = vld [vmem:[%s3 + $0x2278] sm:$0xff]
  %v1172 = vld [vmem:[%s3 + $0x2280] sm:$0xff]
  %v1173 = vld [vmem:[%s3 + $0x2288] sm:$0xff]
  %v1174 = vld [vmem:[%s3 + $0x2290] sm:$0xff]
  %v1175 = vld [vmem:[%s3 + $0x2298] sm:$0xff]
  %v1176 = vld [vmem:[%s3 + $0x22a0] sm:$0xff]
  %v1177 = vld [vmem:[%s3 + $0x22a8] sm:$0xff]
  %v1178 = vld [vmem:[%s3 + $0x22b0] sm:$0xff]
  %v1179 = vld [vmem:[%s3 + $0x22b8] sm:$0xff]
  %v1180 = vld [vmem:[%s3 + $0x22c0] sm:$0xff]
  %v1181 = vld [vmem:[%s3 + $0x22c8] sm:$0xff]
  %v1182 = vld [vmem:[%s3 + $0x22d0] sm:$0xff]
  %v1183 = vld [vmem:[%s3 + $0x22d8] sm:$0xff]
  %v1184 = vld [vmem:[%s3 + $0x22e0] sm:$0xff]
  %v1185 = vld [vmem:[%s3 + $0x22e8] sm:$0xff]
  %v1186 = vld [vmem:[%s3 + $0x22f0] sm:$0xff]
  %v1187 = vld [vmem:[%s3 + $0x22f8] sm:$0xff]
  %v1188 = vld [vmem:[%s3 + $0x2300] sm:$0xff]
  %v1189 = vld [vmem:[%s3 + $0x2308] sm:$0xff]
  %v1190 = vld [vmem:[%s3 + $0x2310] sm:$0xff]
  %v1191 = vld [vmem:[%s3 + $0x2318] sm:$0xff]
  %v1192 = vld [vmem:[%s3 + $0x2320] sm:$0xff]
  %v1193 = vld [vmem:[%s3 + $0x2328] sm:$0xff]
  %v1194 = vld [vmem:[%s3 + $0x2330] sm:$0xff]
  %v1195 = vld [vmem:[%s3 + $0x2338] sm:$0xff]
  %v1196 = vld [vmem:[%s3 + $0x2340] sm:$0xff]
  %v1197 = vld [vmem:[%s3 + $0x2348] sm:$0xff]
  %v1198 = vld [vmem:[%s3 + $0x2350] sm:$0xff]
  %v1199 = vld [vmem:[%s3 + $0x2358] sm:$0xff]
  %v1200 = vld [vmem:[%s3 + $0x2360] sm:$0xff]
  %v1201 = vld [vmem:[%s3 + $0x2368] sm:$0xff]
  %v1202 = vld [vmem:[%s3 + $0x2370] sm:$0xff]
  %v1203 = vld [vmem:[%s3 + $0x2378] sm:$0xff]
  %v1204 = vld [vmem:[%s3 + $0x2380] sm:$0xff]
  %v1205 = vld [vmem:[%s3 + $0x2388] sm:$0xff]
  %v1206 = vld [vmem:[%s3 + $0x2390] sm:$0xff]
  %v1207 = vld [vmem:[%s3 + $0x2398] sm:$0xff]
  %v1208 = vld [vmem:[%s3 + $0x23a0] sm:$0xff]
  %v1209 = vld [vmem:[%s3 + $0x23a8] sm:$0xff]
  %v1210 = vld [vmem:[%s3 + $0x23b0] sm:$0xff]
  %v1211 = vld [vmem:[%s3 + $0x23b8] sm:$0xff]
  %v1212 = vld [vmem:[%s3 + $0x23c0] sm:$0xff]
  %v1213 = vld [vmem:[%s3 + $0x23c8] sm:$0xff]
  %v1214 = vld [vmem:[%s3 + $0x23d0] sm:$0xff]
  %v1215 = vld [vmem:[%s3 + $0x23d8] sm:$0xff]
  %v1216 = vld [vmem:[%s3 + $0x23e0] sm:$0xff]
  %v1217 = vld [vmem:[%s3 + $0x23e8] sm:$0xff]
  %v1218 = vld [vmem:[%s3 + $0x23f0] sm:$0xff]
  %v1219 = vld [vmem:[%s3 + $0x23f8] sm:$0xff]
  %v1220 = vld [vmem:[%s3 + $0x2400] sm:$0xff]
  %v1221 = vld [vmem:[%s3 + $0x2408] sm:$0xff]
  %v1222 = vld [vmem:[%s3 + $0x2410] sm:$0xff]
  %v1223 = vld [vmem:[%s3 + $0x2418] sm:$0xff]
  %v1224 = vld [vmem:[%s3 + $0x2420] sm:$0xff]
  %v1225 = vld [vmem:[%s3 + $0x2428] sm:$0xff]
  %v1226 = vld [vmem:[%s3 + $0x2430] sm:$0xff]
  %v1227 = vld [vmem:[%s3 + $0x2438] sm:$0xff]
  %v1228 = vld [vmem:[%s3 + $0x2440] sm:$0xff]
  %v1229 = vld [vmem:[%s3 + $0x2448] sm:$0xff]
  %v1230 = vld [vmem:[%s3 + $0x2450] sm:$0xff]
  %v1231 = vld [vmem:[%s3 + $0x2458] sm:$0xff]
  %v1232 = vld [vmem:[%s3 + $0x2460] sm:$0xff]
  %v1233 = vld [vmem:[%s3 + $0x2468] sm:$0xff]
  %v1234 = vld [vmem:[%s3 + $0x2470] sm:$0xff]
  %v1235 = vld [vmem:[%s3 + $0x2478] sm:$0xff]
  %v1236 = vld [vmem:[%s3 + $0x2480] sm:$0xff]
  %v1237 = vld [vmem:[%s3 + $0x2488] sm:$0xff]
  %v1238 = vld [vmem:[%s3 + $0x2490] sm:$0xff]
  %v1239 = vld [vmem:[%s3 + $0x2498] sm:$0xff]
  %v1240 = vld [vmem:[%s3 + $0x24a0] sm:$0xff]
  %v1241 = vld [vmem:[%s3 + $0x24a8] sm:$0xff]
  %v1242 = vld [vmem:[%s3 + $0x24b0] sm:$0xff]
  %v1243 = vld [vmem:[%s3 + $0x24b8] sm:$0xff]
  %v1244 = vld [vmem:[%s3 + $0x24c0] sm:$0xff]
  %v1245 = vld [vmem:[%s3 + $0x24c8] sm:$0xff]
  %v1246 = vld [vmem:[%s3 + $0x24d0] sm:$0xff]
  %v1247 = vld [vmem:[%s3 + $0x24d8] sm:$0xff]
  %v1248 = vld [vmem:[%s3 + $0x24e0] sm:$0xff]
  %v1249 = vld [vmem:[%s3 + $0x24e8] sm:$0xff]
  %v1250 = vld [vmem:[%s3 + $0x24f0] sm:$0xff]
  %v1251 = vld [vmem:[%s3 + $0x24f8] sm:$0xff]
  %v1252 = vld [vmem:[%s3 + $0x2500] sm:$0xff]
  %v1253 = vld [vmem:[%s3 + $0x2508] sm:$0xff]
  %v1254 = vld [vmem:[%s3 + $0x2510] sm:$0xff]
  %v1255 = vld [vmem:[%s3 + $0x2518] sm:$0xff]
  %v1256 = vld [vmem:[%s3 + $0x2520] sm:$0xff]
  %v1257 = vld [vmem:[%s3 + $0x2528] sm:$0xff]
  %v1258 = vld [vmem:[%s3 + $0x2530] sm:$0xff]
  %v1259 = vld [vmem:[%s3 + $0x2538] sm:$0xff]
  %v1260 = vld [vmem:[%s3 + $0x2540] sm:$0xff]
  %v1261 = vld [vmem:[%s3 + $0x2548] sm:$0xff]
  %v1262 = vld [vmem:[%s3 + $0x2550] sm:$0xff]
  %v1263 = vld [vmem:[%s3 + $0x2558] sm:$0xff]
  %v1264 = vld [vmem:[%s3 + $0x2560] sm:$0xff]
  %v1265 = vld [vmem:[%s3 + $0x2568] sm:$0xff]
  %v1266 = vld [vmem:[%s3 + $0x2570] sm:$0xff]
  %v1267 = vld [vmem:[%s3 + $0x2578] sm:$0xff]
  %v1268 = vld [vmem:[%s3 + $0x2580] sm:$0xff]
  %v1269 = vld [vmem:[%s3 + $0x2588] sm:$0xff]
  %v1270 = vld [vmem:[%s3 + $0x2590] sm:$0xff]
  %v1271 = vld [vmem:[%s3 + $0x2598] sm:$0xff]
  %v1272 = vld [vmem:[%s3 + $0x25a0] sm:$0xff]
  %v1273 = vld [vmem:[%s3 + $0x25a8] sm:$0xff]
  %v1274 = vld [vmem:[%s3 + $0x25b0] sm:$0xff]
  %v1275 = vld [vmem:[%s3 + $0x25b8] sm:$0xff]
  %v1276 = vld [vmem:[%s3 + $0x25c0] sm:$0xff]
  %v1277 = vld [vmem:[%s3 + $0x25c8] sm:$0xff]
  %v1278 = vld [vmem:[%s3 + $0x25d0] sm:$0xff]
  %v1279 = vld [vmem:[%s3 + $0x25d8] sm:$0xff]
  %v1280 = vld [vmem:[%s3 + $0x25e0] sm:$0xff]
  %v1281 = vld [vmem:[%s3 + $0x25e8] sm:$0xff]
  %v1282 = vld [vmem:[%s3 + $0x25f0] sm:$0xff]
  %v1283 = vld [vmem:[%s3 + $0x25f8] sm:$0xff]
  %v1284 = vld [vmem:[%s3 + $0x2600] sm:$0xff]
  %v1285 = vld [vmem:[%s3 + $0x2608] sm:$0xff]
  %v1286 = vld [vmem:[%s3 + $0x2610] sm:$0xff]
  %v1287 = vld [vmem:[%s3 + $0x2618] sm:$0xff]
  %v1288 = vld [vmem:[%s3 + $0x2620] sm:$0xff]
  %v1289 = vld [vmem:[%s3 + $0x2628] sm:$0xff]
  %v1290 = vld [vmem:[%s3 + $0x2630] sm:$0xff]
  %v1291 = vld [vmem:[%s3 + $0x2638] sm:$0xff]
  %v1292 = vld [vmem:[%s3 + $0x2640] sm:$0xff]
  %v1293 = vld [vmem:[%s3 + $0x2648] sm:$0xff]
  %v1294 = vld [vmem:[%s3 + $0x2650] sm:$0xff]
  %v1295 = vld [vmem:[%s3 + $0x2658] sm:$0xff]
  %v1296 = vld [vmem:[%s3 + $0x2660] sm:$0xff]
  %v1297 = vld [vmem:[%s3 + $0x2668] sm:$0xff]
  %v1298 = vld [vmem:[%s3 + $0x2670] sm:$0xff]
  %v1299 = vld [vmem:[%s3 + $0x2678] sm:$0xff]
  %v1300 = vld [vmem:[%s3 + $0x2680] sm:$0xff]
  %v1301 = vld [vmem:[%s3 + $0x2688] sm:$0xff]
  %v1302 = vld [vmem:[%s3 + $0x2690] sm:$0xff]
  %v1303 = vld [vmem:[%s3 + $0x2698] sm:$0xff]
  %v1304 = vld [vmem:[%s3 + $0x26a0] sm:$0xff]
  %v1305 = vld [vmem:[%s3 + $0x26a8] sm:$0xff]
  %v1306 = vld [vmem:[%s3 + $0x26b0] sm:$0xff]
  %v1307 = vld [vmem:[%s3 + $0x26b8] sm:$0xff]
  %v1308 = vld [vmem:[%s3 + $0x26c0] sm:$0xff]
  %v1309 = vld [vmem:[%s3 + $0x26c8] sm:$0xff]
  %v1310 = vld [vmem:[%s3 + $0x26d0] sm:$0xff]
  %v1311 = vld [vmem:[%s3 + $0x26d8] sm:$0xff]
  %v1312 = vld [vmem:[%s3 + $0x26e0] sm:$0xff]
  %v1313 = vld [vmem:[%s3 + $0x26e8] sm:$0xff]
  %v1314 = vld [vmem:[%s3 + $0x26f0] sm:$0xff]
  %v1315 = vld [vmem:[%s3 + $0x26f8] sm:$0xff]
  %v1316 = vld [vmem:[%s3 + $0x2700] sm:$0xff]
  %v1317 = vld [vmem:[%s3 + $0x2708] sm:$0xff]
  %v1318 = vld [vmem:[%s3 + $0x2710] sm:$0xff]
  %v1319 = vld [vmem:[%s3 + $0x2718] sm:$0xff]
  %v1320 = vld [vmem:[%s3 + $0x2720] sm:$0xff]
  %v1321 = vld [vmem:[%s3 + $0x2728] sm:$0xff]
  %v1322 = vld [vmem:[%s3 + $0x2730] sm:$0xff]
  %v1323 = vld [vmem:[%s3 + $0x2738] sm:$0xff]
  %v1324 = vld [vmem:[%s3 + $0x2740] sm:$0xff]
  %v1325 = vld [vmem:[%s3 + $0x2748] sm:$0xff]
  %v1326 = vld [vmem:[%s3 + $0x2750] sm:$0xff]
  %v1327 = vld [vmem:[%s3 + $0x2758] sm:$0xff]
  %v1328 = vld [vmem:[%s3 + $0x2760] sm:$0xff]
  %v1329 = vld [vmem:[%s3 + $0x2768] sm:$0xff]
  %v1330 = vld [vmem:[%s3 + $0x2770] sm:$0xff]
  %v1331 = vld [vmem:[%s3 + $0x2778] sm:$0xff]
  %v1332 = vld [vmem:[%s3 + $0x2780] sm:$0xff]
  %v1333 = vld [vmem:[%s3 + $0x2788] sm:$0xff]
  %v1334 = vld [vmem:[%s3 + $0x2790] sm:$0xff]
  %v1335 = vld [vmem:[%s3 + $0x2798] sm:$0xff]
  %v1336 = vld [vmem:[%s3 + $0x27a0] sm:$0xff]
  %v1337 = vld [vmem:[%s3 + $0x27a8] sm:$0xff]
  %v1338 = vld [vmem:[%s3 + $0x27b0] sm:$0xff]
  %v1339 = vld [vmem:[%s3 + $0x27b8] sm:$0xff]
  %v1340 = vld [vmem:[%s3 + $0x27c0] sm:$0xff]
  %v1341 = vld [vmem:[%s3 + $0x27c8] sm:$0xff]
  %v1342 = vld [vmem:[%s3 + $0x27d0] sm:$0xff]
  %v1343 = vld [vmem:[%s3 + $0x27d8] sm:$0xff]
  %v1344 = vld [vmem:[%s3 + $0x27e0] sm:$0xff]
  %v1345 = vld [vmem:[%s3 + $0x27e8] sm:$0xff]
  %v1346 = vld [vmem:[%s3 + $0x27f0] sm:$0xff]
  %v1347 = vld [vmem:[%s3 + $0x27f8] sm:$0xff]
  %v1348 = vld [vmem:[%s3 + $0x2800] sm:$0xff]
  %v1349 = vld [vmem:[%s3 + $0x2808] sm:$0xff]
  %v1350 = vld [vmem:[%s3 + $0x2810] sm:$0xff]
  %v1351 = vld [vmem:[%s3 + $0x2818] sm:$0xff]
  %v1352 = vld [vmem:[%s3 + $0x2820] sm:$0xff]
  %v1353 = vld [vmem:[%s3 + $0x2828] sm:$0xff]
  %v1354 = vld [vmem:[%s3 + $0x2830] sm:$0xff]
  %v1355 = vld [vmem:[%s3 + $0x2838] sm:$0xff]
  %v1356 = vld [vmem:[%s3 + $0x2840] sm:$0xff]
  %v1357 = vld [vmem:[%s3 + $0x2848] sm:$0xff]
  %v1358 = vld [vmem:[%s3 + $0x2850] sm:$0xff]
  %v1359 = vld [vmem:[%s3 + $0x2858] sm:$0xff]
  %v1360 = vld [vmem:[%s3 + $0x2860] sm:$0xff]
  %v1361 = vld [vmem:[%s3 + $0x2868] sm:$0xff]
  %v1362 = vld [vmem:[%s3 + $0x2870] sm:$0xff]
  %v1363 = vld [vmem:[%s3 + $0x2878] sm:$0xff]
  %v1364 = vld [vmem:[%s3 + $0x2880] sm:$0xff]
  %v1365 = vld [vmem:[%s3 + $0x2888] sm:$0xff]
  %v1366 = vld [vmem:[%s3 + $0x2890] sm:$0xff]
  %v1367 = vld [vmem:[%s3 + $0x2898] sm:$0xff]
  %v1368 = vld [vmem:[%s3 + $0x28a0] sm:$0xff]
  %v1369 = vld [vmem:[%s3 + $0x28a8] sm:$0xff]
  %v1370 = vld [vmem:[%s3 + $0x28b0] sm:$0xff]
  %v1371 = vld [vmem:[%s3 + $0x28b8] sm:$0xff]
  %v1372 = vld [vmem:[%s3 + $0x28c0] sm:$0xff]
  %v1373 = vld [vmem:[%s3 + $0x28c8] sm:$0xff]
  %v1374 = vld [vmem:[%s3 + $0x28d0] sm:$0xff]
  %v1375 = vld [vmem:[%s3 + $0x28d8] sm:$0xff]
  %v1376 = vld [vmem:[%s3 + $0x28e0] sm:$0xff]
  %v1377 = vld [vmem:[%s3 + $0x28e8] sm:$0xff]
  %v1378 = vld [vmem:[%s3 + $0x28f0] sm:$0xff]
  %v1379 = vld [vmem:[%s3 + $0x28f8] sm:$0xff]
  %v1380 = vld [vmem:[%s3 + $0x2900] sm:$0xff]
  %v1381 = vld [vmem:[%s3 + $0x2908] sm:$0xff]
  %v1382 = vld [vmem:[%s3 + $0x2910] sm:$0xff]
  %v1383 = vld [vmem:[%s3 + $0x2918] sm:$0xff]
  %v1384 = vld [vmem:[%s3 + $0x2920] sm:$0xff]
  %v1385 = vld [vmem:[%s3 + $0x2928] sm:$0xff]
  %v1386 = vld [vmem:[%s3 + $0x2930] sm:$0xff]
  %v1387 = vld [vmem:[%s3 + $0x2938] sm:$0xff]
  %v1388 = vld [vmem:[%s3 + $0x2940] sm:$0xff]
  %v1389 = vld [vmem:[%s3 + $0x2948] sm:$0xff]
  %v1390 = vld [vmem:[%s3 + $0x2950] sm:$0xff]
  %v1391 = vld [vmem:[%s3 + $0x2958] sm:$0xff]
  %v1392 = vld [vmem:[%s3 + $0x2960] sm:$0xff]
  %v1393 = vld [vmem:[%s3 + $0x2968] sm:$0xff]
  %v1394 = vld [vmem:[%s3 + $0x2970] sm:$0xff]
  %v1395 = vld [vmem:[%s3 + $0x2978] sm:$0xff]
  %v1396 = vld [vmem:[%s3 + $0x2980] sm:$0xff]
  %v1397 = vld [vmem:[%s3 + $0x2988] sm:$0xff]
  %v1398 = vld [vmem:[%s3 + $0x2990] sm:$0xff]
  %v1399 = vld [vmem:[%s3 + $0x2998] sm:$0xff]
  %v1400 = vld [vmem:[%s3 + $0x29a0] sm:$0xff]
  %v1401 = vld [vmem:[%s3 + $0x29a8] sm:$0xff]
  %v1402 = vld [vmem:[%s3 + $0x29b0] sm:$0xff]
  %v1403 = vld [vmem:[%s3 + $0x29b8] sm:$0xff]
  %v1404 = vld [vmem:[%s3 + $0x29c0] sm:$0xff]
  %v1405 = vld [vmem:[%s3 + $0x29c8] sm:$0xff]
  %v1406 = vld [vmem:[%s3 + $0x29d0] sm:$0xff]
  %v1407 = vld [vmem:[%s3 + $0x29d8] sm:$0xff]
  %v1408 = vld [vmem:[%s3 + $0x29e0] sm:$0xff]
  %v1409 = vld [vmem:[%s3 + $0x29e8] sm:$0xff]
  %v1410 = vld [vmem:[%s3 + $0x29f0] sm:$0xff]
  %v1411 = vld [vmem:[%s3 + $0x29f8] sm:$0xff]
  %v1412 = vld [vmem:[%s3 + $0x2a00] sm:$0xff]
  %v1413 = vld [vmem:[%s3 + $0x2a08] sm:$0xff]
  %v1414 = vld [vmem:[%s3 + $0x2a10] sm:$0xff]
  %v1415 = vld [vmem:[%s3 + $0x2a18] sm:$0xff]
  %v1416 = vld [vmem:[%s3 + $0x2a20] sm:$0xff]
  %v1417 = vld [vmem:[%s3 + $0x2a28] sm:$0xff]
  %v1418 = vld [vmem:[%s3 + $0x2a30] sm:$0xff]
  %v1419 = vld [vmem:[%s3 + $0x2a38] sm:$0xff]
  %v1420 = vld [vmem:[%s3 + $0x2a40] sm:$0xff]
  %v1421 = vld [vmem:[%s3 + $0x2a48] sm:$0xff]
  %v1422 = vld [vmem:[%s3 + $0x2a50] sm:$0xff]
  %v1423 = vld [vmem:[%s3 + $0x2a58] sm:$0xff]
  %v1424 = vld [vmem:[%s3 + $0x2a60] sm:$0xff]
  %v1425 = vld [vmem:[%s3 + $0x2a68] sm:$0xff]
  %v1426 = vld [vmem:[%s3 + $0x2a70] sm:$0xff]
  %v1427 = vld [vmem:[%s3 + $0x2a78] sm:$0xff]
  %v1428 = vld [vmem:[%s3 + $0x2a80] sm:$0xff]
  %v1429 = vld [vmem:[%s3 + $0x2a88] sm:$0xff]
  %v1430 = vld [vmem:[%s3 + $0x2a90] sm:$0xff]
  %v1431 = vld [vmem:[%s3 + $0x2a98] sm:$0xff]
  %v1432 = vld [vmem:[%s3 + $0x2aa0] sm:$0xff]
  %v1433 = vld [vmem:[%s3 + $0x2aa8] sm:$0xff]
  %v1434 = vld [vmem:[%s3 + $0x2ab0] sm:$0xff]
  %v1435 = vld [vmem:[%s3 + $0x2ab8] sm:$0xff]
  %v1436 = vld [vmem:[%s3 + $0x2ac0] sm:$0xff]
  %v1437 = vld [vmem:[%s3 + $0x2ac8] sm:$0xff]
  %v1438 = vld [vmem:[%s3 + $0x2ad0] sm:$0xff]
  %v1439 = vld [vmem:[%s3 + $0x2ad8] sm:$0xff]
  %v1440 = vld [vmem:[%s3 + $0x2ae0] sm:$0xff]
  %v1441 = vld [vmem:[%s3 + $0x2ae8] sm:$0xff]
  %v1442 = vld [vmem:[%s3 + $0x2af0] sm:$0xff]
  %v1443 = vld [vmem:[%s3 + $0x2af8] sm:$0xff]
  %v1444 = vld [vmem:[%s3 + $0x2b00] sm:$0xff]
  %v1445 = vld [vmem:[%s3 + $0x2b08] sm:$0xff]
  %v1446 = vld [vmem:[%s3 + $0x2b10] sm:$0xff]
  %v1447 = vld [vmem:[%s3 + $0x2b18] sm:$0xff]
  %v1448 = vld [vmem:[%s3 + $0x2b20] sm:$0xff]
  %v1449 = vld [vmem:[%s3 + $0x2b28] sm:$0xff]
  %v1450 = vld [vmem:[%s3 + $0x2b30] sm:$0xff]
  %v1451 = vld [vmem:[%s3 + $0x2b38] sm:$0xff]
  %v1452 = vld [vmem:[%s3 + $0x2b40] sm:$0xff]
  %v1453 = vld [vmem:[%s3 + $0x2b48] sm:$0xff]
  %v1454 = vld [vmem:[%s3 + $0x2b50] sm:$0xff]
  %v1455 = vld [vmem:[%s3 + $0x2b58] sm:$0xff]
  %v1456 = vld [vmem:[%s3 + $0x2b60] sm:$0xff]
  %v1457 = vld [vmem:[%s3 + $0x2b68] sm:$0xff]
  %v1458 = vld [vmem:[%s3 + $0x2b70] sm:$0xff]
  %v1459 = vld [vmem:[%s3 + $0x2b78] sm:$0xff]
  %v1460 = vld [vmem:[%s3 + $0x2b80] sm:$0xff]
  %v1461 = vld [vmem:[%s3 + $0x2b88] sm:$0xff]
  %v1462 = vld [vmem:[%s3 + $0x2b90] sm:$0xff]
  %v1463 = vld [vmem:[%s3 + $0x2b98] sm:$0xff]
  %v1464 = vld [vmem:[%s3 + $0x2ba0] sm:$0xff]
  %v1465 = vld [vmem:[%s3 + $0x2ba8] sm:$0xff]
  %v1466 = vld [vmem:[%s3 + $0x2bb0] sm:$0xff]
  %v1467 = vld [vmem:[%s3 + $0x2bb8] sm:$0xff]
  %v1468 = vld [vmem:[%s3 + $0x2bc0] sm:$0xff]
  %v1469 = vld [vmem:[%s3 + $0x2bc8] sm:$0xff]
  %v1470 = vld [vmem:[%s3 + $0x2bd0] sm:$0xff]
  %v1471 = vld [vmem:[%s3 + $0x2bd8] sm:$0xff]
  %v1472 = vld [vmem:[%s3 + $0x2be0] sm:$0xff]
  %v1473 = vld [vmem:[%s3 + $0x2be8] sm:$0xff]
  %v1474 = vld [vmem:[%s3 + $0x2bf0] sm:$0xff]
  %v1475 = vld [vmem:[%s3 + $0x2bf8] sm:$0xff]
  %v1476 = vld [vmem:[%s3 + $0x2c00] sm:$0xff]
  %v1477 = vld [vmem:[%s3 + $0x2c08] sm:$0xff]
  %v1478 = vld [vmem:[%s3 + $0x2c10] sm:$0xff]
  %v1479 = vld [vmem:[%s3 + $0x2c18] sm:$0xff]
  %v1480 = vld [vmem:[%s3 + $0x2c20] sm:$0xff]
  %v1481 = vld [vmem:[%s3 + $0x2c28] sm:$0xff]
  %v1482 = vld [vmem:[%s3 + $0x2c30] sm:$0xff]
  %v1483 = vld [vmem:[%s3 + $0x2c38] sm:$0xff]
  %v1484 = vld [vmem:[%s3 + $0x2c40] sm:$0xff]
  %v1485 = vld [vmem:[%s3 + $0x2c48] sm:$0xff]
  %v1486 = vld [vmem:[%s3 + $0x2c50] sm:$0xff]
  %v1487 = vld [vmem:[%s3 + $0x2c58] sm:$0xff]
  %v1488 = vld [vmem:[%s3 + $0x2c60] sm:$0xff]
  %v1489 = vld [vmem:[%s3 + $0x2c68] sm:$0xff]
  %v1490 = vld [vmem:[%s3 + $0x2c70] sm:$0xff]
  %v1491 = vld [vmem:[%s3 + $0x2c78] sm:$0xff]
  %v1492 = vld [vmem:[%s3 + $0x2c80] sm:$0xff]
  %v1493 = vld [vmem:[%s3 + $0x2c88] sm:$0xff]
  %v1494 = vld [vmem:[%s3 + $0x2c90] sm:$0xff]
  %v1495 = vld [vmem:[%s3 + $0x2c98] sm:$0xff]
  %v1496 = vld [vmem:[%s3 + $0x2ca0] sm:$0xff]
  %v1497 = vld [vmem:[%s3 + $0x2ca8] sm:$0xff]
  %v1498 = vld [vmem:[%s3 + $0x2cb0] sm:$0xff]
  %v1499 = vld [vmem:[%s3 + $0x2cb8] sm:$0xff]
  %v1500 = vld [vmem:[%s3 + $0x2cc0] sm:$0xff]
  %v1501 = vld [vmem:[%s3 + $0x2cc8] sm:$0xff]
  %v1502 = vld [vmem:[%s3 + $0x2cd0] sm:$0xff]
  %v1503 = vld [vmem:[%s3 + $0x2cd8] sm:$0xff]
  %v1504 = vld [vmem:[%s3 + $0x2ce0] sm:$0xff]
  %v1505 = vld [vmem:[%s3 + $0x2ce8] sm:$0xff]
  %v1506 = vld [vmem:[%s3 + $0x2cf0] sm:$0xff]
  %v1507 = vld [vmem:[%s3 + $0x2cf8] sm:$0xff]
  %v1508 = vld [vmem:[%s3 + $0x2d00] sm:$0xff]
  %v1509 = vld [vmem:[%s3 + $0x2d08] sm:$0xff]
  %v1510 = vld [vmem:[%s3 + $0x2d10] sm:$0xff]
  %v1511 = vld [vmem:[%s3 + $0x2d18] sm:$0xff]
  %v1512 = vld [vmem:[%s3 + $0x2d20] sm:$0xff]
  %v1513 = vld [vmem:[%s3 + $0x2d28] sm:$0xff]
  %v1514 = vld [vmem:[%s3 + $0x2d30] sm:$0xff]
  %v1515 = vld [vmem:[%s3 + $0x2d38] sm:$0xff]
  %v1516 = vld [vmem:[%s3 + $0x2d40] sm:$0xff]
  %v1517 = vld [vmem:[%s3 + $0x2d48] sm:$0xff]
  %v1518 = vld [vmem:[%s3 + $0x2d50] sm:$0xff]
  %v1519 = vld [vmem:[%s3 + $0x2d58] sm:$0xff]
  %v1520 = vld [vmem:[%s3 + $0x2d60] sm:$0xff]
  %v1521 = vld [vmem:[%s3 + $0x2d68] sm:$0xff]
  %v1522 = vld [vmem:[%s3 + $0x2d70] sm:$0xff]
  %v1523 = vld [vmem:[%s3 + $0x2d78] sm:$0xff]
  %v1524 = vld [vmem:[%s3 + $0x2d80] sm:$0xff]
  %v1525 = vld [vmem:[%s3 + $0x2d88] sm:$0xff]
  %v1526 = vld [vmem:[%s3 + $0x2d90] sm:$0xff]
  %v1527 = vld [vmem:[%s3 + $0x2d98] sm:$0xff]
  %v1528 = vld [vmem:[%s3 + $0x2da0] sm:$0xff]
  %v1529 = vld [vmem:[%s3 + $0x2da8] sm:$0xff]
  %v1530 = vld [vmem:[%s3 + $0x2db0] sm:$0xff]
  %v1531 = vld [vmem:[%s3 + $0x2db8] sm:$0xff]
  %v1532 = vld [vmem:[%s3 + $0x2dc0] sm:$0xff]
  %v1533 = vld [vmem:[%s3 + $0x2dc8] sm:$0xff]
  %v1534 = vld [vmem:[%s3 + $0x2dd0] sm:$0xff]
  %v1535 = vld [vmem:[%s3 + $0x2dd8] sm:$0xff]
  %v1536 = vld [vmem:[%s3 + $0x2de0] sm:$0xff]
  %v1537 = vld [vmem:[%s3 + $0x2de8] sm:$0xff]
  %v1538 = vld [vmem:[%s3 + $0x2df0] sm:$0xff]
  %v1539 = vld [vmem:[%s3 + $0x2df8] sm:$0xff]
  %v1540 = vld [vmem:[%s3 + $0x2e00] sm:$0xff]
  %v1541 = vld [vmem:[%s3 + $0x2e08] sm:$0xff]
  %v1542 = vld [vmem:[%s3 + $0x2e10] sm:$0xff]
  %v1543 = vld [vmem:[%s3 + $0x2e18] sm:$0xff]
  %v1544 = vld [vmem:[%s3 + $0x2e20] sm:$0xff]
  %v1545 = vld [vmem:[%s3 + $0x2e28] sm:$0xff]
  %v1546 = vld [vmem:[%s3 + $0x2e30] sm:$0xff]
  %v1547 = vld [vmem:[%s3 + $0x2e38] sm:$0xff]
  %v1548 = vld [vmem:[%s3 + $0x2e40] sm:$0xff]
  %v1549 = vld [vmem:[%s3 + $0x2e48] sm:$0xff]
  %v1550 = vld [vmem:[%s3 + $0x2e50] sm:$0xff]
  %v1551 = vld [vmem:[%s3 + $0x2e58] sm:$0xff]
  %v1552 = vld [vmem:[%s3 + $0x2e60] sm:$0xff]
  %v1553 = vld [vmem:[%s3 + $0x2e68] sm:$0xff]
  %v1554 = vld [vmem:[%s3 + $0x2e70] sm:$0xff]
  %v1555 = vld [vmem:[%s3 + $0x2e78] sm:$0xff]
  %v1556 = vld [vmem:[%s3 + $0x2e80] sm:$0xff]
  %v1557 = vld [vmem:[%s3 + $0x2e88] sm:$0xff]
  %v1558 = vld [vmem:[%s3 + $0x2e90] sm:$0xff]
  %v1559 = vld [vmem:[%s3 + $0x2e98] sm:$0xff]
  %v1560 = vld [vmem:[%s3 + $0x2ea0] sm:$0xff]
  %v1561 = vld [vmem:[%s3 + $0x2ea8] sm:$0xff]
  %v1562 = vld [vmem:[%s3 + $0x2eb0] sm:$0xff]
  %v1563 = vld [vmem:[%s3 + $0x2eb8] sm:$0xff]
  %v1564 = vld [vmem:[%s3 + $0x2ec0] sm:$0xff]
  %v1565 = vld [vmem:[%s3 + $0x2ec8] sm:$0xff]
  %v1566 = vld [vmem:[%s3 + $0x2ed0] sm:$0xff]
  %v1567 = vld [vmem:[%s3 + $0x2ed8] sm:$0xff]
  %v1568 = vld [vmem:[%s3 + $0x2ee0] sm:$0xff]
  %v1569 = vld [vmem:[%s3 + $0x2ee8] sm:$0xff]
  %v1570 = vld [vmem:[%s3 + $0x2ef0] sm:$0xff]
  %v1571 = vld [vmem:[%s3 + $0x2ef8] sm:$0xff]
  %v1572 = vld [vmem:[%s3 + $0x2f00] sm:$0xff]
  %v1573 = vld [vmem:[%s3 + $0x2f08] sm:$0xff]
  %v1574 = vld [vmem:[%s3 + $0x2f10] sm:$0xff]
  %v1575 = vld [vmem:[%s3 + $0x2f18] sm:$0xff]
  %v1576 = vld [vmem:[%s3 + $0x2f20] sm:$0xff]
  %v1577 = vld [vmem:[%s3 + $0x2f28] sm:$0xff]
  %v1578 = vld [vmem:[%s3 + $0x2f30] sm:$0xff]
  %v1579 = vld [vmem:[%s3 + $0x2f38] sm:$0xff]
  %v1580 = vld [vmem:[%s3 + $0x2f40] sm:$0xff]
  %v1581 = vld [vmem:[%s3 + $0x2f48] sm:$0xff]
  %v1582 = vld [vmem:[%s3 + $0x2f50] sm:$0xff]
  %v1583 = vld [vmem:[%s3 + $0x2f58] sm:$0xff]
  %v1584 = vld [vmem:[%s3 + $0x2f60] sm:$0xff]
  %v1585 = vld [vmem:[%s3 + $0x2f68] sm:$0xff]
  %v1586 = vld [vmem:[%s3 + $0x2f70] sm:$0xff]
  %v1587 = vld [vmem:[%s3 + $0x2f78] sm:$0xff]
  %v1588 = vld [vmem:[%s3 + $0x2f80] sm:$0xff]
  %v1589 = vld [vmem:[%s3 + $0x2f88] sm:$0xff]
  %v1590 = vld [vmem:[%s3 + $0x2f90] sm:$0xff]
  %v1591 = vld [vmem:[%s3 + $0x2f98] sm:$0xff]
  %v1592 = vld [vmem:[%s3 + $0x2fa0] sm:$0xff]
  %v1593 = vld [vmem:[%s3 + $0x2fa8] sm:$0xff]
  %v1594 = vld [vmem:[%s3 + $0x2fb0] sm:$0xff]
  %v1595 = vld [vmem:[%s3 + $0x2fb8] sm:$0xff]
  %v1596 = vld [vmem:[%s3 + $0x2fc0] sm:$0xff]
  %v1597 = vld [vmem:[%s3 + $0x2fc8] sm:$0xff]
  %v1598 = vld [vmem:[%s3 + $0x2fd0] sm:$0xff]
  %v1599 = vld [vmem:[%s3 + $0x2fd8] sm:$0xff]
  %v1600 = vld [vmem:[%s3 + $0x2fe0] sm:$0xff]
  %v1601 = vld [vmem:[%s3 + $0x2fe8] sm:$0xff]
  %v1602 = vld [vmem:[%s3 + $0x2ff0] sm:$0xff]
  %v1603 = vld [vmem:[%s3 + $0x2ff8] sm:$0xff]
  %v1604 = vld [vmem:[%s4] sm:$0xf]
  %v1608 = vlaneseq
  %v1609 = vshrl.u32 %v1608, 7
  %v1610 = vsub.s32 0, %v1609
  %v1611 = vrot.slane %v65, %v1610
  %v1612 = vlaneseq
  %v1613 = vshrl.u32 %v1612, 7
  %v1614 = vsub.s32 1, %v1613
  %v1615 = vrot.slane %v65, %v1614
  %v1616 = vlaneseq
  %v1617 = vshrl.u32 %v1616, 7
  %v1618 = vsub.s32 2, %v1617
  %v1619 = vrot.slane %v65, %v1618
  %v1620 = vlaneseq
  %v1621 = vshrl.u32 %v1620, 7
  %v1622 = vsub.s32 3, %v1621
  %v1623 = vrot.slane %v65, %v1622
  %v1624 = vlaneseq
  %v1625 = vshrl.u32 %v1624, 7
  %v1626 = vsub.s32 4, %v1625
  %v1627 = vrot.slane %v65, %v1626
  %v1628 = vlaneseq
  %v1629 = vshrl.u32 %v1628, 7
  %v1630 = vsub.s32 5, %v1629
  %v1631 = vrot.slane %v65, %v1630
  %v1632 = vlaneseq
  %v1633 = vshrl.u32 %v1632, 7
  %v1634 = vsub.s32 6, %v1633
  %v1635 = vrot.slane %v65, %v1634
  %v1636 = vlaneseq
  %v1637 = vshrl.u32 %v1636, 7
  %v1638 = vsub.s32 7, %v1637
  %v1639 = vrot.slane %v65, %v1638
  %v1640 = vlaneseq
  %v1641 = vshrl.u32 %v1640, 7
  %v1642 = vsub.s32 0, %v1641
  %v1643 = vrot.slane %v66, %v1642
  %v1644 = vlaneseq
  %v1645 = vshrl.u32 %v1644, 7
  %v1646 = vsub.s32 1, %v1645
  %v1647 = vrot.slane %v66, %v1646
  %v1648 = vlaneseq
  %v1649 = vshrl.u32 %v1648, 7
  %v1650 = vsub.s32 2, %v1649
  %v1651 = vrot.slane %v66, %v1650
  %v1652 = vlaneseq
  %v1653 = vshrl.u32 %v1652, 7
  %v1654 = vsub.s32 3, %v1653
  %v1655 = vrot.slane %v66, %v1654
  %v1656 = vlaneseq
  %v1657 = vshrl.u32 %v1656, 7
  %v1658 = vsub.s32 4, %v1657
  %v1659 = vrot.slane %v66, %v1658
  %v1660 = vlaneseq
  %v1661 = vshrl.u32 %v1660, 7
  %v1662 = vsub.s32 5, %v1661
  %v1663 = vrot.slane %v66, %v1662
  %v1664 = vlaneseq
  %v1665 = vshrl.u32 %v1664, 7
  %v1666 = vsub.s32 6, %v1665
  %v1667 = vrot.slane %v66, %v1666
  %v1668 = vlaneseq
  %v1669 = vshrl.u32 %v1668, 7
  %v1670 = vsub.s32 7, %v1669
  %v1671 = vrot.slane %v66, %v1670
  %v1672 = vlaneseq
  %v1673 = vshrl.u32 %v1672, 7
  %v1674 = vsub.s32 0, %v1673
  %v1675 = vrot.slane %v67, %v1674
  %v1676 = vlaneseq
  %v1677 = vshrl.u32 %v1676, 7
  %v1678 = vsub.s32 1, %v1677
  %v1679 = vrot.slane %v67, %v1678
  %v1680 = vlaneseq
  %v1681 = vshrl.u32 %v1680, 7
  %v1682 = vsub.s32 2, %v1681
  %v1683 = vrot.slane %v67, %v1682
  %v1684 = vlaneseq
  %v1685 = vshrl.u32 %v1684, 7
  %v1686 = vsub.s32 3, %v1685
  %v1687 = vrot.slane %v67, %v1686
  %v1688 = vlaneseq
  %v1689 = vshrl.u32 %v1688, 7
  %v1690 = vsub.s32 4, %v1689
  %v1691 = vrot.slane %v67, %v1690
  %v1692 = vlaneseq
  %v1693 = vshrl.u32 %v1692, 7
  %v1694 = vsub.s32 5, %v1693
  %v1695 = vrot.slane %v67, %v1694
  %v1696 = vlaneseq
  %v1697 = vshrl.u32 %v1696, 7
  %v1698 = vsub.s32 6, %v1697
  %v1699 = vrot.slane %v67, %v1698
  %v1700 = vlaneseq
  %v1701 = vshrl.u32 %v1700, 7
  %v1702 = vsub.s32 7, %v1701
  %v1703 = vrot.slane %v67, %v1702
  %v1729 = vlaneseq
  %v1730 = vshrl.u32 %v1729, 7
  %v1731 = vsub.s32 0, %v1730
  %v1732 = vrot.slane %v1604, %v1731
  %v1733 = vlaneseq
  %v1734 = vshrl.u32 %v1733, 7
  %v1735 = vsub.s32 1, %v1734
  %v1736 = vrot.slane %v1604, %v1735
  %v1737 = vlaneseq
  %v1738 = vshrl.u32 %v1737, 7
  %v1739 = vsub.s32 2, %v1738
  %v1740 = vrot.slane %v1604, %v1739
  %v1741 = vlaneseq
  %v1742 = vshrl.u32 %v1741, 7
  %v1743 = vsub.s32 3, %v1742
  %v1744 = vrot.slane %v1604, %v1743
  %1749 = vmatprep.subr.mxu0 %v69
  %1750 = vmatpush1.msra.mxu0 %v68
  %1751 = vmatprep.subr.mxu0 %v73
  %1752 = vmatpush1.msra.mxu0 %v72
  %1753 = vmatprep.subr.mxu0 %v77
  %1754 = vmatpush1.msra.mxu0 %v76
  %1755 = vmatprep.subr.mxu0 %v81
  %1756 = vmatpush1.msra.mxu0 %v80
  %1757 = vmatprep.subr.mxu0 %v85
  %1758 = vmatpush1.msra.mxu0 %v84
  %1759 = vmatprep.subr.mxu0 %v89
  %1760 = vmatpush1.msra.mxu0 %v88
  %1761 = vmatprep.subr.mxu0 %v93
  %1762 = vmatpush1.msra.mxu0 %v92
  %1763 = vmatprep.subr.mxu0 %v97
  %1764 = vmatpush1.msra.mxu0 %v96
  %1765 = vmatprep.subr.mxu0 %v101
  %1766 = vmatpush1.msra.mxu0 %v100
  %1767 = vmatprep.subr.mxu0 %v105
  %1768 = vmatpush1.msra.mxu0 %v104
  %1769 = vmatprep.subr.mxu0 %v109
  %1770 = vmatpush1.msra.mxu0 %v108
  %1771 = vmatprep.subr.mxu0 %v113
  %1772 = vmatpush1.msra.mxu0 %v112
  %1773 = vmatprep.subr.mxu0 %v117
  %1774 = vmatpush1.msra.mxu0 %v116
  %1775 = vmatprep.subr.mxu0 %v121
  %1776 = vmatpush1.msra.mxu0 %v120
  %1777 = vmatprep.subr.mxu0 %v125
  %1778 = vmatpush1.msra.mxu0 %v124
  %1779 = vmatprep.subr.mxu0 %v129
  %1780 = vmatpush1.msra.mxu0 %v128
  %1781 = vmatprep.subr.mxu0 %v133
  %1782 = vmatpush1.msra.mxu0 %v132
  %1783 = vmatprep.subr.mxu0 %v137
  %1784 = vmatpush1.msra.mxu0 %v136
  %1785 = vmatprep.subr.mxu0 %v141
  %1786 = vmatpush1.msra.mxu0 %v140
  %1787 = vmatprep.subr.mxu0 %v145
  %1788 = vmatpush1.msra.mxu0 %v144
  %1789 = vmatprep.subr.mxu0 %v149
  %1790 = vmatpush1.msra.mxu0 %v148
  %1791 = vmatprep.subr.mxu0 %v153
  %1792 = vmatpush1.msra.mxu0 %v152
  %1793 = vmatprep.subr.mxu0 %v157
  %1794 = vmatpush1.msra.mxu0 %v156
  %1795 = vmatprep.subr.mxu0 %v161
  %1796 = vmatpush1.msra.mxu0 %v160
  %1797 = vmatprep.subr.mxu0 %v165
  %1798 = vmatpush1.msra.mxu0 %v164
  %1799 = vmatprep.subr.mxu0 %v169
  %1800 = vmatpush1.msra.mxu0 %v168
  %1801 = vmatprep.subr.mxu0 %v173
  %1802 = vmatpush1.msra.mxu0 %v172
  %1803 = vmatprep.subr.mxu0 %v177
  %1804 = vmatpush1.msra.mxu0 %v176
  %1805 = vmatprep.subr.mxu0 %v181
  %1806 = vmatpush1.msra.mxu0 %v180
  %1807 = vmatprep.subr.mxu0 %v185
  %1808 = vmatpush1.msra.mxu0 %v184
  %1809 = vmatprep.subr.mxu0 %v189
  %1810 = vmatpush1.msra.mxu0 %v188
  %1811 = vmatprep.subr.mxu0 %v193
  %1812 = vmatpush1.msra.mxu0 %v192
  %1813 = vmatprep.mubr.f32.mxu0 %v1615
  %1814 = vmatmul.mubr.f32.gmra.mrb[0].mxu0 %v1611
  %v1815 = vpop.f32.mrb[0].mxu0
  %v1816 = vadd.f32 %v1732, %v1815
  %v1817 = vpop.f32.mrb[0].mxu0
  %v1818 = vadd.f32 %v1736, %v1817
  %1819 = vdwg.mxu0
  %1820 = vmatprep.subr.mxu0 %v197
  %1821 = vmatpush1.msra.mxu0 %v196
  %1822 = vmatprep.subr.mxu0 %v201
  %1823 = vmatpush1.msra.mxu0 %v200
  %1824 = vmatprep.subr.mxu0 %v205
  %1825 = vmatpush1.msra.mxu0 %v204
  %1826 = vmatprep.subr.mxu0 %v209
  %1827 = vmatpush1.msra.mxu0 %v208
  %1828 = vmatprep.subr.mxu0 %v213
  %1829 = vmatpush1.msra.mxu0 %v212
  %1830 = vmatprep.subr.mxu0 %v217
  %1831 = vmatpush1.msra.mxu0 %v216
  %1832 = vmatprep.subr.mxu0 %v221
  %1833 = vmatpush1.msra.mxu0 %v220
  %1834 = vmatprep.subr.mxu0 %v225
  %1835 = vmatpush1.msra.mxu0 %v224
  %1836 = vmatprep.subr.mxu0 %v229
  %1837 = vmatpush1.msra.mxu0 %v228
  %1838 = vmatprep.subr.mxu0 %v233
  %1839 = vmatpush1.msra.mxu0 %v232
  %1840 = vmatprep.subr.mxu0 %v237
  %1841 = vmatpush1.msra.mxu0 %v236
  %1842 = vmatprep.subr.mxu0 %v241
  %1843 = vmatpush1.msra.mxu0 %v240
  %1844 = vmatprep.subr.mxu0 %v245
  %1845 = vmatpush1.msra.mxu0 %v244
  %1846 = vmatprep.subr.mxu0 %v249
  %1847 = vmatpush1.msra.mxu0 %v248
  %1848 = vmatprep.subr.mxu0 %v253
  %1849 = vmatpush1.msra.mxu0 %v252
  %1850 = vmatprep.subr.mxu0 %v257
  %1851 = vmatpush1.msra.mxu0 %v256
  %1852 = vmatprep.subr.mxu0 %v261
  %1853 = vmatpush1.msra.mxu0 %v260
  %1854 = vmatprep.subr.mxu0 %v265
  %1855 = vmatpush1.msra.mxu0 %v264
  %1856 = vmatprep.subr.mxu0 %v269
  %1857 = vmatpush1.msra.mxu0 %v268
  %1858 = vmatprep.subr.mxu0 %v273
  %1859 = vmatpush1.msra.mxu0 %v272
  %1860 = vmatprep.subr.mxu0 %v277
  %1861 = vmatpush1.msra.mxu0 %v276
  %1862 = vmatprep.subr.mxu0 %v281
  %1863 = vmatpush1.msra.mxu0 %v280
  %1864 = vmatprep.subr.mxu0 %v285
  %1865 = vmatpush1.msra.mxu0 %v284
  %1866 = vmatprep.subr.mxu0 %v289
  %1867 = vmatpush1.msra.mxu0 %v288
  %1868 = vmatprep.subr.mxu0 %v293
  %1869 = vmatpush1.msra.mxu0 %v292
  %1870 = vmatprep.subr.mxu0 %v297
  %1871 = vmatpush1.msra.mxu0 %v296
  %1872 = vmatprep.subr.mxu0 %v301
  %1873 = vmatpush1.msra.mxu0 %v300
  %1874 = vmatprep.subr.mxu0 %v305
  %1875 = vmatpush1.msra.mxu0 %v304
  %1876 = vmatprep.subr.mxu0 %v309
  %1877 = vmatpush1.msra.mxu0 %v308
  %1878 = vmatprep.subr.mxu0 %v313
  %1879 = vmatpush1.msra.mxu0 %v312
  %1880 = vmatprep.subr.mxu0 %v317
  %1881 = vmatpush1.msra.mxu0 %v316
  %1882 = vmatprep.subr.mxu0 %v321
  %1883 = vmatpush1.msra.mxu0 %v320
  %1884 = vmatprep.mubr.f32.mxu0 %v1623
  %1885 = vmatmul.mubr.f32.gmra.mrb[0].mxu0 %v1619
  %v1886 = vpop.f32.mrb[0].mxu0
  %v1887 = vadd.f32 %v1816, %v1886
  %v1888 = vpop.f32.mrb[0].mxu0
  %v1889 = vadd.f32 %v1818, %v1888
  %1890 = vdwg.mxu0
  %1891 = vmatprep.subr.mxu0 %v325
  %1892 = vmatpush1.msra.mxu0 %v324
  %1893 = vmatprep.subr.mxu0 %v329
  %1894 = vmatpush1.msra.mxu0 %v328
  %1895 = vmatprep.subr.mxu0 %v333
  %1896 = vmatpush1.msra.mxu0 %v332
  %1897 = vmatprep.subr.mxu0 %v337
  %1898 = vmatpush1.msra.mxu0 %v336
  %1899 = vmatprep.subr.mxu0 %v341
  %1900 = vmatpush1.msra.mxu0 %v340
  %1901 = vmatprep.subr.mxu0 %v345
  %1902 = vmatpush1.msra.mxu0 %v344
  %1903 = vmatprep.subr.mxu0 %v349
  %1904 = vmatpush1.msra.mxu0 %v348
  %1905 = vmatprep.subr.mxu0 %v353
  %1906 = vmatpush1.msra.mxu0 %v352
  %1907 = vmatprep.subr.mxu0 %v357
  %1908 = vmatpush1.msra.mxu0 %v356
  %1909 = vmatprep.subr.mxu0 %v361
  %1910 = vmatpush1.msra.mxu0 %v360
  %1911 = vmatprep.subr.mxu0 %v365
  %1912 = vmatpush1.msra.mxu0 %v364
  %1913 = vmatprep.subr.mxu0 %v369
  %1914 = vmatpush1.msra.mxu0 %v368
  %1915 = vmatprep.subr.mxu0 %v373
  %1916 = vmatpush1.msra.mxu0 %v372
  %1917 = vmatprep.subr.mxu0 %v377
  %1918 = vmatpush1.msra.mxu0 %v376
  %1919 = vmatprep.subr.mxu0 %v381
  %1920 = vmatpush1.msra.mxu0 %v380
  %1921 = vmatprep.subr.mxu0 %v385
  %1922 = vmatpush1.msra.mxu0 %v384
  %1923 = vmatprep.subr.mxu0 %v389
  %1924 = vmatpush1.msra.mxu0 %v388
  %1925 = vmatprep.subr.mxu0 %v393
  %1926 = vmatpush1.msra.mxu0 %v392
  %1927 = vmatprep.subr.mxu0 %v397
  %1928 = vmatpush1.msra.mxu0 %v396
  %1929 = vmatprep.subr.mxu0 %v401
  %1930 = vmatpush1.msra.mxu0 %v400
  %1931 = vmatprep.subr.mxu0 %v405
  %1932 = vmatpush1.msra.mxu0 %v404
  %1933 = vmatprep.subr.mxu0 %v409
  %1934 = vmatpush1.msra.mxu0 %v408
  %1935 = vmatprep.subr.mxu0 %v413
  %1936 = vmatpush1.msra.mxu0 %v412
  %1937 = vmatprep.subr.mxu0 %v417
  %1938 = vmatpush1.msra.mxu0 %v416
  %1939 = vmatprep.subr.mxu0 %v421
  %1940 = vmatpush1.msra.mxu0 %v420
  %1941 = vmatprep.subr.mxu0 %v425
  %1942 = vmatpush1.msra.mxu0 %v424
  %1943 = vmatprep.subr.mxu0 %v429
  %1944 = vmatpush1.msra.mxu0 %v428
  %1945 = vmatprep.subr.mxu0 %v433
  %1946 = vmatpush1.msra.mxu0 %v432
  %1947 = vmatprep.subr.mxu0 %v437
  %1948 = vmatpush1.msra.mxu0 %v436
  %1949 = vmatprep.subr.mxu0 %v441
  %1950 = vmatpush1.msra.mxu0 %v440
  %1951 = vmatprep.subr.mxu0 %v445
  %1952 = vmatpush1.msra.mxu0 %v444
  %1953 = vmatprep.subr.mxu0 %v449
  %1954 = vmatpush1.msra.mxu0 %v448
  %1955 = vmatprep.mubr.f32.mxu0 %v1631
  %1956 = vmatmul.mubr.f32.gmra.mrb[0].mxu0 %v1627
  %v1957 = vpop.f32.mrb[0].mxu0
  %v1958 = vadd.f32 %v1887, %v1957
  %v1959 = vpop.f32.mrb[0].mxu0
  %v1960 = vadd.f32 %v1889, %v1959
  %1961 = vdwg.mxu0
  %1962 = vmatprep.subr.mxu0 %v453
  %1963 = vmatpush1.msra.mxu0 %v452
  %1964 = vmatprep.subr.mxu0 %v457
  %1965 = vmatpush1.msra.mxu0 %v456
  %1966 = vmatprep.subr.mxu0 %v461
  %1967 = vmatpush1.msra.mxu0 %v460
  %1968 = vmatprep.subr.mxu0 %v465
  %1969 = vmatpush1.msra.mxu0 %v464
  %1970 = vmatprep.subr.mxu0 %v469
  %1971 = vmatpush1.msra.mxu0 %v468
  %1972 = vmatprep.subr.mxu0 %v473
  %1973 = vmatpush1.msra.mxu0 %v472
  %1974 = vmatprep.subr.mxu0 %v477
  %1975 = vmatpush1.msra.mxu0 %v476
  %1976 = vmatprep.subr.mxu0 %v481
  %1977 = vmatpush1.msra.mxu0 %v480
  %1978 = vmatprep.subr.mxu0 %v485
  %1979 = vmatpush1.msra.mxu0 %v484
  %1980 = vmatprep.subr.mxu0 %v489
  %1981 = vmatpush1.msra.mxu0 %v488
  %1982 = vmatprep.subr.mxu0 %v493
  %1983 = vmatpush1.msra.mxu0 %v492
  %1984 = vmatprep.subr.mxu0 %v497
  %1985 = vmatpush1.msra.mxu0 %v496
  %1986 = vmatprep.subr.mxu0 %v501
  %1987 = vmatpush1.msra.mxu0 %v500
  %1988 = vmatprep.subr.mxu0 %v505
  %1989 = vmatpush1.msra.mxu0 %v504
  %1990 = vmatprep.subr.mxu0 %v509
  %1991 = vmatpush1.msra.mxu0 %v508
  %1992 = vmatprep.subr.mxu0 %v513
  %1993 = vmatpush1.msra.mxu0 %v512
  %1994 = vmatprep.subr.mxu0 %v517
  %1995 = vmatpush1.msra.mxu0 %v516
  %1996 = vmatprep.subr.mxu0 %v521
  %1997 = vmatpush1.msra.mxu0 %v520
  %1998 = vmatprep.subr.mxu0 %v525
  %1999 = vmatpush1.msra.mxu0 %v524
  %2000 = vmatprep.subr.mxu0 %v529
  %2001 = vmatpush1.msra.mxu0 %v528
  %2002 = vmatprep.subr.mxu0 %v533
  %2003 = vmatpush1.msra.mxu0 %v532
  %2004 = vmatprep.subr.mxu0 %v537
  %2005 = vmatpush1.msra.mxu0 %v536
  %2006 = vmatprep.subr.mxu0 %v541
  %2007 = vmatpush1.msra.mxu0 %v540
  %2008 = vmatprep.subr.mxu0 %v545
  %2009 = vmatpush1.msra.mxu0 %v544
  %2010 = vmatprep.subr.mxu0 %v549
  %2011 = vmatpush1.msra.mxu0 %v548
  %2012 = vmatprep.subr.mxu0 %v553
  %2013 = vmatpush1.msra.mxu0 %v552
  %2014 = vmatprep.subr.mxu0 %v557
  %2015 = vmatpush1.msra.mxu0 %v556
  %2016 = vmatprep.subr.mxu0 %v561
  %2017 = vmatpush1.msra.mxu0 %v560
  %2018 = vmatprep.subr.mxu0 %v565
  %2019 = vmatpush1.msra.mxu0 %v564
  %2020 = vmatprep.subr.mxu0 %v569
  %2021 = vmatpush1.msra.mxu0 %v568
  %2022 = vmatprep.subr.mxu0 %v573
  %2023 = vmatpush1.msra.mxu0 %v572
  %2024 = vmatprep.subr.mxu0 %v577
  %2025 = vmatpush1.msra.mxu0 %v576
  %2026 = vmatprep.mubr.f32.mxu0 %v1639
  %2027 = vmatmul.mubr.f32.gmra.mrb[0].mxu0 %v1635
  %v2028 = vpop.f32.mrb[0].mxu0
  %v2029 = vadd.f32 %v1958, %v2028
  %v2030 = vpop.f32.mrb[0].mxu0
  %v2031 = vadd.f32 %v1960, %v2030
  %2032 = vdwg.mxu0
  %2033 = vmatprep.subr.mxu0 %v581
  %2034 = vmatpush1.msra.mxu0 %v580
  %2035 = vmatprep.subr.mxu0 %v585
  %2036 = vmatpush1.msra.mxu0 %v584
  %2037 = vmatprep.subr.mxu0 %v589
  %2038 = vmatpush1.msra.mxu0 %v588
  %2039 = vmatprep.subr.mxu0 %v593
  %2040 = vmatpush1.msra.mxu0 %v592
  %2041 = vmatprep.subr.mxu0 %v597
  %2042 = vmatpush1.msra.mxu0 %v596
  %2043 = vmatprep.subr.mxu0 %v601
  %2044 = vmatpush1.msra.mxu0 %v600
  %2045 = vmatprep.subr.mxu0 %v605
  %2046 = vmatpush1.msra.mxu0 %v604
  %2047 = vmatprep.subr.mxu0 %v609
  %2048 = vmatpush1.msra.mxu0 %v608
  %2049 = vmatprep.subr.mxu0 %v613
  %2050 = vmatpush1.msra.mxu0 %v612
  %2051 = vmatprep.subr.mxu0 %v617
  %2052 = vmatpush1.msra.mxu0 %v616
  %2053 = vmatprep.subr.mxu0 %v621
  %2054 = vmatpush1.msra.mxu0 %v620
  %2055 = vmatprep.subr.mxu0 %v625
  %2056 = vmatpush1.msra.mxu0 %v624
  %2057 = vmatprep.subr.mxu0 %v629
  %2058 = vmatpush1.msra.mxu0 %v628
  %2059 = vmatprep.subr.mxu0 %v633
  %2060 = vmatpush1.msra.mxu0 %v632
  %2061 = vmatprep.subr.mxu0 %v637
  %2062 = vmatpush1.msra.mxu0 %v636
  %2063 = vmatprep.subr.mxu0 %v641
  %2064 = vmatpush1.msra.mxu0 %v640
  %2065 = vmatprep.subr.mxu0 %v645
  %2066 = vmatpush1.msra.mxu0 %v644
  %2067 = vmatprep.subr.mxu0 %v649
  %2068 = vmatpush1.msra.mxu0 %v648
  %2069 = vmatprep.subr.mxu0 %v653
  %2070 = vmatpush1.msra.mxu0 %v652
  %2071 = vmatprep.subr.mxu0 %v657
  %2072 = vmatpush1.msra.mxu0 %v656
  %2073 = vmatprep.subr.mxu0 %v661
  %2074 = vmatpush1.msra.mxu0 %v660
  %2075 = vmatprep.subr.mxu0 %v665
  %2076 = vmatpush1.msra.mxu0 %v664
  %2077 = vmatprep.subr.mxu0 %v669
  %2078 = vmatpush1.msra.mxu0 %v668
  %2079 = vmatprep.subr.mxu0 %v673
  %2080 = vmatpush1.msra.mxu0 %v672
  %2081 = vmatprep.subr.mxu0 %v677
  %2082 = vmatpush1.msra.mxu0 %v676
  %2083 = vmatprep.subr.mxu0 %v681
  %2084 = vmatpush1.msra.mxu0 %v680
  %2085 = vmatprep.subr.mxu0 %v685
  %2086 = vmatpush1.msra.mxu0 %v684
  %2087 = vmatprep.subr.mxu0 %v689
  %2088 = vmatpush1.msra.mxu0 %v688
  %2089 = vmatprep.subr.mxu0 %v693
  %2090 = vmatpush1.msra.mxu0 %v692
  %2091 = vmatprep.subr.mxu0 %v697
  %2092 = vmatpush1.msra.mxu0 %v696
  %2093 = vmatprep.subr.mxu0 %v701
  %2094 = vmatpush1.msra.mxu0 %v700
  %2095 = vmatprep.subr.mxu0 %v705
  %2096 = vmatpush1.msra.mxu0 %v704
  %2097 = vmatprep.mubr.f32.mxu0 %v1647
  %2098 = vmatmul.mubr.f32.gmra.mrb[0].mxu0 %v1643
  %v2099 = vpop.f32.mrb[0].mxu0
  %v2100 = vadd.f32 %v2029, %v2099
  %v2101 = vpop.f32.mrb[0].mxu0
  %v2102 = vadd.f32 %v2031, %v2101
  %2103 = vdwg.mxu0
  %2104 = vmatprep.subr.mxu0 %v709
  %2105 = vmatpush1.msra.mxu0 %v708
  %2106 = vmatprep.subr.mxu0 %v713
  %2107 = vmatpush1.msra.mxu0 %v712
  %2108 = vmatprep.subr.mxu0 %v717
  %2109 = vmatpush1.msra.mxu0 %v716
  %2110 = vmatprep.subr.mxu0 %v721
  %2111 = vmatpush1.msra.mxu0 %v720
  %2112 = vmatprep.subr.mxu0 %v725
  %2113 = vmatpush1.msra.mxu0 %v724
  %2114 = vmatprep.subr.mxu0 %v729
  %2115 = vmatpush1.msra.mxu0 %v728
  %2116 = vmatprep.subr.mxu0 %v733
  %2117 = vmatpush1.msra.mxu0 %v732
  %2118 = vmatprep.subr.mxu0 %v737
  %2119 = vmatpush1.msra.mxu0 %v736
  %2120 = vmatprep.subr.mxu0 %v741
  %2121 = vmatpush1.msra.mxu0 %v740
  %2122 = vmatprep.subr.mxu0 %v745
  %2123 = vmatpush1.msra.mxu0 %v744
  %2124 = vmatprep.subr.mxu0 %v749
  %2125 = vmatpush1.msra.mxu0 %v748
  %2126 = vmatprep.subr.mxu0 %v753
  %2127 = vmatpush1.msra.mxu0 %v752
  %2128 = vmatprep.subr.mxu0 %v757
  %2129 = vmatpush1.msra.mxu0 %v756
  %2130 = vmatprep.subr.mxu0 %v761
  %2131 = vmatpush1.msra.mxu0 %v760
  %2132 = vmatprep.subr.mxu0 %v765
  %2133 = vmatpush1.msra.mxu0 %v764
  %2134 = vmatprep.subr.mxu0 %v769
  %2135 = vmatpush1.msra.mxu0 %v768
  %2136 = vmatprep.subr.mxu0 %v773
  %2137 = vmatpush1.msra.mxu0 %v772
  %2138 = vmatprep.subr.mxu0 %v777
  %2139 = vmatpush1.msra.mxu0 %v776
  %2140 = vmatprep.subr.mxu0 %v781
  %2141 = vmatpush1.msra.mxu0 %v780
  %2142 = vmatprep.subr.mxu0 %v785
  %2143 = vmatpush1.msra.mxu0 %v784
  %2144 = vmatprep.subr.mxu0 %v789
  %2145 = vmatpush1.msra.mxu0 %v788
  %2146 = vmatprep.subr.mxu0 %v793
  %2147 = vmatpush1.msra.mxu0 %v792
  %2148 = vmatprep.subr.mxu0 %v797
  %2149 = vmatpush1.msra.mxu0 %v796
  %2150 = vmatprep.subr.mxu0 %v801
  %2151 = vmatpush1.msra.mxu0 %v800
  %2152 = vmatprep.subr.mxu0 %v805
  %2153 = vmatpush1.msra.mxu0 %v804
  %2154 = vmatprep.subr.mxu0 %v809
  %2155 = vmatpush1.msra.mxu0 %v808
  %2156 = vmatprep.subr.mxu0 %v813
  %2157 = vmatpush1.msra.mxu0 %v812
  %2158 = vmatprep.subr.mxu0 %v817
  %2159 = vmatpush1.msra.mxu0 %v816
  %2160 = vmatprep.subr.mxu0 %v821
  %2161 = vmatpush1.msra.mxu0 %v820
  %2162 = vmatprep.subr.mxu0 %v825
  %2163 = vmatpush1.msra.mxu0 %v824
  %2164 = vmatprep.subr.mxu0 %v829
  %2165 = vmatpush1.msra.mxu0 %v828
  %2166 = vmatprep.subr.mxu0 %v833
  %2167 = vmatpush1.msra.mxu0 %v832
  %2168 = vmatprep.mubr.f32.mxu0 %v1655
  %2169 = vmatmul.mubr.f32.gmra.mrb[0].mxu0 %v1651
  %v2170 = vpop.f32.mrb[0].mxu0
  %v2171 = vadd.f32 %v2100, %v2170
  %v2172 = vpop.f32.mrb[0].mxu0
  %v2173 = vadd.f32 %v2102, %v2172
  %2174 = vdwg.mxu0
  %2175 = vmatprep.subr.mxu0 %v837
  %2176 = vmatpush1.msra.mxu0 %v836
  %2177 = vmatprep.subr.mxu0 %v841
  %2178 = vmatpush1.msra.mxu0 %v840
  %2179 = vmatprep.subr.mxu0 %v845
  %2180 = vmatpush1.msra.mxu0 %v844
  %2181 = vmatprep.subr.mxu0 %v849
  %2182 = vmatpush1.msra.mxu0 %v848
  %2183 = vmatprep.subr.mxu0 %v853
  %2184 = vmatpush1.msra.mxu0 %v852
  %2185 = vmatprep.subr.mxu0 %v857
  %2186 = vmatpush1.msra.mxu0 %v856
  %2187 = vmatprep.subr.mxu0 %v861
  %2188 = vmatpush1.msra.mxu0 %v860
  %2189 = vmatprep.subr.mxu0 %v865
  %2190 = vmatpush1.msra.mxu0 %v864
  %2191 = vmatprep.subr.mxu0 %v869
  %2192 = vmatpush1.msra.mxu0 %v868
  %2193 = vmatprep.subr.mxu0 %v873
  %2194 = vmatpush1.msra.mxu0 %v872
  %2195 = vmatprep.subr.mxu0 %v877
  %2196 = vmatpush1.msra.mxu0 %v876
  %2197 = vmatprep.subr.mxu0 %v881
  %2198 = vmatpush1.msra.mxu0 %v880
  %2199 = vmatprep.subr.mxu0 %v885
  %2200 = vmatpush1.msra.mxu0 %v884
  %2201 = vmatprep.subr.mxu0 %v889
  %2202 = vmatpush1.msra.mxu0 %v888
  %2203 = vmatprep.subr.mxu0 %v893
  %2204 = vmatpush1.msra.mxu0 %v892
  %2205 = vmatprep.subr.mxu0 %v897
  %2206 = vmatpush1.msra.mxu0 %v896
  %2207 = vmatprep.subr.mxu0 %v901
  %2208 = vmatpush1.msra.mxu0 %v900
  %2209 = vmatprep.subr.mxu0 %v905
  %2210 = vmatpush1.msra.mxu0 %v904
  %2211 = vmatprep.subr.mxu0 %v909
  %2212 = vmatpush1.msra.mxu0 %v908
  %2213 = vmatprep.subr.mxu0 %v913
  %2214 = vmatpush1.msra.mxu0 %v912
  %2215 = vmatprep.subr.mxu0 %v917
  %2216 = vmatpush1.msra.mxu0 %v916
  %2217 = vmatprep.subr.mxu0 %v921
  %2218 = vmatpush1.msra.mxu0 %v920
  %2219 = vmatprep.subr.mxu0 %v925
  %2220 = vmatpush1.msra.mxu0 %v924
  %2221 = vmatprep.subr.mxu0 %v929
  %2222 = vmatpush1.msra.mxu0 %v928
  %2223 = vmatprep.subr.mxu0 %v933
  %2224 = vmatpush1.msra.mxu0 %v932
  %2225 = vmatprep.subr.mxu0 %v937
  %2226 = vmatpush1.msra.mxu0 %v936
  %2227 = vmatprep.subr.mxu0 %v941
  %2228 = vmatpush1.msra.mxu0 %v940
  %2229 = vmatprep.subr.mxu0 %v945
  %2230 = vmatpush1.msra.mxu0 %v944
  %2231 = vmatprep.subr.mxu0 %v949
  %2232 = vmatpush1.msra.mxu0 %v948
  %2233 = vmatprep.subr.mxu0 %v953
  %2234 = vmatpush1.msra.mxu0 %v952
  %2235 = vmatprep.subr.mxu0 %v957
  %2236 = vmatpush1.msra.mxu0 %v956
  %2237 = vmatprep.subr.mxu0 %v961
  %2238 = vmatpush1.msra.mxu0 %v960
  %2239 = vmatprep.mubr.f32.mxu0 %v1663
  %2240 = vmatmul.mubr.f32.gmra.mrb[0].mxu0 %v1659
  %v2241 = vpop.f32.mrb[0].mxu0
  %v2242 = vadd.f32 %v2171, %v2241
  %v2243 = vpop.f32.mrb[0].mxu0
  %v2244 = vadd.f32 %v2173, %v2243
  %2245 = vdwg.mxu0
  %2246 = vmatprep.subr.mxu0 %v965
  %2247 = vmatpush1.msra.mxu0 %v964
  %2248 = vmatprep.subr.mxu0 %v969
  %2249 = vmatpush1.msra.mxu0 %v968
  %2250 = vmatprep.subr.mxu0 %v973
  %2251 = vmatpush1.msra.mxu0 %v972
  %2252 = vmatprep.subr.mxu0 %v977
  %2253 = vmatpush1.msra.mxu0 %v976
  %2254 = vmatprep.subr.mxu0 %v981
  %2255 = vmatpush1.msra.mxu0 %v980
  %2256 = vmatprep.subr.mxu0 %v985
  %2257 = vmatpush1.msra.mxu0 %v984
  %2258 = vmatprep.subr.mxu0 %v989
  %2259 = vmatpush1.msra.mxu0 %v988
  %2260 = vmatprep.subr.mxu0 %v993
  %2261 = vmatpush1.msra.mxu0 %v992
  %2262 = vmatprep.subr.mxu0 %v997
  %2263 = vmatpush1.msra.mxu0 %v996
  %2264 = vmatprep.subr.mxu0 %v1001
  %2265 = vmatpush1.msra.mxu0 %v1000
  %2266 = vmatprep.subr.mxu0 %v1005
  %2267 = vmatpush1.msra.mxu0 %v1004
  %2268 = vmatprep.subr.mxu0 %v1009
  %2269 = vmatpush1.msra.mxu0 %v1008
  %2270 = vmatprep.subr.mxu0 %v1013
  %2271 = vmatpush1.msra.mxu0 %v1012
  %2272 = vmatprep.subr.mxu0 %v1017
  %2273 = vmatpush1.msra.mxu0 %v1016
  %2274 = vmatprep.subr.mxu0 %v1021
  %2275 = vmatpush1.msra.mxu0 %v1020
  %2276 = vmatprep.subr.mxu0 %v1025
  %2277 = vmatpush1.msra.mxu0 %v1024
  %2278 = vmatprep.subr.mxu0 %v1029
  %2279 = vmatpush1.msra.mxu0 %v1028
  %2280 = vmatprep.subr.mxu0 %v1033
  %2281 = vmatpush1.msra.mxu0 %v1032
  %2282 = vmatprep.subr.mxu0 %v1037
  %2283 = vmatpush1.msra.mxu0 %v1036
  %2284 = vmatprep.subr.mxu0 %v1041
  %2285 = vmatpush1.msra.mxu0 %v1040
  %2286 = vmatprep.subr.mxu0 %v1045
  %2287 = vmatpush1.msra.mxu0 %v1044
  %2288 = vmatprep.subr.mxu0 %v1049
  %2289 = vmatpush1.msra.mxu0 %v1048
  %2290 = vmatprep.subr.mxu0 %v1053
  %2291 = vmatpush1.msra.mxu0 %v1052
  %2292 = vmatprep.subr.mxu0 %v1057
  %2293 = vmatpush1.msra.mxu0 %v1056
  %2294 = vmatprep.subr.mxu0 %v1061
  %2295 = vmatpush1.msra.mxu0 %v1060
  %2296 = vmatprep.subr.mxu0 %v1065
  %2297 = vmatpush1.msra.mxu0 %v1064
  %2298 = vmatprep.subr.mxu0 %v1069
  %2299 = vmatpush1.msra.mxu0 %v1068
  %2300 = vmatprep.subr.mxu0 %v1073
  %2301 = vmatpush1.msra.mxu0 %v1072
  %2302 = vmatprep.subr.mxu0 %v1077
  %2303 = vmatpush1.msra.mxu0 %v1076
  %2304 = vmatprep.subr.mxu0 %v1081
  %2305 = vmatpush1.msra.mxu0 %v1080
  %2306 = vmatprep.subr.mxu0 %v1085
  %2307 = vmatpush1.msra.mxu0 %v1084
  %2308 = vmatprep.subr.mxu0 %v1089
  %2309 = vmatpush1.msra.mxu0 %v1088
  %2310 = vmatprep.mubr.f32.mxu0 %v1671
  %2311 = vmatmul.mubr.f32.gmra.mrb[0].mxu0 %v1667
  %v2312 = vpop.f32.mrb[0].mxu0
  %v2313 = vadd.f32 %v2242, %v2312
  %v2314 = vpop.f32.mrb[0].mxu0
  %v2315 = vadd.f32 %v2244, %v2314
  %2316 = vdwg.mxu0
  %2317 = vmatprep.subr.mxu0 %v1093
  %2318 = vmatpush1.msra.mxu0 %v1092
  %2319 = vmatprep.subr.mxu0 %v1097
  %2320 = vmatpush1.msra.mxu0 %v1096
  %2321 = vmatprep.subr.mxu0 %v1101
  %2322 = vmatpush1.msra.mxu0 %v1100
  %2323 = vmatprep.subr.mxu0 %v1105
  %2324 = vmatpush1.msra.mxu0 %v1104
  %2325 = vmatprep.subr.mxu0 %v1109
  %2326 = vmatpush1.msra.mxu0 %v1108
  %2327 = vmatprep.subr.mxu0 %v1113
  %2328 = vmatpush1.msra.mxu0 %v1112
  %2329 = vmatprep.subr.mxu0 %v1117
  %2330 = vmatpush1.msra.mxu0 %v1116
  %2331 = vmatprep.subr.mxu0 %v1121
  %2332 = vmatpush1.msra.mxu0 %v1120
  %2333 = vmatprep.subr.mxu0 %v1125
  %2334 = vmatpush1.msra.mxu0 %v1124
  %2335 = vmatprep.subr.mxu0 %v1129
  %2336 = vmatpush1.msra.mxu0 %v1128
  %2337 = vmatprep.subr.mxu0 %v1133
  %2338 = vmatpush1.msra.mxu0 %v1132
  %2339 = vmatprep.subr.mxu0 %v1137
  %2340 = vmatpush1.msra.mxu0 %v1136
  %2341 = vmatprep.subr.mxu0 %v1141
  %2342 = vmatpush1.msra.mxu0 %v1140
  %2343 = vmatprep.subr.mxu0 %v1145
  %2344 = vmatpush1.msra.mxu0 %v1144
  %2345 = vmatprep.subr.mxu0 %v1149
  %2346 = vmatpush1.msra.mxu0 %v1148
  %2347 = vmatprep.subr.mxu0 %v1153
  %2348 = vmatpush1.msra.mxu0 %v1152
  %2349 = vmatprep.subr.mxu0 %v1157
  %2350 = vmatpush1.msra.mxu0 %v1156
  %2351 = vmatprep.subr.mxu0 %v1161
  %2352 = vmatpush1.msra.mxu0 %v1160
  %2353 = vmatprep.subr.mxu0 %v1165
  %2354 = vmatpush1.msra.mxu0 %v1164
  %2355 = vmatprep.subr.mxu0 %v1169
  %2356 = vmatpush1.msra.mxu0 %v1168
  %2357 = vmatprep.subr.mxu0 %v1173
  %2358 = vmatpush1.msra.mxu0 %v1172
  %2359 = vmatprep.subr.mxu0 %v1177
  %2360 = vmatpush1.msra.mxu0 %v1176
  %2361 = vmatprep.subr.mxu0 %v1181
  %2362 = vmatpush1.msra.mxu0 %v1180
  %2363 = vmatprep.subr.mxu0 %v1185
  %2364 = vmatpush1.msra.mxu0 %v1184
  %2365 = vmatprep.subr.mxu0 %v1189
  %2366 = vmatpush1.msra.mxu0 %v1188
  %2367 = vmatprep.subr.mxu0 %v1193
  %2368 = vmatpush1.msra.mxu0 %v1192
  %2369 = vmatprep.subr.mxu0 %v1197
  %2370 = vmatpush1.msra.mxu0 %v1196
  %2371 = vmatprep.subr.mxu0 %v1201
  %2372 = vmatpush1.msra.mxu0 %v1200
  %2373 = vmatprep.subr.mxu0 %v1205
  %2374 = vmatpush1.msra.mxu0 %v1204
  %2375 = vmatprep.subr.mxu0 %v1209
  %2376 = vmatpush1.msra.mxu0 %v1208
  %2377 = vmatprep.subr.mxu0 %v1213
  %2378 = vmatpush1.msra.mxu0 %v1212
  %2379 = vmatprep.subr.mxu0 %v1217
  %2380 = vmatpush1.msra.mxu0 %v1216
  %2381 = vmatprep.mubr.f32.mxu0 %v1679
  %2382 = vmatmul.mubr.f32.gmra.mrb[0].mxu0 %v1675
  %v2383 = vpop.f32.mrb[0].mxu0
  %v2384 = vadd.f32 %v2313, %v2383
  %v2385 = vpop.f32.mrb[0].mxu0
  %v2386 = vadd.f32 %v2315, %v2385
  %2387 = vdwg.mxu0
  %2388 = vmatprep.subr.mxu0 %v1221
  %2389 = vmatpush1.msra.mxu0 %v1220
  %2390 = vmatprep.subr.mxu0 %v1225
  %2391 = vmatpush1.msra.mxu0 %v1224
  %2392 = vmatprep.subr.mxu0 %v1229
  %2393 = vmatpush1.msra.mxu0 %v1228
  %2394 = vmatprep.subr.mxu0 %v1233
  %2395 = vmatpush1.msra.mxu0 %v1232
  %2396 = vmatprep.subr.mxu0 %v1237
  %2397 = vmatpush1.msra.mxu0 %v1236
  %2398 = vmatprep.subr.mxu0 %v1241
  %2399 = vmatpush1.msra.mxu0 %v1240
  %2400 = vmatprep.subr.mxu0 %v1245
  %2401 = vmatpush1.msra.mxu0 %v1244
  %2402 = vmatprep.subr.mxu0 %v1249
  %2403 = vmatpush1.msra.mxu0 %v1248
  %2404 = vmatprep.subr.mxu0 %v1253
  %2405 = vmatpush1.msra.mxu0 %v1252
  %2406 = vmatprep.subr.mxu0 %v1257
  %2407 = vmatpush1.msra.mxu0 %v1256
  %2408 = vmatprep.subr.mxu0 %v1261
  %2409 = vmatpush1.msra.mxu0 %v1260
  %2410 = vmatprep.subr.mxu0 %v1265
  %2411 = vmatpush1.msra.mxu0 %v1264
  %2412 = vmatprep.subr.mxu0 %v1269
  %2413 = vmatpush1.msra.mxu0 %v1268
  %2414 = vmatprep.subr.mxu0 %v1273
  %2415 = vmatpush1.msra.mxu0 %v1272
  %2416 = vmatprep.subr.mxu0 %v1277
  %2417 = vmatpush1.msra.mxu0 %v1276
  %2418 = vmatprep.subr.mxu0 %v1281
  %2419 = vmatpush1.msra.mxu0 %v1280
  %2420 = vmatprep.subr.mxu0 %v1285
  %2421 = vmatpush1.msra.mxu0 %v1284
  %2422 = vmatprep.subr.mxu0 %v1289
  %2423 = vmatpush1.msra.mxu0 %v1288
  %2424 = vmatprep.subr.mxu0 %v1293
  %2425 = vmatpush1.msra.mxu0 %v1292
  %2426 = vmatprep.subr.mxu0 %v1297
  %2427 = vmatpush1.msra.mxu0 %v1296
  %2428 = vmatprep.subr.mxu0 %v1301
  %2429 = vmatpush1.msra.mxu0 %v1300
  %2430 = vmatprep.subr.mxu0 %v1305
  %2431 = vmatpush1.msra.mxu0 %v1304
  %2432 = vmatprep.subr.mxu0 %v1309
  %2433 = vmatpush1.msra.mxu0 %v1308
  %2434 = vmatprep.subr.mxu0 %v1313
  %2435 = vmatpush1.msra.mxu0 %v1312
  %2436 = vmatprep.subr.mxu0 %v1317
  %2437 = vmatpush1.msra.mxu0 %v1316
  %2438 = vmatprep.subr.mxu0 %v1321
  %2439 = vmatpush1.msra.mxu0 %v1320
  %2440 = vmatprep.subr.mxu0 %v1325
  %2441 = vmatpush1.msra.mxu0 %v1324
  %2442 = vmatprep.subr.mxu0 %v1329
  %2443 = vmatpush1.msra.mxu0 %v1328
  %2444 = vmatprep.subr.mxu0 %v1333
  %2445 = vmatpush1.msra.mxu0 %v1332
  %2446 = vmatprep.subr.mxu0 %v1337
  %2447 = vmatpush1.msra.mxu0 %v1336
  %2448 = vmatprep.subr.mxu0 %v1341
  %2449 = vmatpush1.msra.mxu0 %v1340
  %2450 = vmatprep.subr.mxu0 %v1345
  %2451 = vmatpush1.msra.mxu0 %v1344
  %2452 = vmatprep.mubr.f32.mxu0 %v1687
  %2453 = vmatmul.mubr.f32.gmra.mrb[0].mxu0 %v1683
  %v2454 = vpop.f32.mrb[0].mxu0
  %v2455 = vadd.f32 %v2384, %v2454
  %v2456 = vpop.f32.mrb[0].mxu0
  %v2457 = vadd.f32 %v2386, %v2456
  %2458 = vdwg.mxu0
  %2459 = vmatprep.subr.mxu0 %v1349
  %2460 = vmatpush1.msra.mxu0 %v1348
  %2461 = vmatprep.subr.mxu0 %v1353
  %2462 = vmatpush1.msra.mxu0 %v1352
  %2463 = vmatprep.subr.mxu0 %v1357
  %2464 = vmatpush1.msra.mxu0 %v1356
  %2465 = vmatprep.subr.mxu0 %v1361
  %2466 = vmatpush1.msra.mxu0 %v1360
  %2467 = vmatprep.subr.mxu0 %v1365
  %2468 = vmatpush1.msra.mxu0 %v1364
  %2469 = vmatprep.subr.mxu0 %v1369
  %2470 = vmatpush1.msra.mxu0 %v1368
  %2471 = vmatprep.subr.mxu0 %v1373
  %2472 = vmatpush1.msra.mxu0 %v1372
  %2473 = vmatprep.subr.mxu0 %v1377
  %2474 = vmatpush1.msra.mxu0 %v1376
  %2475 = vmatprep.subr.mxu0 %v1381
  %2476 = vmatpush1.msra.mxu0 %v1380
  %2477 = vmatprep.subr.mxu0 %v1385
  %2478 = vmatpush1.msra.mxu0 %v1384
  %2479 = vmatprep.subr.mxu0 %v1389
  %2480 = vmatpush1.msra.mxu0 %v1388
  %2481 = vmatprep.subr.mxu0 %v1393
  %2482 = vmatpush1.msra.mxu0 %v1392
  %2483 = vmatprep.subr.mxu0 %v1397
  %2484 = vmatpush1.msra.mxu0 %v1396
  %2485 = vmatprep.subr.mxu0 %v1401
  %2486 = vmatpush1.msra.mxu0 %v1400
  %2487 = vmatprep.subr.mxu0 %v1405
  %2488 = vmatpush1.msra.mxu0 %v1404
  %2489 = vmatprep.subr.mxu0 %v1409
  %2490 = vmatpush1.msra.mxu0 %v1408
  %2491 = vmatprep.subr.mxu0 %v1413
  %2492 = vmatpush1.msra.mxu0 %v1412
  %2493 = vmatprep.subr.mxu0 %v1417
  %2494 = vmatpush1.msra.mxu0 %v1416
  %2495 = vmatprep.subr.mxu0 %v1421
  %2496 = vmatpush1.msra.mxu0 %v1420
  %2497 = vmatprep.subr.mxu0 %v1425
  %2498 = vmatpush1.msra.mxu0 %v1424
  %2499 = vmatprep.subr.mxu0 %v1429
  %2500 = vmatpush1.msra.mxu0 %v1428
  %2501 = vmatprep.subr.mxu0 %v1433
  %2502 = vmatpush1.msra.mxu0 %v1432
  %2503 = vmatprep.subr.mxu0 %v1437
  %2504 = vmatpush1.msra.mxu0 %v1436
  %2505 = vmatprep.subr.mxu0 %v1441
  %2506 = vmatpush1.msra.mxu0 %v1440
  %2507 = vmatprep.subr.mxu0 %v1445
  %2508 = vmatpush1.msra.mxu0 %v1444
  %2509 = vmatprep.subr.mxu0 %v1449
  %2510 = vmatpush1.msra.mxu0 %v1448
  %2511 = vmatprep.subr.mxu0 %v1453
  %2512 = vmatpush1.msra.mxu0 %v1452
  %2513 = vmatprep.subr.mxu0 %v1457
  %2514 = vmatpush1.msra.mxu0 %v1456
  %2515 = vmatprep.subr.mxu0 %v1461
  %2516 = vmatpush1.msra.mxu0 %v1460
  %2517 = vmatprep.subr.mxu0 %v1465
  %2518 = vmatpush1.msra.mxu0 %v1464
  %2519 = vmatprep.subr.mxu0 %v1469
  %2520 = vmatpush1.msra.mxu0 %v1468
  %2521 = vmatprep.subr.mxu0 %v1473
  %2522 = vmatpush1.msra.mxu0 %v1472
  %2523 = vmatprep.mubr.f32.mxu0 %v1695
  %2524 = vmatmul.mubr.f32.gmra.mrb[0].mxu0 %v1691
  %v2525 = vpop.f32.mrb[0].mxu0
  %v2526 = vadd.f32 %v2455, %v2525
  %v2527 = vpop.f32.mrb[0].mxu0
  %v2528 = vadd.f32 %v2457, %v2527
  %2529 = vdwg.mxu0
  %2530 = vmatprep.subr.mxu0 %v1477
  %2531 = vmatpush1.msra.mxu0 %v1476
  %2532 = vmatprep.subr.mxu0 %v1481
  %2533 = vmatpush1.msra.mxu0 %v1480
  %2534 = vmatprep.subr.mxu0 %v1485
  %2535 = vmatpush1.msra.mxu0 %v1484
  %2536 = vmatprep.subr.mxu0 %v1489
  %2537 = vmatpush1.msra.mxu0 %v1488
  %2538 = vmatprep.subr.mxu0 %v1493
  %2539 = vmatpush1.msra.mxu0 %v1492
  %2540 = vmatprep.subr.mxu0 %v1497
  %2541 = vmatpush1.msra.mxu0 %v1496
  %2542 = vmatprep.subr.mxu0 %v1501
  %2543 = vmatpush1.msra.mxu0 %v1500
  %2544 = vmatprep.subr.mxu0 %v1505
  %2545 = vmatpush1.msra.mxu0 %v1504
  %2546 = vmatprep.subr.mxu0 %v1509
  %2547 = vmatpush1.msra.mxu0 %v1508
  %2548 = vmatprep.subr.mxu0 %v1513
  %2549 = vmatpush1.msra.mxu0 %v1512
  %2550 = vmatprep.subr.mxu0 %v1517
  %2551 = vmatpush1.msra.mxu0 %v1516
  %2552 = vmatprep.subr.mxu0 %v1521
  %2553 = vmatpush1.msra.mxu0 %v1520
  %2554 = vmatprep.subr.mxu0 %v1525
  %2555 = vmatpush1.msra.mxu0 %v1524
  %2556 = vmatprep.subr.mxu0 %v1529
  %2557 = vmatpush1.msra.mxu0 %v1528
  %2558 = vmatprep.subr.mxu0 %v1533
  %2559 = vmatpush1.msra.mxu0 %v1532
  %2560 = vmatprep.subr.mxu0 %v1537
  %2561 = vmatpush1.msra.mxu0 %v1536
  %2562 = vmatprep.subr.mxu0 %v1541
  %2563 = vmatpush1.msra.mxu0 %v1540
  %2564 = vmatprep.subr.mxu0 %v1545
  %2565 = vmatpush1.msra.mxu0 %v1544
  %2566 = vmatprep.subr.mxu0 %v1549
  %2567 = vmatpush1.msra.mxu0 %v1548
  %2568 = vmatprep.subr.mxu0 %v1553
  %2569 = vmatpush1.msra.mxu0 %v1552
  %2570 = vmatprep.subr.mxu0 %v1557
  %2571 = vmatpush1.msra.mxu0 %v1556
  %2572 = vmatprep.subr.mxu0 %v1561
  %2573 = vmatpush1.msra.mxu0 %v1560
  %2574 = vmatprep.subr.mxu0 %v1565
  %2575 = vmatpush1.msra.mxu0 %v1564
  %2576 = vmatprep.subr.mxu0 %v1569
  %2577 = vmatpush1.msra.mxu0 %v1568
  %2578 = vmatprep.subr.mxu0 %v1573
  %2579 = vmatpush1.msra.mxu0 %v1572
  %2580 = vmatprep.subr.mxu0 %v1577
  %2581 = vmatpush1.msra.mxu0 %v1576
  %2582 = vmatprep.subr.mxu0 %v1581
  %2583 = vmatpush1.msra.mxu0 %v1580
  %2584 = vmatprep.subr.mxu0 %v1585
  %2585 = vmatpush1.msra.mxu0 %v1584
  %2586 = vmatprep.subr.mxu0 %v1589
  %2587 = vmatpush1.msra.mxu0 %v1588
  %2588 = vmatprep.subr.mxu0 %v1593
  %2589 = vmatpush1.msra.mxu0 %v1592
  %2590 = vmatprep.subr.mxu0 %v1597
  %2591 = vmatpush1.msra.mxu0 %v1596
  %2592 = vmatprep.subr.mxu0 %v1601
  %2593 = vmatpush1.msra.mxu0 %v1600
  %2594 = vmatprep.mubr.f32.mxu0 %v1703
  %2595 = vmatmul.mubr.f32.gmra.mrb[0].mxu0 %v1699
  %v2596 = vpop.f32.mrb[0].mxu0
  %v2597 = vadd.f32 %v2526, %v2596
  %v2598 = vpop.f32.mrb[0].mxu0
  %v2599 = vadd.f32 %v2528, %v2598
  %2600 = vdwg.mxu0
  %2601 = vmatprep.subr.mxu0 %v71
  %2602 = vmatpush1.msra.mxu0 %v70
  %2603 = vmatprep.subr.mxu0 %v75
  %2604 = vmatpush1.msra.mxu0 %v74
  %2605 = vmatprep.subr.mxu0 %v79
  %2606 = vmatpush1.msra.mxu0 %v78
  %2607 = vmatprep.subr.mxu0 %v83
  %2608 = vmatpush1.msra.mxu0 %v82
  %2609 = vmatprep.subr.mxu0 %v87
  %2610 = vmatpush1.msra.mxu0 %v86
  %2611 = vmatprep.subr.mxu0 %v91
  %2612 = vmatpush1.msra.mxu0 %v90
  %2613 = vmatprep.subr.mxu0 %v95
  %2614 = vmatpush1.msra.mxu0 %v94
  %2615 = vmatprep.subr.mxu0 %v99
  %2616 = vmatpush1.msra.mxu0 %v98
  %2617 = vmatprep.subr.mxu0 %v103
  %2618 = vmatpush1.msra.mxu0 %v102
  %2619 = vmatprep.subr.mxu0 %v107
  %2620 = vmatpush1.msra.mxu0 %v106
  %2621 = vmatprep.subr.mxu0 %v111
  %2622 = vmatpush1.msra.mxu0 %v110
  %2623 = vmatprep.subr.mxu0 %v115
  %2624 = vmatpush1.msra.mxu0 %v114
  %2625 = vmatprep.subr.mxu0 %v119
  %2626 = vmatpush1.msra.mxu0 %v118
  %2627 = vmatprep.subr.mxu0 %v123
  %2628 = vmatpush1.msra.mxu0 %v122
  %2629 = vmatprep.subr.mxu0 %v127
  %2630 = vmatpush1.msra.mxu0 %v126
  %2631 = vmatprep.subr.mxu0 %v131
  %2632 = vmatpush1.msra.mxu0 %v130
  %2633 = vmatprep.subr.mxu0 %v135
  %2634 = vmatpush1.msra.mxu0 %v134
  %2635 = vmatprep.subr.mxu0 %v139
  %2636 = vmatpush1.msra.mxu0 %v138
  %2637 = vmatprep.subr.mxu0 %v143
  %2638 = vmatpush1.msra.mxu0 %v142
  %2639 = vmatprep.subr.mxu0 %v147
  %2640 = vmatpush1.msra.mxu0 %v146
  %2641 = vmatprep.subr.mxu0 %v151
  %2642 = vmatpush1.msra.mxu0 %v150
  %2643 = vmatprep.subr.mxu0 %v155
  %2644 = vmatpush1.msra.mxu0 %v154
  %2645 = vmatprep.subr.mxu0 %v159
  %2646 = vmatpush1.msra.mxu0 %v158
  %2647 = vmatprep.subr.mxu0 %v163
  %2648 = vmatpush1.msra.mxu0 %v162
  %2649 = vmatprep.subr.mxu0 %v167
  %2650 = vmatpush1.msra.mxu0 %v166
  %2651 = vmatprep.subr.mxu0 %v171
  %2652 = vmatpush1.msra.mxu0 %v170
  %2653 = vmatprep.subr.mxu0 %v175
  %2654 = vmatpush1.msra.mxu0 %v174
  %2655 = vmatprep.subr.mxu0 %v179
  %2656 = vmatpush1.msra.mxu0 %v178
  %2657 = vmatprep.subr.mxu0 %v183
  %2658 = vmatpush1.msra.mxu0 %v182
  %2659 = vmatprep.subr.mxu0 %v187
  %2660 = vmatpush1.msra.mxu0 %v186
  %2661 = vmatprep.subr.mxu0 %v191
  %2662 = vmatpush1.msra.mxu0 %v190
  %2663 = vmatprep.subr.mxu0 %v195
  %2664 = vmatpush1.msra.mxu0 %v194
  %2665 = vmatprep.mubr.f32.mxu0 %v1615
  %2666 = vmatmul.mubr.f32.gmra.mrb[0].mxu0 %v1611
  %v2667 = vpop.f32.mrb[0].mxu0
  %v2668 = vadd.f32 %v1740, %v2667
  %v2669 = vpop.f32.mrb[0].mxu0
  %v2670 = vadd.f32 %v1744, %v2669
  %2671 = vdwg.mxu0
  %2672 = vmatprep.subr.mxu0 %v199
  %2673 = vmatpush1.msra.mxu0 %v198
  %2674 = vmatprep.subr.mxu0 %v203
  %2675 = vmatpush1.msra.mxu0 %v202
  %2676 = vmatprep.subr.mxu0 %v207
  %2677 = vmatpush1.msra.mxu0 %v206
  %2678 = vmatprep.subr.mxu0 %v211
  %2679 = vmatpush1.msra.mxu0 %v210
  %2680 = vmatprep.subr.mxu0 %v215
  %2681 = vmatpush1.msra.mxu0 %v214
  %2682 = vmatprep.subr.mxu0 %v219
  %2683 = vmatpush1.msra.mxu0 %v218
  %2684 = vmatprep.subr.mxu0 %v223
  %2685 = vmatpush1.msra.mxu0 %v222
  %2686 = vmatprep.subr.mxu0 %v227
  %2687 = vmatpush1.msra.mxu0 %v226
  %2688 = vmatprep.subr.mxu0 %v231
  %2689 = vmatpush1.msra.mxu0 %v230
  %2690 = vmatprep.subr.mxu0 %v235
  %2691 = vmatpush1.msra.mxu0 %v234
  %2692 = vmatprep.subr.mxu0 %v239
  %2693 = vmatpush1.msra.mxu0 %v238
  %2694 = vmatprep.subr.mxu0 %v243
  %2695 = vmatpush1.msra.mxu0 %v242
  %2696 = vmatprep.subr.mxu0 %v247
  %2697 = vmatpush1.msra.mxu0 %v246
  %2698 = vmatprep.subr.mxu0 %v251
  %2699 = vmatpush1.msra.mxu0 %v250
  %2700 = vmatprep.subr.mxu0 %v255
  %2701 = vmatpush1.msra.mxu0 %v254
  %2702 = vmatprep.subr.mxu0 %v259
  %2703 = vmatpush1.msra.mxu0 %v258
  %2704 = vmatprep.subr.mxu0 %v263
  %2705 = vmatpush1.msra.mxu0 %v262
  %2706 = vmatprep.subr.mxu0 %v267
  %2707 = vmatpush1.msra.mxu0 %v266
  %2708 = vmatprep.subr.mxu0 %v271
  %2709 = vmatpush1.msra.mxu0 %v270
  %2710 = vmatprep.subr.mxu0 %v275
  %2711 = vmatpush1.msra.mxu0 %v274
  %2712 = vmatprep.subr.mxu0 %v279
  %2713 = vmatpush1.msra.mxu0 %v278
  %2714 = vmatprep.subr.mxu0 %v283
  %2715 = vmatpush1.msra.mxu0 %v282
  %2716 = vmatprep.subr.mxu0 %v287
  %2717 = vmatpush1.msra.mxu0 %v286
  %2718 = vmatprep.subr.mxu0 %v291
  %2719 = vmatpush1.msra.mxu0 %v290
  %2720 = vmatprep.subr.mxu0 %v295
  %2721 = vmatpush1.msra.mxu0 %v294
  %2722 = vmatprep.subr.mxu0 %v299
  %2723 = vmatpush1.msra.mxu0 %v298
  %2724 = vmatprep.subr.mxu0 %v303
  %2725 = vmatpush1.msra.mxu0 %v302
  %2726 = vmatprep.subr.mxu0 %v307
  %2727 = vmatpush1.msra.mxu0 %v306
  %2728 = vmatprep.subr.mxu0 %v311
  %2729 = vmatpush1.msra.mxu0 %v310
  %2730 = vmatprep.subr.mxu0 %v315
  %2731 = vmatpush1.msra.mxu0 %v314
  %2732 = vmatprep.subr.mxu0 %v319
  %2733 = vmatpush1.msra.mxu0 %v318
  %2734 = vmatprep.subr.mxu0 %v323
  %2735 = vmatpush1.msra.mxu0 %v322
  %2736 = vmatprep.mubr.f32.mxu0 %v1623
  %2737 = vmatmul.mubr.f32.gmra.mrb[0].mxu0 %v1619
  %v2738 = vpop.f32.mrb[0].mxu0
  %v2739 = vadd.f32 %v2668, %v2738
  %v2740 = vpop.f32.mrb[0].mxu0
  %v2741 = vadd.f32 %v2670, %v2740
  %2742 = vdwg.mxu0
  %2743 = vmatprep.subr.mxu0 %v327
  %2744 = vmatpush1.msra.mxu0 %v326
  %2745 = vmatprep.subr.mxu0 %v331
  %2746 = vmatpush1.msra.mxu0 %v330
  %2747 = vmatprep.subr.mxu0 %v335
  %2748 = vmatpush1.msra.mxu0 %v334
  %2749 = vmatprep.subr.mxu0 %v339
  %2750 = vmatpush1.msra.mxu0 %v338
  %2751 = vmatprep.subr.mxu0 %v343
  %2752 = vmatpush1.msra.mxu0 %v342
  %2753 = vmatprep.subr.mxu0 %v347
  %2754 = vmatpush1.msra.mxu0 %v346
  %2755 = vmatprep.subr.mxu0 %v351
  %2756 = vmatpush1.msra.mxu0 %v350
  %2757 = vmatprep.subr.mxu0 %v355
  %2758 = vmatpush1.msra.mxu0 %v354
  %2759 = vmatprep.subr.mxu0 %v359
  %2760 = vmatpush1.msra.mxu0 %v358
  %2761 = vmatprep.subr.mxu0 %v363
  %2762 = vmatpush1.msra.mxu0 %v362
  %2763 = vmatprep.subr.mxu0 %v367
  %2764 = vmatpush1.msra.mxu0 %v366
  %2765 = vmatprep.subr.mxu0 %v371
  %2766 = vmatpush1.msra.mxu0 %v370
  %2767 = vmatprep.subr.mxu0 %v375
  %2768 = vmatpush1.msra.mxu0 %v374
  %2769 = vmatprep.subr.mxu0 %v379
  %2770 = vmatpush1.msra.mxu0 %v378
  %2771 = vmatprep.subr.mxu0 %v383
  %2772 = vmatpush1.msra.mxu0 %v382
  %2773 = vmatprep.subr.mxu0 %v387
  %2774 = vmatpush1.msra.mxu0 %v386
  %2775 = vmatprep.subr.mxu0 %v391
  %2776 = vmatpush1.msra.mxu0 %v390
  %2777 = vmatprep.subr.mxu0 %v395
  %2778 = vmatpush1.msra.mxu0 %v394
  %2779 = vmatprep.subr.mxu0 %v399
  %2780 = vmatpush1.msra.mxu0 %v398
  %2781 = vmatprep.subr.mxu0 %v403
  %2782 = vmatpush1.msra.mxu0 %v402
  %2783 = vmatprep.subr.mxu0 %v407
  %2784 = vmatpush1.msra.mxu0 %v406
  %2785 = vmatprep.subr.mxu0 %v411
  %2786 = vmatpush1.msra.mxu0 %v410
  %2787 = vmatprep.subr.mxu0 %v415
  %2788 = vmatpush1.msra.mxu0 %v414
  %2789 = vmatprep.subr.mxu0 %v419
  %2790 = vmatpush1.msra.mxu0 %v418
  %2791 = vmatprep.subr.mxu0 %v423
  %2792 = vmatpush1.msra.mxu0 %v422
  %2793 = vmatprep.subr.mxu0 %v427
  %2794 = vmatpush1.msra.mxu0 %v426
  %2795 = vmatprep.subr.mxu0 %v431
  %2796 = vmatpush1.msra.mxu0 %v430
  %2797 = vmatprep.subr.mxu0 %v435
  %2798 = vmatpush1.msra.mxu0 %v434
  %2799 = vmatprep.subr.mxu0 %v439
  %2800 = vmatpush1.msra.mxu0 %v438
  %2801 = vmatprep.subr.mxu0 %v443
  %2802 = vmatpush1.msra.mxu0 %v442
  %2803 = vmatprep.subr.mxu0 %v447
  %2804 = vmatpush1.msra.mxu0 %v446
  %2805 = vmatprep.subr.mxu0 %v451
  %2806 = vmatpush1.msra.mxu0 %v450
  %2807 = vmatprep.mubr.f32.mxu0 %v1631
  %2808 = vmatmul.mubr.f32.gmra.mrb[0].mxu0 %v1627
  %v2809 = vpop.f32.mrb[0].mxu0
  %v2810 = vadd.f32 %v2739, %v2809
  %v2811 = vpop.f32.mrb[0].mxu0
  %v2812 = vadd.f32 %v2741, %v2811
  %2813 = vdwg.mxu0
  %2814 = vmatprep.subr.mxu0 %v455
  %2815 = vmatpush1.msra.mxu0 %v454
  %2816 = vmatprep.subr.mxu0 %v459
  %2817 = vmatpush1.msra.mxu0 %v458
  %2818 = vmatprep.subr.mxu0 %v463
  %2819 = vmatpush1.msra.mxu0 %v462
  %2820 = vmatprep.subr.mxu0 %v467
  %2821 = vmatpush1.msra.mxu0 %v466
  %2822 = vmatprep.subr.mxu0 %v471
  %2823 = vmatpush1.msra.mxu0 %v470
  %2824 = vmatprep.subr.mxu0 %v475
  %2825 = vmatpush1.msra.mxu0 %v474
  %2826 = vmatprep.subr.mxu0 %v479
  %2827 = vmatpush1.msra.mxu0 %v478
  %2828 = vmatprep.subr.mxu0 %v483
  %2829 = vmatpush1.msra.mxu0 %v482
  %2830 = vmatprep.subr.mxu0 %v487
  %2831 = vmatpush1.msra.mxu0 %v486
  %2832 = vmatprep.subr.mxu0 %v491
  %2833 = vmatpush1.msra.mxu0 %v490
  %2834 = vmatprep.subr.mxu0 %v495
  %2835 = vmatpush1.msra.mxu0 %v494
  %2836 = vmatprep.subr.mxu0 %v499
  %2837 = vmatpush1.msra.mxu0 %v498
  %2838 = vmatprep.subr.mxu0 %v503
  %2839 = vmatpush1.msra.mxu0 %v502
  %2840 = vmatprep.subr.mxu0 %v507
  %2841 = vmatpush1.msra.mxu0 %v506
  %2842 = vmatprep.subr.mxu0 %v511
  %2843 = vmatpush1.msra.mxu0 %v510
  %2844 = vmatprep.subr.mxu0 %v515
  %2845 = vmatpush1.msra.mxu0 %v514
  %2846 = vmatprep.subr.mxu0 %v519
  %2847 = vmatpush1.msra.mxu0 %v518
  %2848 = vmatprep.subr.mxu0 %v523
  %2849 = vmatpush1.msra.mxu0 %v522
  %2850 = vmatprep.subr.mxu0 %v527
  %2851 = vmatpush1.msra.mxu0 %v526
  %2852 = vmatprep.subr.mxu0 %v531
  %2853 = vmatpush1.msra.mxu0 %v530
  %2854 = vmatprep.subr.mxu0 %v535
  %2855 = vmatpush1.msra.mxu0 %v534
  %2856 = vmatprep.subr.mxu0 %v539
  %2857 = vmatpush1.msra.mxu0 %v538
  %2858 = vmatprep.subr.mxu0 %v543
  %2859 = vmatpush1.msra.mxu0 %v542
  %2860 = vmatprep.subr.mxu0 %v547
  %2861 = vmatpush1.msra.mxu0 %v546
  %2862 = vmatprep.subr.mxu0 %v551
  %2863 = vmatpush1.msra.mxu0 %v550
  %2864 = vmatprep.subr.mxu0 %v555
  %2865 = vmatpush1.msra.mxu0 %v554
  %2866 = vmatprep.subr.mxu0 %v559
  %2867 = vmatpush1.msra.mxu0 %v558
  %2868 = vmatprep.subr.mxu0 %v563
  %2869 = vmatpush1.msra.mxu0 %v562
  %2870 = vmatprep.subr.mxu0 %v567
  %2871 = vmatpush1.msra.mxu0 %v566
  %2872 = vmatprep.subr.mxu0 %v571
  %2873 = vmatpush1.msra.mxu0 %v570
  %2874 = vmatprep.subr.mxu0 %v575
  %2875 = vmatpush1.msra.mxu0 %v574
  %2876 = vmatprep.subr.mxu0 %v579
  %2877 = vmatpush1.msra.mxu0 %v578
  %2878 = vmatprep.mubr.f32.mxu0 %v1639
  %2879 = vmatmul.mubr.f32.gmra.mrb[0].mxu0 %v1635
  %v2880 = vpop.f32.mrb[0].mxu0
  %v2881 = vadd.f32 %v2810, %v2880
  %v2882 = vpop.f32.mrb[0].mxu0
  %v2883 = vadd.f32 %v2812, %v2882
  %2884 = vdwg.mxu0
  %2885 = vmatprep.subr.mxu0 %v583
  %2886 = vmatpush1.msra.mxu0 %v582
  %2887 = vmatprep.subr.mxu0 %v587
  %2888 = vmatpush1.msra.mxu0 %v586
  %2889 = vmatprep.subr.mxu0 %v591
  %2890 = vmatpush1.msra.mxu0 %v590
  %2891 = vmatprep.subr.mxu0 %v595
  %2892 = vmatpush1.msra.mxu0 %v594
  %2893 = vmatprep.subr.mxu0 %v599
  %2894 = vmatpush1.msra.mxu0 %v598
  %2895 = vmatprep.subr.mxu0 %v603
  %2896 = vmatpush1.msra.mxu0 %v602
  %2897 = vmatprep.subr.mxu0 %v607
  %2898 = vmatpush1.msra.mxu0 %v606
  %2899 = vmatprep.subr.mxu0 %v611
  %2900 = vmatpush1.msra.mxu0 %v610
  %2901 = vmatprep.subr.mxu0 %v615
  %2902 = vmatpush1.msra.mxu0 %v614
  %2903 = vmatprep.subr.mxu0 %v619
  %2904 = vmatpush1.msra.mxu0 %v618
  %2905 = vmatprep.subr.mxu0 %v623
  %2906 = vmatpush1.msra.mxu0 %v622
  %2907 = vmatprep.subr.mxu0 %v627
  %2908 = vmatpush1.msra.mxu0 %v626
  %2909 = vmatprep.subr.mxu0 %v631
  %2910 = vmatpush1.msra.mxu0 %v630
  %2911 = vmatprep.subr.mxu0 %v635
  %2912 = vmatpush1.msra.mxu0 %v634
  %2913 = vmatprep.subr.mxu0 %v639
  %2914 = vmatpush1.msra.mxu0 %v638
  %2915 = vmatprep.subr.mxu0 %v643
  %2916 = vmatpush1.msra.mxu0 %v642
  %2917 = vmatprep.subr.mxu0 %v647
  %2918 = vmatpush1.msra.mxu0 %v646
  %2919 = vmatprep.subr.mxu0 %v651
  %2920 = vmatpush1.msra.mxu0 %v650
  %2921 = vmatprep.subr.mxu0 %v655
  %2922 = vmatpush1.msra.mxu0 %v654
  %2923 = vmatprep.subr.mxu0 %v659
  %2924 = vmatpush1.msra.mxu0 %v658
  %2925 = vmatprep.subr.mxu0 %v663
  %2926 = vmatpush1.msra.mxu0 %v662
  %2927 = vmatprep.subr.mxu0 %v667
  %2928 = vmatpush1.msra.mxu0 %v666
  %2929 = vmatprep.subr.mxu0 %v671
  %2930 = vmatpush1.msra.mxu0 %v670
  %2931 = vmatprep.subr.mxu0 %v675
  %2932 = vmatpush1.msra.mxu0 %v674
  %2933 = vmatprep.subr.mxu0 %v679
  %2934 = vmatpush1.msra.mxu0 %v678
  %2935 = vmatprep.subr.mxu0 %v683
  %2936 = vmatpush1.msra.mxu0 %v682
  %2937 = vmatprep.subr.mxu0 %v687
  %2938 = vmatpush1.msra.mxu0 %v686
  %2939 = vmatprep.subr.mxu0 %v691
  %2940 = vmatpush1.msra.mxu0 %v690
  %2941 = vmatprep.subr.mxu0 %v695
  %2942 = vmatpush1.msra.mxu0 %v694
  %2943 = vmatprep.subr.mxu0 %v699
  %2944 = vmatpush1.msra.mxu0 %v698
  %2945 = vmatprep.subr.mxu0 %v703
  %2946 = vmatpush1.msra.mxu0 %v702
  %2947 = vmatprep.subr.mxu0 %v707
  %2948 = vmatpush1.msra.mxu0 %v706
  %2949 = vmatprep.mubr.f32.mxu0 %v1647
  %2950 = vmatmul.mubr.f32.gmra.mrb[0].mxu0 %v1643
  %v2951 = vpop.f32.mrb[0].mxu0
  %v2952 = vadd.f32 %v2881, %v2951
  %v2953 = vpop.f32.mrb[0].mxu0
  %v2954 = vadd.f32 %v2883, %v2953
  %2955 = vdwg.mxu0
  %2956 = vmatprep.subr.mxu0 %v711
  %2957 = vmatpush1.msra.mxu0 %v710
  %2958 = vmatprep.subr.mxu0 %v715
  %2959 = vmatpush1.msra.mxu0 %v714
  %2960 = vmatprep.subr.mxu0 %v719
  %2961 = vmatpush1.msra.mxu0 %v718
  %2962 = vmatprep.subr.mxu0 %v723
  %2963 = vmatpush1.msra.mxu0 %v722
  %2964 = vmatprep.subr.mxu0 %v727
  %2965 = vmatpush1.msra.mxu0 %v726
  %2966 = vmatprep.subr.mxu0 %v731
  %2967 = vmatpush1.msra.mxu0 %v730
  %2968 = vmatprep.subr.mxu0 %v735
  %2969 = vmatpush1.msra.mxu0 %v734
  %2970 = vmatprep.subr.mxu0 %v739
  %2971 = vmatpush1.msra.mxu0 %v738
  %2972 = vmatprep.subr.mxu0 %v743
  %2973 = vmatpush1.msra.mxu0 %v742
  %2974 = vmatprep.subr.mxu0 %v747
  %2975 = vmatpush1.msra.mxu0 %v746
  %2976 = vmatprep.subr.mxu0 %v751
  %2977 = vmatpush1.msra.mxu0 %v750
  %2978 = vmatprep.subr.mxu0 %v755
  %2979 = vmatpush1.msra.mxu0 %v754
  %2980 = vmatprep.subr.mxu0 %v759
  %2981 = vmatpush1.msra.mxu0 %v758
  %2982 = vmatprep.subr.mxu0 %v763
  %2983 = vmatpush1.msra.mxu0 %v762
  %2984 = vmatprep.subr.mxu0 %v767
  %2985 = vmatpush1.msra.mxu0 %v766
  %2986 = vmatprep.subr.mxu0 %v771
  %2987 = vmatpush1.msra.mxu0 %v770
  %2988 = vmatprep.subr.mxu0 %v775
  %2989 = vmatpush1.msra.mxu0 %v774
  %2990 = vmatprep.subr.mxu0 %v779
  %2991 = vmatpush1.msra.mxu0 %v778
  %2992 = vmatprep.subr.mxu0 %v783
  %2993 = vmatpush1.msra.mxu0 %v782
  %2994 = vmatprep.subr.mxu0 %v787
  %2995 = vmatpush1.msra.mxu0 %v786
  %2996 = vmatprep.subr.mxu0 %v791
  %2997 = vmatpush1.msra.mxu0 %v790
  %2998 = vmatprep.subr.mxu0 %v795
  %2999 = vmatpush1.msra.mxu0 %v794
  %3000 = vmatprep.subr.mxu0 %v799
  %3001 = vmatpush1.msra.mxu0 %v798
  %3002 = vmatprep.subr.mxu0 %v803
  %3003 = vmatpush1.msra.mxu0 %v802
  %3004 = vmatprep.subr.mxu0 %v807
  %3005 = vmatpush1.msra.mxu0 %v806
  %3006 = vmatprep.subr.mxu0 %v811
  %3007 = vmatpush1.msra.mxu0 %v810
  %3008 = vmatprep.subr.mxu0 %v815
  %3009 = vmatpush1.msra.mxu0 %v814
  %3010 = vmatprep.subr.mxu0 %v819
  %3011 = vmatpush1.msra.mxu0 %v818
  %3012 = vmatprep.subr.mxu0 %v823
  %3013 = vmatpush1.msra.mxu0 %v822
  %3014 = vmatprep.subr.mxu0 %v827
  %3015 = vmatpush1.msra.mxu0 %v826
  %3016 = vmatprep.subr.mxu0 %v831
  %3017 = vmatpush1.msra.mxu0 %v830
  %3018 = vmatprep.subr.mxu0 %v835
  %3019 = vmatpush1.msra.mxu0 %v834
  %3020 = vmatprep.mubr.f32.mxu0 %v1655
  %3021 = vmatmul.mubr.f32.gmra.mrb[0].mxu0 %v1651
  %v3022 = vpop.f32.mrb[0].mxu0
  %v3023 = vadd.f32 %v2952, %v3022
  %v3024 = vpop.f32.mrb[0].mxu0
  %v3025 = vadd.f32 %v2954, %v3024
  %3026 = vdwg.mxu0
  %3027 = vmatprep.subr.mxu0 %v839
  %3028 = vmatpush1.msra.mxu0 %v838
  %3029 = vmatprep.subr.mxu0 %v843
  %3030 = vmatpush1.msra.mxu0 %v842
  %3031 = vmatprep.subr.mxu0 %v847
  %3032 = vmatpush1.msra.mxu0 %v846
  %3033 = vmatprep.subr.mxu0 %v851
  %3034 = vmatpush1.msra.mxu0 %v850
  %3035 = vmatprep.subr.mxu0 %v855
  %3036 = vmatpush1.msra.mxu0 %v854
  %3037 = vmatprep.subr.mxu0 %v859
  %3038 = vmatpush1.msra.mxu0 %v858
  %3039 = vmatprep.subr.mxu0 %v863
  %3040 = vmatpush1.msra.mxu0 %v862
  %3041 = vmatprep.subr.mxu0 %v867
  %3042 = vmatpush1.msra.mxu0 %v866
  %3043 = vmatprep.subr.mxu0 %v871
  %3044 = vmatpush1.msra.mxu0 %v870
  %3045 = vmatprep.subr.mxu0 %v875
  %3046 = vmatpush1.msra.mxu0 %v874
  %3047 = vmatprep.subr.mxu0 %v879
  %3048 = vmatpush1.msra.mxu0 %v878
  %3049 = vmatprep.subr.mxu0 %v883
  %3050 = vmatpush1.msra.mxu0 %v882
  %3051 = vmatprep.subr.mxu0 %v887
  %3052 = vmatpush1.msra.mxu0 %v886
  %3053 = vmatprep.subr.mxu0 %v891
  %3054 = vmatpush1.msra.mxu0 %v890
  %3055 = vmatprep.subr.mxu0 %v895
  %3056 = vmatpush1.msra.mxu0 %v894
  %3057 = vmatprep.subr.mxu0 %v899
  %3058 = vmatpush1.msra.mxu0 %v898
  %3059 = vmatprep.subr.mxu0 %v903
  %3060 = vmatpush1.msra.mxu0 %v902
  %3061 = vmatprep.subr.mxu0 %v907
  %3062 = vmatpush1.msra.mxu0 %v906
  %3063 = vmatprep.subr.mxu0 %v911
  %3064 = vmatpush1.msra.mxu0 %v910
  %3065 = vmatprep.subr.mxu0 %v915
  %3066 = vmatpush1.msra.mxu0 %v914
  %3067 = vmatprep.subr.mxu0 %v919
  %3068 = vmatpush1.msra.mxu0 %v918
  %3069 = vmatprep.subr.mxu0 %v923
  %3070 = vmatpush1.msra.mxu0 %v922
  %3071 = vmatprep.subr.mxu0 %v927
  %3072 = vmatpush1.msra.mxu0 %v926
  %3073 = vmatprep.subr.mxu0 %v931
  %3074 = vmatpush1.msra.mxu0 %v930
  %3075 = vmatprep.subr.mxu0 %v935
  %3076 = vmatpush1.msra.mxu0 %v934
  %3077 = vmatprep.subr.mxu0 %v939
  %3078 = vmatpush1.msra.mxu0 %v938
  %3079 = vmatprep.subr.mxu0 %v943
  %3080 = vmatpush1.msra.mxu0 %v942
  %3081 = vmatprep.subr.mxu0 %v947
  %3082 = vmatpush1.msra.mxu0 %v946
  %3083 = vmatprep.subr.mxu0 %v951
  %3084 = vmatpush1.msra.mxu0 %v950
  %3085 = vmatprep.subr.mxu0 %v955
  %3086 = vmatpush1.msra.mxu0 %v954
  %3087 = vmatprep.subr.mxu0 %v959
  %3088 = vmatpush1.msra.mxu0 %v958
  %3089 = vmatprep.subr.mxu0 %v963
  %3090 = vmatpush1.msra.mxu0 %v962
  %3091 = vmatprep.mubr.f32.mxu0 %v1663
  %3092 = vmatmul.mubr.f32.gmra.mrb[0].mxu0 %v1659
  %v3093 = vpop.f32.mrb[0].mxu0
  %v3094 = vadd.f32 %v3023, %v3093
  %v3095 = vpop.f32.mrb[0].mxu0
  %v3096 = vadd.f32 %v3025, %v3095
  %3097 = vdwg.mxu0
  %3098 = vmatprep.subr.mxu0 %v967
  %3099 = vmatpush1.msra.mxu0 %v966
  %3100 = vmatprep.subr.mxu0 %v971
  %3101 = vmatpush1.msra.mxu0 %v970
  %3102 = vmatprep.subr.mxu0 %v975
  %3103 = vmatpush1.msra.mxu0 %v974
  %3104 = vmatprep.subr.mxu0 %v979
  %3105 = vmatpush1.msra.mxu0 %v978
  %3106 = vmatprep.subr.mxu0 %v983
  %3107 = vmatpush1.msra.mxu0 %v982
  %3108 = vmatprep.subr.mxu0 %v987
  %3109 = vmatpush1.msra.mxu0 %v986
  %3110 = vmatprep.subr.mxu0 %v991
  %3111 = vmatpush1.msra.mxu0 %v990
  %3112 = vmatprep.subr.mxu0 %v995
  %3113 = vmatpush1.msra.mxu0 %v994
  %3114 = vmatprep.subr.mxu0 %v999
  %3115 = vmatpush1.msra.mxu0 %v998
  %3116 = vmatprep.subr.mxu0 %v1003
  %3117 = vmatpush1.msra.mxu0 %v1002
  %3118 = vmatprep.subr.mxu0 %v1007
  %3119 = vmatpush1.msra.mxu0 %v1006
  %3120 = vmatprep.subr.mxu0 %v1011
  %3121 = vmatpush1.msra.mxu0 %v1010
  %3122 = vmatprep.subr.mxu0 %v1015
  %3123 = vmatpush1.msra.mxu0 %v1014
  %3124 = vmatprep.subr.mxu0 %v1019
  %3125 = vmatpush1.msra.mxu0 %v1018
  %3126 = vmatprep.subr.mxu0 %v1023
  %3127 = vmatpush1.msra.mxu0 %v1022
  %3128 = vmatprep.subr.mxu0 %v1027
  %3129 = vmatpush1.msra.mxu0 %v1026
  %3130 = vmatprep.subr.mxu0 %v1031
  %3131 = vmatpush1.msra.mxu0 %v1030
  %3132 = vmatprep.subr.mxu0 %v1035
  %3133 = vmatpush1.msra.mxu0 %v1034
  %3134 = vmatprep.subr.mxu0 %v1039
  %3135 = vmatpush1.msra.mxu0 %v1038
  %3136 = vmatprep.subr.mxu0 %v1043
  %3137 = vmatpush1.msra.mxu0 %v1042
  %3138 = vmatprep.subr.mxu0 %v1047
  %3139 = vmatpush1.msra.mxu0 %v1046
  %3140 = vmatprep.subr.mxu0 %v1051
  %3141 = vmatpush1.msra.mxu0 %v1050
  %3142 = vmatprep.subr.mxu0 %v1055
  %3143 = vmatpush1.msra.mxu0 %v1054
  %3144 = vmatprep.subr.mxu0 %v1059
  %3145 = vmatpush1.msra.mxu0 %v1058
  %3146 = vmatprep.subr.mxu0 %v1063
  %3147 = vmatpush1.msra.mxu0 %v1062
  %3148 = vmatprep.subr.mxu0 %v1067
  %3149 = vmatpush1.msra.mxu0 %v1066
  %3150 = vmatprep.subr.mxu0 %v1071
  %3151 = vmatpush1.msra.mxu0 %v1070
  %3152 = vmatprep.subr.mxu0 %v1075
  %3153 = vmatpush1.msra.mxu0 %v1074
  %3154 = vmatprep.subr.mxu0 %v1079
  %3155 = vmatpush1.msra.mxu0 %v1078
  %3156 = vmatprep.subr.mxu0 %v1083
  %3157 = vmatpush1.msra.mxu0 %v1082
  %3158 = vmatprep.subr.mxu0 %v1087
  %3159 = vmatpush1.msra.mxu0 %v1086
  %3160 = vmatprep.subr.mxu0 %v1091
  %3161 = vmatpush1.msra.mxu0 %v1090
  %3162 = vmatprep.mubr.f32.mxu0 %v1671
  %3163 = vmatmul.mubr.f32.gmra.mrb[0].mxu0 %v1667
  %v3164 = vpop.f32.mrb[0].mxu0
  %v3165 = vadd.f32 %v3094, %v3164
  %v3166 = vpop.f32.mrb[0].mxu0
  %v3167 = vadd.f32 %v3096, %v3166
  %3168 = vdwg.mxu0
  %3169 = vmatprep.subr.mxu0 %v1095
  %3170 = vmatpush1.msra.mxu0 %v1094
  %3171 = vmatprep.subr.mxu0 %v1099
  %3172 = vmatpush1.msra.mxu0 %v1098
  %3173 = vmatprep.subr.mxu0 %v1103
  %3174 = vmatpush1.msra.mxu0 %v1102
  %3175 = vmatprep.subr.mxu0 %v1107
  %3176 = vmatpush1.msra.mxu0 %v1106
  %3177 = vmatprep.subr.mxu0 %v1111
  %3178 = vmatpush1.msra.mxu0 %v1110
  %3179 = vmatprep.subr.mxu0 %v1115
  %3180 = vmatpush1.msra.mxu0 %v1114
  %3181 = vmatprep.subr.mxu0 %v1119
  %3182 = vmatpush1.msra.mxu0 %v1118
  %3183 = vmatprep.subr.mxu0 %v1123
  %3184 = vmatpush1.msra.mxu0 %v1122
  %3185 = vmatprep.subr.mxu0 %v1127
  %3186 = vmatpush1.msra.mxu0 %v1126
  %3187 = vmatprep.subr.mxu0 %v1131
  %3188 = vmatpush1.msra.mxu0 %v1130
  %3189 = vmatprep.subr.mxu0 %v1135
  %3190 = vmatpush1.msra.mxu0 %v1134
  %3191 = vmatprep.subr.mxu0 %v1139
  %3192 = vmatpush1.msra.mxu0 %v1138
  %3193 = vmatprep.subr.mxu0 %v1143
  %3194 = vmatpush1.msra.mxu0 %v1142
  %3195 = vmatprep.subr.mxu0 %v1147
  %3196 = vmatpush1.msra.mxu0 %v1146
  %3197 = vmatprep.subr.mxu0 %v1151
  %3198 = vmatpush1.msra.mxu0 %v1150
  %3199 = vmatprep.subr.mxu0 %v1155
  %3200 = vmatpush1.msra.mxu0 %v1154
  %3201 = vmatprep.subr.mxu0 %v1159
  %3202 = vmatpush1.msra.mxu0 %v1158
  %3203 = vmatprep.subr.mxu0 %v1163
  %3204 = vmatpush1.msra.mxu0 %v1162
  %3205 = vmatprep.subr.mxu0 %v1167
  %3206 = vmatpush1.msra.mxu0 %v1166
  %3207 = vmatprep.subr.mxu0 %v1171
  %3208 = vmatpush1.msra.mxu0 %v1170
  %3209 = vmatprep.subr.mxu0 %v1175
  %3210 = vmatpush1.msra.mxu0 %v1174
  %3211 = vmatprep.subr.mxu0 %v1179
  %3212 = vmatpush1.msra.mxu0 %v1178
  %3213 = vmatprep.subr.mxu0 %v1183
  %3214 = vmatpush1.msra.mxu0 %v1182
  %3215 = vmatprep.subr.mxu0 %v1187
  %3216 = vmatpush1.msra.mxu0 %v1186
  %3217 = vmatprep.subr.mxu0 %v1191
  %3218 = vmatpush1.msra.mxu0 %v1190
  %3219 = vmatprep.subr.mxu0 %v1195
  %3220 = vmatpush1.msra.mxu0 %v1194
  %3221 = vmatprep.subr.mxu0 %v1199
  %3222 = vmatpush1.msra.mxu0 %v1198
  %3223 = vmatprep.subr.mxu0 %v1203
  %3224 = vmatpush1.msra.mxu0 %v1202
  %3225 = vmatprep.subr.mxu0 %v1207
  %3226 = vmatpush1.msra.mxu0 %v1206
  %3227 = vmatprep.subr.mxu0 %v1211
  %3228 = vmatpush1.msra.mxu0 %v1210
  %3229 = vmatprep.subr.mxu0 %v1215
  %3230 = vmatpush1.msra.mxu0 %v1214
  %3231 = vmatprep.subr.mxu0 %v1219
  %3232 = vmatpush1.msra.mxu0 %v1218
  %3233 = vmatprep.mubr.f32.mxu0 %v1679
  %3234 = vmatmul.mubr.f32.gmra.mrb[0].mxu0 %v1675
  %v3235 = vpop.f32.mrb[0].mxu0
  %v3236 = vadd.f32 %v3165, %v3235
  %v3237 = vpop.f32.mrb[0].mxu0
  %v3238 = vadd.f32 %v3167, %v3237
  %3239 = vdwg.mxu0
  %3240 = vmatprep.subr.mxu0 %v1223
  %3241 = vmatpush1.msra.mxu0 %v1222
  %3242 = vmatprep.subr.mxu0 %v1227
  %3243 = vmatpush1.msra.mxu0 %v1226
  %3244 = vmatprep.subr.mxu0 %v1231
  %3245 = vmatpush1.msra.mxu0 %v1230
  %3246 = vmatprep.subr.mxu0 %v1235
  %3247 = vmatpush1.msra.mxu0 %v1234
  %3248 = vmatprep.subr.mxu0 %v1239
  %3249 = vmatpush1.msra.mxu0 %v1238
  %3250 = vmatprep.subr.mxu0 %v1243
  %3251 = vmatpush1.msra.mxu0 %v1242
  %3252 = vmatprep.subr.mxu0 %v1247
  %3253 = vmatpush1.msra.mxu0 %v1246
  %3254 = vmatprep.subr.mxu0 %v1251
  %3255 = vmatpush1.msra.mxu0 %v1250
  %3256 = vmatprep.subr.mxu0 %v1255
  %3257 = vmatpush1.msra.mxu0 %v1254
  %3258 = vmatprep.subr.mxu0 %v1259
  %3259 = vmatpush1.msra.mxu0 %v1258
  %3260 = vmatprep.subr.mxu0 %v1263
  %3261 = vmatpush1.msra.mxu0 %v1262
  %3262 = vmatprep.subr.mxu0 %v1267
  %3263 = vmatpush1.msra.mxu0 %v1266
  %3264 = vmatprep.subr.mxu0 %v1271
  %3265 = vmatpush1.msra.mxu0 %v1270
  %3266 = vmatprep.subr.mxu0 %v1275
  %3267 = vmatpush1.msra.mxu0 %v1274
  %3268 = vmatprep.subr.mxu0 %v1279
  %3269 = vmatpush1.msra.mxu0 %v1278
  %3270 = vmatprep.subr.mxu0 %v1283
  %3271 = vmatpush1.msra.mxu0 %v1282
  %3272 = vmatprep.subr.mxu0 %v1287
  %3273 = vmatpush1.msra.mxu0 %v1286
  %3274 = vmatprep.subr.mxu0 %v1291
  %3275 = vmatpush1.msra.mxu0 %v1290
  %3276 = vmatprep.subr.mxu0 %v1295
  %3277 = vmatpush1.msra.mxu0 %v1294
  %3278 = vmatprep.subr.mxu0 %v1299
  %3279 = vmatpush1.msra.mxu0 %v1298
  %3280 = vmatprep.subr.mxu0 %v1303
  %3281 = vmatpush1.msra.mxu0 %v1302
  %3282 = vmatprep.subr.mxu0 %v1307
  %3283 = vmatpush1.msra.mxu0 %v1306
  %3284 = vmatprep.subr.mxu0 %v1311
  %3285 = vmatpush1.msra.mxu0 %v1310
  %3286 = vmatprep.subr.mxu0 %v1315
  %3287 = vmatpush1.msra.mxu0 %v1314
  %3288 = vmatprep.subr.mxu0 %v1319
  %3289 = vmatpush1.msra.mxu0 %v1318
  %3290 = vmatprep.subr.mxu0 %v1323
  %3291 = vmatpush1.msra.mxu0 %v1322
  %3292 = vmatprep.subr.mxu0 %v1327
  %3293 = vmatpush1.msra.mxu0 %v1326
  %3294 = vmatprep.subr.mxu0 %v1331
  %3295 = vmatpush1.msra.mxu0 %v1330
  %3296 = vmatprep.subr.mxu0 %v1335
  %3297 = vmatpush1.msra.mxu0 %v1334
  %3298 = vmatprep.subr.mxu0 %v1339
  %3299 = vmatpush1.msra.mxu0 %v1338
  %3300 = vmatprep.subr.mxu0 %v1343
  %3301 = vmatpush1.msra.mxu0 %v1342
  %3302 = vmatprep.subr.mxu0 %v1347
  %3303 = vmatpush1.msra.mxu0 %v1346
  %3304 = vmatprep.mubr.f32.mxu0 %v1687
  %3305 = vmatmul.mubr.f32.gmra.mrb[0].mxu0 %v1683
  %v3306 = vpop.f32.mrb[0].mxu0
  %v3307 = vadd.f32 %v3236, %v3306
  %v3308 = vpop.f32.mrb[0].mxu0
  %v3309 = vadd.f32 %v3238, %v3308
  %3310 = vdwg.mxu0
  %3311 = vmatprep.subr.mxu0 %v1351
  %3312 = vmatpush1.msra.mxu0 %v1350
  %3313 = vmatprep.subr.mxu0 %v1355
  %3314 = vmatpush1.msra.mxu0 %v1354
  %3315 = vmatprep.subr.mxu0 %v1359
  %3316 = vmatpush1.msra.mxu0 %v1358
  %3317 = vmatprep.subr.mxu0 %v1363
  %3318 = vmatpush1.msra.mxu0 %v1362
  %3319 = vmatprep.subr.mxu0 %v1367
  %3320 = vmatpush1.msra.mxu0 %v1366
  %3321 = vmatprep.subr.mxu0 %v1371
  %3322 = vmatpush1.msra.mxu0 %v1370
  %3323 = vmatprep.subr.mxu0 %v1375
  %3324 = vmatpush1.msra.mxu0 %v1374
  %3325 = vmatprep.subr.mxu0 %v1379
  %3326 = vmatpush1.msra.mxu0 %v1378
  %3327 = vmatprep.subr.mxu0 %v1383
  %3328 = vmatpush1.msra.mxu0 %v1382
  %3329 = vmatprep.subr.mxu0 %v1387
  %3330 = vmatpush1.msra.mxu0 %v1386
  %3331 = vmatprep.subr.mxu0 %v1391
  %3332 = vmatpush1.msra.mxu0 %v1390
  %3333 = vmatprep.subr.mxu0 %v1395
  %3334 = vmatpush1.msra.mxu0 %v1394
  %3335 = vmatprep.subr.mxu0 %v1399
  %3336 = vmatpush1.msra.mxu0 %v1398
  %3337 = vmatprep.subr.mxu0 %v1403
  %3338 = vmatpush1.msra.mxu0 %v1402
  %3339 = vmatprep.subr.mxu0 %v1407
  %3340 = vmatpush1.msra.mxu0 %v1406
  %3341 = vmatprep.subr.mxu0 %v1411
  %3342 = vmatpush1.msra.mxu0 %v1410
  %3343 = vmatprep.subr.mxu0 %v1415
  %3344 = vmatpush1.msra.mxu0 %v1414
  %3345 = vmatprep.subr.mxu0 %v1419
  %3346 = vmatpush1.msra.mxu0 %v1418
  %3347 = vmatprep.subr.mxu0 %v1423
  %3348 = vmatpush1.msra.mxu0 %v1422
  %3349 = vmatprep.subr.mxu0 %v1427
  %3350 = vmatpush1.msra.mxu0 %v1426
  %3351 = vmatprep.subr.mxu0 %v1431
  %3352 = vmatpush1.msra.mxu0 %v1430
  %3353 = vmatprep.subr.mxu0 %v1435
  %3354 = vmatpush1.msra.mxu0 %v1434
  %3355 = vmatprep.subr.mxu0 %v1439
  %3356 = vmatpush1.msra.mxu0 %v1438
  %3357 = vmatprep.subr.mxu0 %v1443
  %3358 = vmatpush1.msra.mxu0 %v1442
  %3359 = vmatprep.subr.mxu0 %v1447
  %3360 = vmatpush1.msra.mxu0 %v1446
  %3361 = vmatprep.subr.mxu0 %v1451
  %3362 = vmatpush1.msra.mxu0 %v1450
  %3363 = vmatprep.subr.mxu0 %v1455
  %3364 = vmatpush1.msra.mxu0 %v1454
  %3365 = vmatprep.subr.mxu0 %v1459
  %3366 = vmatpush1.msra.mxu0 %v1458
  %3367 = vmatprep.subr.mxu0 %v1463
  %3368 = vmatpush1.msra.mxu0 %v1462
  %3369 = vmatprep.subr.mxu0 %v1467
  %3370 = vmatpush1.msra.mxu0 %v1466
  %3371 = vmatprep.subr.mxu0 %v1471
  %3372 = vmatpush1.msra.mxu0 %v1470
  %3373 = vmatprep.subr.mxu0 %v1475
  %3374 = vmatpush1.msra.mxu0 %v1474
  %3375 = vmatprep.mubr.f32.mxu0 %v1695
  %3376 = vmatmul.mubr.f32.gmra.mrb[0].mxu0 %v1691
  %v3377 = vpop.f32.mrb[0].mxu0
  %v3378 = vadd.f32 %v3307, %v3377
  %v3379 = vpop.f32.mrb[0].mxu0
  %v3380 = vadd.f32 %v3309, %v3379
  %3381 = vdwg.mxu0
  %3382 = vmatprep.subr.mxu0 %v1479
  %3383 = vmatpush1.msra.mxu0 %v1478
  %3384 = vmatprep.subr.mxu0 %v1483
  %3385 = vmatpush1.msra.mxu0 %v1482
  %3386 = vmatprep.subr.mxu0 %v1487
  %3387 = vmatpush1.msra.mxu0 %v1486
  %3388 = vmatprep.subr.mxu0 %v1491
  %3389 = vmatpush1.msra.mxu0 %v1490
  %3390 = vmatprep.subr.mxu0 %v1495
  %3391 = vmatpush1.msra.mxu0 %v1494
  %3392 = vmatprep.subr.mxu0 %v1499
  %3393 = vmatpush1.msra.mxu0 %v1498
  %3394 = vmatprep.subr.mxu0 %v1503
  %3395 = vmatpush1.msra.mxu0 %v1502
  %3396 = vmatprep.subr.mxu0 %v1507
  %3397 = vmatpush1.msra.mxu0 %v1506
  %3398 = vmatprep.subr.mxu0 %v1511
  %3399 = vmatpush1.msra.mxu0 %v1510
  %3400 = vmatprep.subr.mxu0 %v1515
  %3401 = vmatpush1.msra.mxu0 %v1514
  %3402 = vmatprep.subr.mxu0 %v1519
  %3403 = vmatpush1.msra.mxu0 %v1518
  %3404 = vmatprep.subr.mxu0 %v1523
  %3405 = vmatpush1.msra.mxu0 %v1522
  %3406 = vmatprep.subr.mxu0 %v1527
  %3407 = vmatpush1.msra.mxu0 %v1526
  %3408 = vmatprep.subr.mxu0 %v1531
  %3409 = vmatpush1.msra.mxu0 %v1530
  %3410 = vmatprep.subr.mxu0 %v1535
  %3411 = vmatpush1.msra.mxu0 %v1534
  %3412 = vmatprep.subr.mxu0 %v1539
  %3413 = vmatpush1.msra.mxu0 %v1538
  %3414 = vmatprep.subr.mxu0 %v1543
  %3415 = vmatpush1.msra.mxu0 %v1542
  %3416 = vmatprep.subr.mxu0 %v1547
  %3417 = vmatpush1.msra.mxu0 %v1546
  %3418 = vmatprep.subr.mxu0 %v1551
  %3419 = vmatpush1.msra.mxu0 %v1550
  %3420 = vmatprep.subr.mxu0 %v1555
  %3421 = vmatpush1.msra.mxu0 %v1554
  %3422 = vmatprep.subr.mxu0 %v1559
  %3423 = vmatpush1.msra.mxu0 %v1558
  %3424 = vmatprep.subr.mxu0 %v1563
  %3425 = vmatpush1.msra.mxu0 %v1562
  %3426 = vmatprep.subr.mxu0 %v1567
  %3427 = vmatpush1.msra.mxu0 %v1566
  %3428 = vmatprep.subr.mxu0 %v1571
  %3429 = vmatpush1.msra.mxu0 %v1570
  %3430 = vmatprep.subr.mxu0 %v1575
  %3431 = vmatpush1.msra.mxu0 %v1574
  %3432 = vmatprep.subr.mxu0 %v1579
  %3433 = vmatpush1.msra.mxu0 %v1578
  %3434 = vmatprep.subr.mxu0 %v1583
  %3435 = vmatpush1.msra.mxu0 %v1582
  %3436 = vmatprep.subr.mxu0 %v1587
  %3437 = vmatpush1.msra.mxu0 %v1586
  %3438 = vmatprep.subr.mxu0 %v1591
  %3439 = vmatpush1.msra.mxu0 %v1590
  %3440 = vmatprep.subr.mxu0 %v1595
  %3441 = vmatpush1.msra.mxu0 %v1594
  %3442 = vmatprep.subr.mxu0 %v1599
  %3443 = vmatpush1.msra.mxu0 %v1598
  %3444 = vmatprep.subr.mxu0 %v1603
  %3445 = vmatpush1.msra.mxu0 %v1602
  %3446 = vmatprep.mubr.f32.mxu0 %v1703
  %3447 = vmatmul.mubr.f32.gmra.mrb[0].mxu0 %v1699
  %v3448 = vpop.f32.mrb[0].mxu0
  %v3449 = vadd.f32 %v3378, %v3448
  %v3450 = vpop.f32.mrb[0].mxu0
  %v3451 = vadd.f32 %v3380, %v3450
  %3452 = vdwg.mxu0
  %v3453 = vmax.f32 %v2597, 0.0
  %v3454 = vmax.f32 %v2599, 0.0
  %v3455 = vmax.f32 %v3449, 0.0
  %v3456 = vmax.f32 %v3451, 0.0
  %v3457 = vld [vmem:[%s5] sm:$0xff]
  %v3458 = vld [vmem:[%s5 + $0x8] sm:$0xff]
  %v3459 = vld [vmem:[%s5 + $0x10] sm:$0xff]
  %v3460 = vld [vmem:[%s5 + $0x18] sm:$0xff]
  %v3461 = vld [vmem:[%s5 + $0x20] sm:$0xff]
  %v3462 = vld [vmem:[%s5 + $0x28] sm:$0xff]
  %v3463 = vld [vmem:[%s5 + $0x30] sm:$0xff]
  %v3464 = vld [vmem:[%s5 + $0x38] sm:$0xff]
  %v3465 = vld [vmem:[%s5 + $0x40] sm:$0xff]
  %v3466 = vld [vmem:[%s5 + $0x48] sm:$0xff]
  %v3467 = vld [vmem:[%s5 + $0x50] sm:$0xff]
  %v3468 = vld [vmem:[%s5 + $0x58] sm:$0xff]
  %v3469 = vld [vmem:[%s5 + $0x60] sm:$0xff]
  %v3470 = vld [vmem:[%s5 + $0x68] sm:$0xff]
  %v3471 = vld [vmem:[%s5 + $0x70] sm:$0xff]
  %v3472 = vld [vmem:[%s5 + $0x78] sm:$0xff]
  %v3473 = vld [vmem:[%s5 + $0x80] sm:$0xff]
  %v3474 = vld [vmem:[%s5 + $0x88] sm:$0xff]
  %v3475 = vld [vmem:[%s5 + $0x90] sm:$0xff]
  %v3476 = vld [vmem:[%s5 + $0x98] sm:$0xff]
  %v3477 = vld [vmem:[%s5 + $0xa0] sm:$0xff]
  %v3478 = vld [vmem:[%s5 + $0xa8] sm:$0xff]
  %v3479 = vld [vmem:[%s5 + $0xb0] sm:$0xff]
  %v3480 = vld [vmem:[%s5 + $0xb8] sm:$0xff]
  %v3481 = vld [vmem:[%s5 + $0xc0] sm:$0xff]
  %v3482 = vld [vmem:[%s5 + $0xc8] sm:$0xff]
  %v3483 = vld [vmem:[%s5 + $0xd0] sm:$0xff]
  %v3484 = vld [vmem:[%s5 + $0xd8] sm:$0xff]
  %v3485 = vld [vmem:[%s5 + $0xe0] sm:$0xff]
  %v3486 = vld [vmem:[%s5 + $0xe8] sm:$0xff]
  %v3487 = vld [vmem:[%s5 + $0xf0] sm:$0xff]
  %v3488 = vld [vmem:[%s5 + $0xf8] sm:$0xff]
  %v3489 = vld [vmem:[%s5 + $0x100] sm:$0xff]
  %v3490 = vld [vmem:[%s5 + $0x108] sm:$0xff]
  %v3491 = vld [vmem:[%s5 + $0x110] sm:$0xff]
  %v3492 = vld [vmem:[%s5 + $0x118] sm:$0xff]
  %v3493 = vld [vmem:[%s5 + $0x120] sm:$0xff]
  %v3494 = vld [vmem:[%s5 + $0x128] sm:$0xff]
  %v3495 = vld [vmem:[%s5 + $0x130] sm:$0xff]
  %v3496 = vld [vmem:[%s5 + $0x138] sm:$0xff]
  %v3497 = vld [vmem:[%s5 + $0x140] sm:$0xff]
  %v3498 = vld [vmem:[%s5 + $0x148] sm:$0xff]
  %v3499 = vld [vmem:[%s5 + $0x150] sm:$0xff]
  %v3500 = vld [vmem:[%s5 + $0x158] sm:$0xff]
  %v3501 = vld [vmem:[%s5 + $0x160] sm:$0xff]
  %v3502 = vld [vmem:[%s5 + $0x168] sm:$0xff]
  %v3503 = vld [vmem:[%s5 + $0x170] sm:$0xff]
  %v3504 = vld [vmem:[%s5 + $0x178] sm:$0xff]
  %v3505 = vld [vmem:[%s5 + $0x180] sm:$0xff]
  %v3506 = vld [vmem:[%s5 + $0x188] sm:$0xff]
  %v3507 = vld [vmem:[%s5 + $0x190] sm:$0xff]
  %v3508 = vld [vmem:[%s5 + $0x198] sm:$0xff]
  %v3509 = vld [vmem:[%s5 + $0x1a0] sm:$0xff]
  %v3510 = vld [vmem:[%s5 + $0x1a8] sm:$0xff]
  %v3511 = vld [vmem:[%s5 + $0x1b0] sm:$0xff]
  %v3512 = vld [vmem:[%s5 + $0x1b8] sm:$0xff]
  %v3513 = vld [vmem:[%s5 + $0x1c0] sm:$0xff]
  %v3514 = vld [vmem:[%s5 + $0x1c8] sm:$0xff]
  %v3515 = vld [vmem:[%s5 + $0x1d0] sm:$0xff]
  %v3516 = vld [vmem:[%s5 + $0x1d8] sm:$0xff]
  %v3517 = vld [vmem:[%s5 + $0x1e0] sm:$0xff]
  %v3518 = vld [vmem:[%s5 + $0x1e8] sm:$0xff]
  %v3519 = vld [vmem:[%s5 + $0x1f0] sm:$0xff]
  %v3520 = vld [vmem:[%s5 + $0x1f8] sm:$0xff]
  %v3521 = vld [vmem:[%s5 + $0x200] sm:$0xff]
  %v3522 = vld [vmem:[%s5 + $0x208] sm:$0xff]
  %v3523 = vld [vmem:[%s5 + $0x210] sm:$0xff]
  %v3524 = vld [vmem:[%s5 + $0x218] sm:$0xff]
  %v3525 = vld [vmem:[%s5 + $0x220] sm:$0xff]
  %v3526 = vld [vmem:[%s5 + $0x228] sm:$0xff]
  %v3527 = vld [vmem:[%s5 + $0x230] sm:$0xff]
  %v3528 = vld [vmem:[%s5 + $0x238] sm:$0xff]
  %v3529 = vld [vmem:[%s5 + $0x240] sm:$0xff]
  %v3530 = vld [vmem:[%s5 + $0x248] sm:$0xff]
  %v3531 = vld [vmem:[%s5 + $0x250] sm:$0xff]
  %v3532 = vld [vmem:[%s5 + $0x258] sm:$0xff]
  %v3533 = vld [vmem:[%s5 + $0x260] sm:$0xff]
  %v3534 = vld [vmem:[%s5 + $0x268] sm:$0xff]
  %v3535 = vld [vmem:[%s5 + $0x270] sm:$0xff]
  %v3536 = vld [vmem:[%s5 + $0x278] sm:$0xff]
  %v3537 = vld [vmem:[%s5 + $0x280] sm:$0xff]
  %v3538 = vld [vmem:[%s5 + $0x288] sm:$0xff]
  %v3539 = vld [vmem:[%s5 + $0x290] sm:$0xff]
  %v3540 = vld [vmem:[%s5 + $0x298] sm:$0xff]
  %v3541 = vld [vmem:[%s5 + $0x2a0] sm:$0xff]
  %v3542 = vld [vmem:[%s5 + $0x2a8] sm:$0xff]
  %v3543 = vld [vmem:[%s5 + $0x2b0] sm:$0xff]
  %v3544 = vld [vmem:[%s5 + $0x2b8] sm:$0xff]
  %v3545 = vld [vmem:[%s5 + $0x2c0] sm:$0xff]
  %v3546 = vld [vmem:[%s5 + $0x2c8] sm:$0xff]
  %v3547 = vld [vmem:[%s5 + $0x2d0] sm:$0xff]
  %v3548 = vld [vmem:[%s5 + $0x2d8] sm:$0xff]
  %v3549 = vld [vmem:[%s5 + $0x2e0] sm:$0xff]
  %v3550 = vld [vmem:[%s5 + $0x2e8] sm:$0xff]
  %v3551 = vld [vmem:[%s5 + $0x2f0] sm:$0xff]
  %v3552 = vld [vmem:[%s5 + $0x2f8] sm:$0xff]
  %v3553 = vld [vmem:[%s5 + $0x300] sm:$0xff]
  %v3554 = vld [vmem:[%s5 + $0x308] sm:$0xff]
  %v3555 = vld [vmem:[%s6] sm:$0x3]
  %v3557 = vlaneseq
  %v3558 = vshrl.u32 %v3557, 7
  %v3559 = vsub.s32 0, %v3558
  %v3560 = vrot.slane %v3555, %v3559
  %v3561 = vlaneseq
  %v3562 = vshrl.u32 %v3561, 7
  %v3563 = vsub.s32 1, %v3562
  %v3564 = vrot.slane %v3555, %v3563
  %vm3567 = vcmask 64512
  %v3569 = vsel %vm3567, %v3456, 0
  %3571 = vmatprep.subr.mxu0 %v3458
  %3572 = vmatpush1.msra.mxu0 %v3457
  %3573 = vmatprep.subr.mxu0 %v3460
  %3574 = vmatpush1.msra.mxu0 %v3459
  %3575 = vmatprep.subr.mxu0 %v3462
  %3576 = vmatpush1.msra.mxu0 %v3461
  %3577 = vmatprep.subr.mxu0 %v3464
  %3578 = vmatpush1.msra.mxu0 %v3463
  %3579 = vmatprep.subr.mxu0 %v3466
  %3580 = vmatpush1.msra.mxu0 %v3465
  %3581 = vmatprep.subr.mxu0 %v3468
  %3582 = vmatpush1.msra.mxu0 %v3467
  %3583 = vmatprep.subr.mxu0 %v3470
  %3584 = vmatpush1.msra.mxu0 %v3469
  %3585 = vmatprep.subr.mxu0 %v3472
  %3586 = vmatpush1.msra.mxu0 %v3471
  %3587 = vmatprep.subr.mxu0 %v3474
  %3588 = vmatpush1.msra.mxu0 %v3473
  %3589 = vmatprep.subr.mxu0 %v3476
  %3590 = vmatpush1.msra.mxu0 %v3475
  %3591 = vmatprep.subr.mxu0 %v3478
  %3592 = vmatpush1.msra.mxu0 %v3477
  %3593 = vmatprep.subr.mxu0 %v3480
  %3594 = vmatpush1.msra.mxu0 %v3479
  %3595 = vmatprep.subr.mxu0 %v3482
  %3596 = vmatpush1.msra.mxu0 %v3481
  %3597 = vmatprep.subr.mxu0 %v3484
  %3598 = vmatpush1.msra.mxu0 %v3483
  %3599 = vmatprep.subr.mxu0 %v3486
  %3600 = vmatpush1.msra.mxu0 %v3485
  %3601 = vmatprep.subr.mxu0 %v3488
  %3602 = vmatpush1.msra.mxu0 %v3487
  %3603 = vmatprep.subr.mxu0 %v3490
  %3604 = vmatpush1.msra.mxu0 %v3489
  %3605 = vmatprep.subr.mxu0 %v3492
  %3606 = vmatpush1.msra.mxu0 %v3491
  %3607 = vmatprep.subr.mxu0 %v3494
  %3608 = vmatpush1.msra.mxu0 %v3493
  %3609 = vmatprep.subr.mxu0 %v3496
  %3610 = vmatpush1.msra.mxu0 %v3495
  %3611 = vmatprep.subr.mxu0 %v3498
  %3612 = vmatpush1.msra.mxu0 %v3497
  %3613 = vmatprep.subr.mxu0 %v3500
  %3614 = vmatpush1.msra.mxu0 %v3499
  %3615 = vmatprep.subr.mxu0 %v3502
  %3616 = vmatpush1.msra.mxu0 %v3501
  %3617 = vmatprep.subr.mxu0 %v3504
  %3618 = vmatpush1.msra.mxu0 %v3503
  %3619 = vmatprep.subr.mxu0 %v3506
  %3620 = vmatpush1.msra.mxu0 %v3505
  %3621 = vmatprep.subr.mxu0 %v3508
  %3622 = vmatpush1.msra.mxu0 %v3507
  %3623 = vmatprep.subr.mxu0 %v3510
  %3624 = vmatpush1.msra.mxu0 %v3509
  %3625 = vmatprep.subr.mxu0 %v3512
  %3626 = vmatpush1.msra.mxu0 %v3511
  %3627 = vmatprep.subr.mxu0 %v3514
  %3628 = vmatpush1.msra.mxu0 %v3513
  %3629 = vmatprep.subr.mxu0 %v3516
  %3630 = vmatpush1.msra.mxu0 %v3515
  %3631 = vmatprep.subr.mxu0 %v3518
  %3632 = vmatpush1.msra.mxu0 %v3517
  %3633 = vmatprep.subr.mxu0 %v3520
  %3634 = vmatpush1.msra.mxu0 %v3519
  %3635 = vmatprep.mubr.f32.mxu0 %v3454
  %3636 = vmatmul.mubr.f32.gmra.mrb[0].mxu0 %v3453
  %v3637 = vpop.f32.mrb[0].mxu0
  %v3638 = vadd.f32 %v3560, %v3637
  %v3639 = vpop.f32.mrb[0].mxu0
  %v3640 = vadd.f32 %v3564, %v3639
  %3641 = vdwg.mxu0
  %3642 = vmatprep.subr.mxu0 %v3522
  %3643 = vmatpush1.msra.mxu0 %v3521
  %3644 = vmatprep.subr.mxu0 %v3524
  %3645 = vmatpush1.msra.mxu0 %v3523
  %3646 = vmatprep.subr.mxu0 %v3526
  %3647 = vmatpush1.msra.mxu0 %v3525
  %3648 = vmatprep.subr.mxu0 %v3528
  %3649 = vmatpush1.msra.mxu0 %v3527
  %3650 = vmatprep.subr.mxu0 %v3530
  %3651 = vmatpush1.msra.mxu0 %v3529
  %3652 = vmatprep.subr.mxu0 %v3532
  %3653 = vmatpush1.msra.mxu0 %v3531
  %3654 = vmatprep.subr.mxu0 %v3534
  %3655 = vmatpush1.msra.mxu0 %v3533
  %3656 = vmatprep.subr.mxu0 %v3536
  %3657 = vmatpush1.msra.mxu0 %v3535
  %3658 = vmatprep.subr.mxu0 %v3538
  %3659 = vmatpush1.msra.mxu0 %v3537
  %3660 = vmatprep.subr.mxu0 %v3540
  %3661 = vmatpush1.msra.mxu0 %v3539
  %3662 = vmatprep.subr.mxu0 %v3542
  %3663 = vmatpush1.msra.mxu0 %v3541
  %3664 = vmatprep.subr.mxu0 %v3544
  %3665 = vmatpush1.msra.mxu0 %v3543
  %3666 = vmatprep.subr.mxu0 %v3546
  %3667 = vmatpush1.msra.mxu0 %v3545
  %3668 = vmatprep.subr.mxu0 %v3548
  %3669 = vmatpush1.msra.mxu0 %v3547
  %3670 = vmatprep.subr.mxu0 %v3550
  %3671 = vmatpush1.msra.mxu0 %v3549
  %3672 = vmatprep.subr.mxu0 %v3552
  %3673 = vmatpush1.msra.mxu0 %v3551
  %3674 = vmatprep.subr.mxu0 %v3554
  %3675 = vmatpush1.msra.mxu0 %v3553
  %3676 = vmatprep.subr.mxu0 0.0
  %3677 = vmatpush1.msra.mxu0 0.0
  %3678 = vmatprep.subr.mxu0 0.0
  %3679 = vmatpush1.msra.mxu0 0.0
  %3680 = vmatprep.subr.mxu0 0.0
  %3681 = vmatpush1.msra.mxu0 0.0
  %3682 = vmatprep.subr.mxu0 0.0
  %3683 = vmatpush1.msra.mxu0 0.0
  %3684 = vmatprep.subr.mxu0 0.0
  %3685 = vmatpush1.msra.mxu0 0.0
  %3686 = vmatprep.subr.mxu0 0.0
  %3687 = vmatpush1.msra.mxu0 0.0
  %3688 = vmatprep.subr.mxu0 0.0
  %3689 = vmatpush1.msra.mxu0 0.0
  %3690 = vmatprep.subr.mxu0 0.0
  %3691 = vmatpush1.msra.mxu0 0.0
  %3692 = vmatprep.subr.mxu0 0.0
  %3693 = vmatpush1.msra.mxu0 0.0
  %3694 = vmatprep.subr.mxu0 0.0
  %3695 = vmatpush1.msra.mxu0 0.0
  %3696 = vmatprep.subr.mxu0 0.0
  %3697 = vmatpush1.msra.mxu0 0.0
  %3698 = vmatprep.subr.mxu0 0.0
  %3699 = vmatpush1.msra.mxu0 0.0
  %3700 = vmatprep.subr.mxu0 0.0
  %3701 = vmatpush1.msra.mxu0 0.0
  %3702 = vmatprep.subr.mxu0 0.0
  %3703 = vmatpush1.msra.mxu0 0.0
  %3704 = vmatprep.subr.mxu0 0.0
  %3705 = vmatpush1.msra.mxu0 0.0
  %3706 = vmatprep.mubr.f32.mxu0 %v3569
  %3707 = vmatmul.mubr.f32.gmra.mrb[0].mxu0 %v3455
  %v3708 = vpop.f32.mrb[0].mxu0
  %v3709 = vadd.f32 %v3638, %v3708
  %v3710 = vpop.f32.mrb[0].mxu0
  %v3711 = vadd.f32 %v3640, %v3710
  %3712 = vdwg.mxu0
  %v3713 = vmax.f32 %v3709, 0.0
  %v3714 = vmax.f32 %v3711, 0.0
  %v3715 = vld [vmem:[%s7] sm:$0xff]
  %v3716 = vld [vmem:[%s7 + $0x8] sm:$0xff]
  %v3717 = vld [vmem:[%s7 + $0x10] sm:$0xff]
  %v3718 = vld [vmem:[%s7 + $0x18] sm:$0xff]
  %v3719 = vld [vmem:[%s7 + $0x20] sm:$0xff]
  %v3720 = vld [vmem:[%s7 + $0x28] sm:$0xff]
  %v3721 = vld [vmem:[%s7 + $0x30] sm:$0xff]
  %v3722 = vld [vmem:[%s7 + $0x38] sm:$0xff]
  %v3723 = vld [vmem:[%s7 + $0x40] sm:$0xff]
  %v3724 = vld [vmem:[%s7 + $0x48] sm:$0xff]
  %v3725 = vld [vmem:[%s7 + $0x50] sm:$0xff]
  %v3726 = vld [vmem:[%s7 + $0x58] sm:$0xff]
  %v3727 = vld [vmem:[%s7 + $0x60] sm:$0xff]
  %v3728 = vld [vmem:[%s7 + $0x68] sm:$0xff]
  %v3729 = vld [vmem:[%s7 + $0x70] sm:$0xff]
  %v3730 = vld [vmem:[%s7 + $0x78] sm:$0xff]
  %v3731 = vld [vmem:[%s7 + $0x80] sm:$0xff]
  %v3732 = vld [vmem:[%s7 + $0x88] sm:$0xff]
  %v3733 = vld [vmem:[%s7 + $0x90] sm:$0xff]
  %v3734 = vld [vmem:[%s7 + $0x98] sm:$0xff]
  %v3735 = vld [vmem:[%s7 + $0xa0] sm:$0xff]
  %v3736 = vld [vmem:[%s7 + $0xa8] sm:$0xff]
  %v3737 = vld [vmem:[%s7 + $0xb0] sm:$0xff]
  %v3738 = vld [vmem:[%s7 + $0xb8] sm:$0xff]
  %v3739 = vld [vmem:[%s7 + $0xc0] sm:$0xff]
  %v3740 = vld [vmem:[%s8] sm:$0x1]
  %vm3741 = vcmask 588800
  %v3743 = vsel %vm3741, %v3714, 0
  %3745 = vmatprep.subr.mxu0 0.0
  %3746 = vmatpush1.msra.mxu0 %v3715
  %3747 = vmatprep.subr.mxu0 0.0
  %3748 = vmatpush1.msra.mxu0 %v3716
  %3749 = vmatprep.subr.mxu0 0.0
  %3750 = vmatpush1.msra.mxu0 %v3717
  %3751 = vmatprep.subr.mxu0 0.0
  %3752 = vmatpush1.msra.mxu0 %v3718
  %3753 = vmatprep.subr.mxu0 0.0
  %3754 = vmatpush1.msra.mxu0 %v3719
  %3755 = vmatprep.subr.mxu0 0.0
  %3756 = vmatpush1.msra.mxu0 %v3720
  %3757 = vmatprep.subr.mxu0 0.0
  %3758 = vmatpush1.msra.mxu0 %v3721
  %3759 = vmatprep.subr.mxu0 0.0
  %3760 = vmatpush1.msra.mxu0 %v3722
  %3761 = vmatprep.subr.mxu0 0.0
  %3762 = vmatpush1.msra.mxu0 %v3723
  %3763 = vmatprep.subr.mxu0 0.0
  %3764 = vmatpush1.msra.mxu0 %v3724
  %3765 = vmatprep.subr.mxu0 0.0
  %3766 = vmatpush1.msra.mxu0 %v3725
  %3767 = vmatprep.subr.mxu0 0.0
  %3768 = vmatpush1.msra.mxu0 %v3726
  %3769 = vmatprep.subr.mxu0 0.0
  %3770 = vmatpush1.msra.mxu0 %v3727
  %3771 = vmatprep.subr.mxu0 0.0
  %3772 = vmatpush1.msra.mxu0 %v3728
  %3773 = vmatprep.subr.mxu0 0.0
  %3774 = vmatpush1.msra.mxu0 %v3729
  %3775 = vmatprep.subr.mxu0 0.0
  %3776 = vmatpush1.msra.mxu0 %v3730
  %3777 = vmatprep.subr.mxu0 0.0
  %3778 = vmatpush1.msra.mxu0 %v3731
  %3779 = vmatprep.subr.mxu0 0.0
  %3780 = vmatpush1.msra.mxu0 %v3732
  %3781 = vmatprep.subr.mxu0 0.0
  %3782 = vmatpush1.msra.mxu0 %v3733
  %3783 = vmatprep.subr.mxu0 0.0
  %3784 = vmatpush1.msra.mxu0 %v3734
  %3785 = vmatprep.subr.mxu0 0.0
  %3786 = vmatpush1.msra.mxu0 %v3735
  %3787 = vmatprep.subr.mxu0 0.0
  %3788 = vmatpush1.msra.mxu0 %v3736
  %3789 = vmatprep.subr.mxu0 0.0
  %3790 = vmatpush1.msra.mxu0 %v3737
  %3791 = vmatprep.subr.mxu0 0.0
  %3792 = vmatpush1.msra.mxu0 %v3738
  %3793 = vmatprep.subr.mxu0 0.0
  %3794 = vmatpush1.msra.mxu0 %v3739
  %3795 = vmatprep.subr.mxu0 0.0
  %3796 = vmatpush1.msra.mxu0 0.0
  %3797 = vmatprep.subr.mxu0 0.0
  %3798 = vmatpush1.msra.mxu0 0.0
  %3799 = vmatprep.subr.mxu0 0.0
  %3800 = vmatpush1.msra.mxu0 0.0
  %3801 = vmatprep.subr.mxu0 0.0
  %3802 = vmatpush1.msra.mxu0 0.0
  %3803 = vmatprep.subr.mxu0 0.0
  %3804 = vmatpush1.msra.mxu0 0.0
  %3805 = vmatprep.subr.mxu0 0.0
  %3806 = vmatpush1.msra.mxu0 0.0
  %3807 = vmatprep.subr.mxu0 0.0
  %3808 = vmatpush1.msra.mxu0 0.0
  %3809 = vmatprep.mubr.f32.mxu0 %v3743
  %3810 = vmatmul.mubr.f32.gmra.mrb[0].mxu0 %v3713
  %v3811 = vpop.f32.mrb[0].mxu0
  %v3812 = vadd.f32 %v3740, %v3811
  %v3813 = vpop.f32.mrb[0].mxu0
  %3814 = vdwg.mxu0
  %vm3815 = vcmask 253952
  %v3816 = vsel %vm3815, %v3812, 0.0
  %3817 = vadd.xlane.f32.xlu0 %v3816
  %v3818 = vpop.xlane.xlu0 %3817
  %v3819 = vrcp.pop 32.0
  %v3820 = vmul.f32 %v3818, %v3819
  %v3821 = vsub.f32 %v3812, %v3820
  %v3822 = vmul.f32 %v3821, %v3821
  %v3823 = vsel %vm3815, %v3822, 0.0
  %3824 = vadd.xlane.f32.xlu0 %v3823
  %v3825 = vpop.xlane.xlu0 %3824
  %v3826 = vmul.f32 %v3825, %v3819
  %v3827 = vadd.f32 %v3826, 1e-05
  %v3828 = vrsqrt.pop %v3827
  %v3829 = vmul.f32 %v3821, %v3828
  %v3830 = vld [vmem:[%s9] sm:$0x1]
  %v3831 = vmul.f32 %v3829, %v3830
  %v3832 = vld [vmem:[%s10] sm:$0x1]
  %v3833 = vadd.f32 %v3831, %v3832
  %v3834 = vld [vmem:[%s11] sm:$0xff]
  %v3835 = vld [vmem:[%s11 + $0x8] sm:$0xff]
  %v3836 = vld [vmem:[%s11 + $0x10] sm:$0xff]
  %v3837 = vld [vmem:[%s11 + $0x18] sm:$0xff]
  %v3838 = vld [vmem:[%s1] sm:$0x1]
  %v3839 = vld [vmem:[%s12] sm:$0xff]
  %v3841 = vsel %vm3567, %v3838, 0
  %3843 = vmatprep.subr.mxu0 0.0
  %3844 = vmatpush1.msra.mxu0 %v3839
  %3845 = vmatprep.subr.mxu0 0.0
  %3846 = vmatpush1.msra.mxu0 0.0
  %3847 = vmatprep.subr.mxu0 0.0
  %3848 = vmatpush1.msra.mxu0 0.0
  %3849 = vmatprep.subr.mxu0 0.0
  %3850 = vmatpush1.msra.mxu0 0.0
  %3851 = vmatprep.subr.mxu0 0.0
  %3852 = vmatpush1.msra.mxu0 0.0
  %3853 = vmatprep.subr.mxu0 0.0
  %3854 = vmatpush1.msra.mxu0 0.0
  %3855 = vmatprep.subr.mxu0 0.0
  %3856 = vmatpush1.msra.mxu0 0.0
  %3857 = vmatprep.subr.mxu0 0.0
  %3858 = vmatpush1.msra.mxu0 0.0
  %3859 = vmatprep.subr.mxu0 0.0
  %3860 = vmatpush1.msra.mxu0 0.0
  %3861 = vmatprep.subr.mxu0 0.0
  %3862 = vmatpush1.msra.mxu0 0.0
  %3863 = vmatprep.subr.mxu0 0.0
  %3864 = vmatpush1.msra.mxu0 0.0
  %3865 = vmatprep.subr.mxu0 0.0
  %3866 = vmatpush1.msra.mxu0 0.0
  %3867 = vmatprep.subr.mxu0 0.0
  %3868 = vmatpush1.msra.mxu0 0.0
  %3869 = vmatprep.subr.mxu0 0.0
  %3870 = vmatpush1.msra.mxu0 0.0
  %3871 = vmatprep.subr.mxu0 0.0
  %3872 = vmatpush1.msra.mxu0 0.0
  %3873 = vmatprep.subr.mxu0 0.0
  %3874 = vmatpush1.msra.mxu0 0.0
  %3875 = vmatprep.subr.mxu0 0.0
  %3876 = vmatpush1.msra.mxu0 0.0
  %3877 = vmatprep.subr.mxu0 0.0
  %3878 = vmatpush1.msra.mxu0 0.0
  %3879 = vmatprep.subr.mxu0 0.0
  %3880 = vmatpush1.msra.mxu0 0.0
  %3881 = vmatprep.subr.mxu0 0.0
  %3882 = vmatpush1.msra.mxu0 0.0
  %3883 = vmatprep.subr.mxu0 0.0
  %3884 = vmatpush1.msra.mxu0 0.0
  %3885 = vmatprep.subr.mxu0 0.0
  %3886 = vmatpush1.msra.mxu0 0.0
  %3887 = vmatprep.subr.mxu0 0.0
  %3888 = vmatpush1.msra.mxu0 0.0
  %3889 = vmatprep.subr.mxu0 0.0
  %3890 = vmatpush1.msra.mxu0 0.0
  %3891 = vmatprep.subr.mxu0 0.0
  %3892 = vmatpush1.msra.mxu0 0.0
  %3893 = vmatprep.subr.mxu0 0.0
  %3894 = vmatpush1.msra.mxu0 0.0
  %3895 = vmatprep.subr.mxu0 0.0
  %3896 = vmatpush1.msra.mxu0 0.0
  %3897 = vmatprep.subr.mxu0 0.0
  %3898 = vmatpush1.msra.mxu0 0.0
  %3899 = vmatprep.subr.mxu0 0.0
  %3900 = vmatpush1.msra.mxu0 0.0
  %3901 = vmatprep.subr.mxu0 0.0
  %3902 = vmatpush1.msra.mxu0 0.0
  %3903 = vmatprep.subr.mxu0 0.0
  %3904 = vmatpush1.msra.mxu0 0.0
  %3905 = vmatprep.subr.mxu0 0.0
  %3906 = vmatpush1.msra.mxu0 0.0
  %3907 = vmatprep.mubr.f32.mxu0 0.0
  %3908 = vmatmul.mubr.f32.gmra.mrb[0].mxu0 %v3841
  %v3909 = vpop.f32.mrb[0].mxu0
  %v3910 = vadd.f32 0.0, %v3909
  %v3911 = vpop.f32.mrb[0].mxu0
  %3912 = vdwg.mxu0
  %vm3913 = vcmask 261120
  %v3915 = vsel %vm3913, %v3833, 0
  %3917 = vmatprep.subr.mxu0 0.0
  %3918 = vmatpush1.msra.mxu0 %v3834
  %3919 = vmatprep.subr.mxu0 0.0
  %3920 = vmatpush1.msra.mxu0 %v3835
  %3921 = vmatprep.subr.mxu0 0.0
  %3922 = vmatpush1.msra.mxu0 %v3836
  %3923 = vmatprep.subr.mxu0 0.0
  %3924 = vmatpush1.msra.mxu0 %v3837
  %3925 = vmatprep.subr.mxu0 0.0
  %3926 = vmatpush1.msra.mxu0 0.0
  %3927 = vmatprep.subr.mxu0 0.0
  %3928 = vmatpush1.msra.mxu0 0.0
  %3929 = vmatprep.subr.mxu0 0.0
  %3930 = vmatpush1.msra.mxu0 0.0
  %3931 = vmatprep.subr.mxu0 0.0
  %3932 = vmatpush1.msra.mxu0 0.0
  %3933 = vmatprep.subr.mxu0 0.0
  %3934 = vmatpush1.msra.mxu0 0.0
  %3935 = vmatprep.subr.mxu0 0.0
  %3936 = vmatpush1.msra.mxu0 0.0
  %3937 = vmatprep.subr.mxu0 0.0
  %3938 = vmatpush1.msra.mxu0 0.0
  %3939 = vmatprep.subr.mxu0 0.0
  %3940 = vmatpush1.msra.mxu0 0.0
  %3941 = vmatprep.subr.mxu0 0.0
  %3942 = vmatpush1.msra.mxu0 0.0
  %3943 = vmatprep.subr.mxu0 0.0
  %3944 = vmatpush1.msra.mxu0 0.0
  %3945 = vmatprep.subr.mxu0 0.0
  %3946 = vmatpush1.msra.mxu0 0.0
  %3947 = vmatprep.subr.mxu0 0.0
  %3948 = vmatpush1.msra.mxu0 0.0
  %3949 = vmatprep.subr.mxu0 0.0
  %3950 = vmatpush1.msra.mxu0 0.0
  %3951 = vmatprep.subr.mxu0 0.0
  %3952 = vmatpush1.msra.mxu0 0.0
  %3953 = vmatprep.subr.mxu0 0.0
  %3954 = vmatpush1.msra.mxu0 0.0
  %3955 = vmatprep.subr.mxu0 0.0
  %3956 = vmatpush1.msra.mxu0 0.0
  %3957 = vmatprep.subr.mxu0 0.0
  %3958 = vmatpush1.msra.mxu0 0.0
  %3959 = vmatprep.subr.mxu0 0.0
  %3960 = vmatpush1.msra.mxu0 0.0
  %3961 = vmatprep.subr.mxu0 0.0
  %3962 = vmatpush1.msra.mxu0 0.0
  %3963 = vmatprep.subr.mxu0 0.0
  %3964 = vmatpush1.msra.mxu0 0.0
  %3965 = vmatprep.subr.mxu0 0.0
  %3966 = vmatpush1.msra.mxu0 0.0
  %3967 = vmatprep.subr.mxu0 0.0
  %3968 = vmatpush1.msra.mxu0 0.0
  %3969 = vmatprep.subr.mxu0 0.0
  %3970 = vmatpush1.msra.mxu0 0.0
  %3971 = vmatprep.subr.mxu0 0.0
  %3972 = vmatpush1.msra.mxu0 0.0
  %3973 = vmatprep.subr.mxu0 0.0
  %3974 = vmatpush1.msra.mxu0 0.0
  %3975 = vmatprep.subr.mxu0 0.0
  %3976 = vmatpush1.msra.mxu0 0.0
  %3977 = vmatprep.subr.mxu0 0.0
  %3978 = vmatpush1.msra.mxu0 0.0
  %3979 = vmatprep.subr.mxu0 0.0
  %3980 = vmatpush1.msra.mxu0 0.0
  %3981 = vmatprep.mubr.f32.mxu0 0.0
  %3982 = vmatmul.mubr.f32.gmra.mrb[0].mxu0 %v3915
  %v3983 = vpop.f32.mrb[0].mxu0
  %v3984 = vadd.f32 %v3910, %v3983
  %v3985 = vpop.f32.mrb[0].mxu0
  %3986 = vdwg.mxu0
  %v3987 = vld [vmem:[%s2] sm:$0x1]
  %v3988 = vld [vmem:[%s13] sm:$0xff]
  %v3989 = vld [vmem:[%s13 + $0x8] sm:$0xf]
  %vm3990 = vcmask 97280
  %v3992 = vsel %vm3990, %v3987, 0
  %vm3994 = vcmask 1043456
  %v3996 = vsel %vm3994, %v3989, 0
  %3998 = vmatprep.subr.mxu0 0.0
  %3999 = vmatpush1.msra.mxu0 %v3988
  %4000 = vmatprep.subr.mxu0 0.0
  %4001 = vmatpush1.msra.mxu0 %v3996
  %4002 = vmatprep.subr.mxu0 0.0
  %4003 = vmatpush1.msra.mxu0 0.0
  %4004 = vmatprep.subr.mxu0 0.0
  %4005 = vmatpush1.msra.mxu0 0.0
  %4006 = vmatprep.subr.mxu0 0.0
  %4007 = vmatpush1.msra.mxu0 0.0
  %4008 = vmatprep.subr.mxu0 0.0
  %4009 = vmatpush1.msra.mxu0 0.0
  %4010 = vmatprep.subr.mxu0 0.0
  %4011 = vmatpush1.msra.mxu0 0.0
  %4012 = vmatprep.subr.mxu0 0.0
  %4013 = vmatpush1.msra.mxu0 0.0
  %4014 = vmatprep.subr.mxu0 0.0
  %4015 = vmatpush1.msra.mxu0 0.0
  %4016 = vmatprep.subr.mxu0 0.0
  %4017 = vmatpush1.msra.mxu0 0.0
  %4018 = vmatprep.subr.mxu0 0.0
  %4019 = vmatpush1.msra.mxu0 0.0
  %4020 = vmatprep.subr.mxu0 0.0
  %4021 = vmatpush1.msra.mxu0 0.0
  %4022 = vmatprep.subr.mxu0 0.0
  %4023 = vmatpush1.msra.mxu0 0.0
  %4024 = vmatprep.subr.mxu0 0.0
  %4025 = vmatpush1.msra.mxu0 0.0
  %4026 = vmatprep.subr.mxu0 0.0
  %4027 = vmatpush1.msra.mxu0 0.0
  %4028 = vmatprep.subr.mxu0 0.0
  %4029 = vmatpush1.msra.mxu0 0.0
  %4030 = vmatprep.subr.mxu0 0.0
  %4031 = vmatpush1.msra.mxu0 0.0
  %4032 = vmatprep.subr.mxu0 0.0
  %4033 = vmatpush1.msra.mxu0 0.0
  %4034 = vmatprep.subr.mxu0 0.0
  %4035 = vmatpush1.msra.mxu0 0.0
  %4036 = vmatprep.subr.mxu0 0.0
  %4037 = vmatpush1.msra.mxu0 0.0
  %4038 = vmatprep.subr.mxu0 0.0
  %4039 = vmatpush1.msra.mxu0 0.0
  %4040 = vmatprep.subr.mxu0 0.0
  %4041 = vmatpush1.msra.mxu0 0.0
  %4042 = vmatprep.subr.mxu0 0.0
  %4043 = vmatpush1.msra.mxu0 0.0
  %4044 = vmatprep.subr.mxu0 0.0
  %4045 = vmatpush1.msra.mxu0 0.0
  %4046 = vmatprep.subr.mxu0 0.0
  %4047 = vmatpush1.msra.mxu0 0.0
  %4048 = vmatprep.subr.mxu0 0.0
  %4049 = vmatpush1.msra.mxu0 0.0
  %4050 = vmatprep.subr.mxu0 0.0
  %4051 = vmatpush1.msra.mxu0 0.0
  %4052 = vmatprep.subr.mxu0 0.0
  %4053 = vmatpush1.msra.mxu0 0.0
  %4054 = vmatprep.subr.mxu0 0.0
  %4055 = vmatpush1.msra.mxu0 0.0
  %4056 = vmatprep.subr.mxu0 0.0
  %4057 = vmatpush1.msra.mxu0 0.0
  %4058 = vmatprep.subr.mxu0 0.0
  %4059 = vmatpush1.msra.mxu0 0.0
  %4060 = vmatprep.subr.mxu0 0.0
  %4061 = vmatpush1.msra.mxu0 0.0
  %4062 = vmatprep.mubr.f32.mxu0 0.0
  %4063 = vmatmul.mubr.f32.gmra.mrb[0].mxu0 %v3992
  %v4064 = vpop.f32.mrb[0].mxu0
  %v4065 = vadd.f32 0.0, %v4064
  %v4066 = vpop.f32.mrb[0].mxu0
  %4067 = vdwg.mxu0
  %v4068 = vadd.f32 %v3984, %v4065
  %v4069 = vld [vmem:[%s14] sm:$0x1]
  %v4070 = vadd.f32 %v4068, %v4069
  %vm4071 = vcmp.gt.f32.partialorder %v4070, 0.0
  %v4072 = vmul.f32 %v4070, 1.442695
  %v4073 = vpow.pop %v4072
  %v4074 = vsub.f32 %v4073, 1.0
  %v4075 = vsel %vm4071, %v4070, %v4074
  %v4076 = vld [vmem:[%s15] sm:$0xff]
  %v4077 = vld [vmem:[%s15 + $0x8] sm:$0xff]
  %v4078 = vld [vmem:[%s15 + $0x10] sm:$0xff]
  %v4079 = vld [vmem:[%s15 + $0x18] sm:$0xff]
  %v4080 = vld [vmem:[%s16] sm:$0x1]
  %v4082 = vsel %vm3913, %v4075, 0
  %4084 = vmatprep.subr.mxu0 0.0
  %4085 = vmatpush1.msra.mxu0 %v4076
  %4086 = vmatprep.subr.mxu0 0.0
  %4087 = vmatpush1.msra.mxu0 %v4077
  %4088 = vmatprep.subr.mxu0 0.0
  %4089 = vmatpush1.msra.mxu0 %v4078
  %4090 = vmatprep.subr.mxu0 0.0
  %4091 = vmatpush1.msra.mxu0 %v4079
  %4092 = vmatprep.subr.mxu0 0.0
  %4093 = vmatpush1.msra.mxu0 0.0
  %4094 = vmatprep.subr.mxu0 0.0
  %4095 = vmatpush1.msra.mxu0 0.0
  %4096 = vmatprep.subr.mxu0 0.0
  %4097 = vmatpush1.msra.mxu0 0.0
  %4098 = vmatprep.subr.mxu0 0.0
  %4099 = vmatpush1.msra.mxu0 0.0
  %4100 = vmatprep.subr.mxu0 0.0
  %4101 = vmatpush1.msra.mxu0 0.0
  %4102 = vmatprep.subr.mxu0 0.0
  %4103 = vmatpush1.msra.mxu0 0.0
  %4104 = vmatprep.subr.mxu0 0.0
  %4105 = vmatpush1.msra.mxu0 0.0
  %4106 = vmatprep.subr.mxu0 0.0
  %4107 = vmatpush1.msra.mxu0 0.0
  %4108 = vmatprep.subr.mxu0 0.0
  %4109 = vmatpush1.msra.mxu0 0.0
  %4110 = vmatprep.subr.mxu0 0.0
  %4111 = vmatpush1.msra.mxu0 0.0
  %4112 = vmatprep.subr.mxu0 0.0
  %4113 = vmatpush1.msra.mxu0 0.0
  %4114 = vmatprep.subr.mxu0 0.0
  %4115 = vmatpush1.msra.mxu0 0.0
  %4116 = vmatprep.subr.mxu0 0.0
  %4117 = vmatpush1.msra.mxu0 0.0
  %4118 = vmatprep.subr.mxu0 0.0
  %4119 = vmatpush1.msra.mxu0 0.0
  %4120 = vmatprep.subr.mxu0 0.0
  %4121 = vmatpush1.msra.mxu0 0.0
  %4122 = vmatprep.subr.mxu0 0.0
  %4123 = vmatpush1.msra.mxu0 0.0
  %4124 = vmatprep.subr.mxu0 0.0
  %4125 = vmatpush1.msra.mxu0 0.0
  %4126 = vmatprep.subr.mxu0 0.0
  %4127 = vmatpush1.msra.mxu0 0.0
  %4128 = vmatprep.subr.mxu0 0.0
  %4129 = vmatpush1.msra.mxu0 0.0
  %4130 = vmatprep.subr.mxu0 0.0
  %4131 = vmatpush1.msra.mxu0 0.0
  %4132 = vmatprep.subr.mxu0 0.0
  %4133 = vmatpush1.msra.mxu0 0.0
  %4134 = vmatprep.subr.mxu0 0.0
  %4135 = vmatpush1.msra.mxu0 0.0
  %4136 = vmatprep.subr.mxu0 0.0
  %4137 = vmatpush1.msra.mxu0 0.0
  %4138 = vmatprep.subr.mxu0 0.0
  %4139 = vmatpush1.msra.mxu0 0.0
  %4140 = vmatprep.subr.mxu0 0.0
  %4141 = vmatpush1.msra.mxu0 0.0
  %4142 = vmatprep.subr.mxu0 0.0
  %4143 = vmatpush1.msra.mxu0 0.0
  %4144 = vmatprep.subr.mxu0 0.0
  %4145 = vmatpush1.msra.mxu0 0.0
  %4146 = vmatprep.subr.mxu0 0.0
  %4147 = vmatpush1.msra.mxu0 0.0
  %4148 = vmatprep.mubr.f32.mxu0 0.0
  %4149 = vmatmul.mubr.f32.gmra.mrb[0].mxu0 %v4082
  %v4150 = vpop.f32.mrb[0].mxu0
  %v4151 = vadd.f32 %v4080, %v4150
  %v4152 = vpop.f32.mrb[0].mxu0
  %4153 = vdwg.mxu0
  %vm4154 = vcmp.gt.f32.partialorder %v4151, 0.0
  %v4155 = vmul.f32 %v4151, 1.442695
  %v4156 = vpow.pop %v4155
  %v4157 = vsub.f32 %v4156, 1.0
  %v4158 = vsel %vm4154, %v4151, %v4157
  %v4159 = vld [vmem:[%s17] sm:$0xff]
  %v4160 = vld [vmem:[%s17 + $0x8] sm:$0xff]
  %v4161 = vld [vmem:[%s17 + $0x10] sm:$0xff]
  %v4162 = vld [vmem:[%s17 + $0x18] sm:$0xff]
  %v4163 = vld [vmem:[%s18] sm:$0x1]
  %v4165 = vsel %vm3913, %v4158, 0
  %4167 = vmatprep.subr.mxu0 0.0
  %4168 = vmatpush1.msra.mxu0 %v4159
  %4169 = vmatprep.subr.mxu0 0.0
  %4170 = vmatpush1.msra.mxu0 %v4160
  %4171 = vmatprep.subr.mxu0 0.0
  %4172 = vmatpush1.msra.mxu0 %v4161
  %4173 = vmatprep.subr.mxu0 0.0
  %4174 = vmatpush1.msra.mxu0 %v4162
  %4175 = vmatprep.subr.mxu0 0.0
  %4176 = vmatpush1.msra.mxu0 0.0
  %4177 = vmatprep.subr.mxu0 0.0
  %4178 = vmatpush1.msra.mxu0 0.0
  %4179 = vmatprep.subr.mxu0 0.0
  %4180 = vmatpush1.msra.mxu0 0.0
  %4181 = vmatprep.subr.mxu0 0.0
  %4182 = vmatpush1.msra.mxu0 0.0
  %4183 = vmatprep.subr.mxu0 0.0
  %4184 = vmatpush1.msra.mxu0 0.0
  %4185 = vmatprep.subr.mxu0 0.0
  %4186 = vmatpush1.msra.mxu0 0.0
  %4187 = vmatprep.subr.mxu0 0.0
  %4188 = vmatpush1.msra.mxu0 0.0
  %4189 = vmatprep.subr.mxu0 0.0
  %4190 = vmatpush1.msra.mxu0 0.0
  %4191 = vmatprep.subr.mxu0 0.0
  %4192 = vmatpush1.msra.mxu0 0.0
  %4193 = vmatprep.subr.mxu0 0.0
  %4194 = vmatpush1.msra.mxu0 0.0
  %4195 = vmatprep.subr.mxu0 0.0
  %4196 = vmatpush1.msra.mxu0 0.0
  %4197 = vmatprep.subr.mxu0 0.0
  %4198 = vmatpush1.msra.mxu0 0.0
  %4199 = vmatprep.subr.mxu0 0.0
  %4200 = vmatpush1.msra.mxu0 0.0
  %4201 = vmatprep.subr.mxu0 0.0
  %4202 = vmatpush1.msra.mxu0 0.0
  %4203 = vmatprep.subr.mxu0 0.0
  %4204 = vmatpush1.msra.mxu0 0.0
  %4205 = vmatprep.subr.mxu0 0.0
  %4206 = vmatpush1.msra.mxu0 0.0
  %4207 = vmatprep.subr.mxu0 0.0
  %4208 = vmatpush1.msra.mxu0 0.0
  %4209 = vmatprep.subr.mxu0 0.0
  %4210 = vmatpush1.msra.mxu0 0.0
  %4211 = vmatprep.subr.mxu0 0.0
  %4212 = vmatpush1.msra.mxu0 0.0
  %4213 = vmatprep.subr.mxu0 0.0
  %4214 = vmatpush1.msra.mxu0 0.0
  %4215 = vmatprep.subr.mxu0 0.0
  %4216 = vmatpush1.msra.mxu0 0.0
  %4217 = vmatprep.subr.mxu0 0.0
  %4218 = vmatpush1.msra.mxu0 0.0
  %4219 = vmatprep.subr.mxu0 0.0
  %4220 = vmatpush1.msra.mxu0 0.0
  %4221 = vmatprep.subr.mxu0 0.0
  %4222 = vmatpush1.msra.mxu0 0.0
  %4223 = vmatprep.subr.mxu0 0.0
  %4224 = vmatpush1.msra.mxu0 0.0
  %4225 = vmatprep.subr.mxu0 0.0
  %4226 = vmatpush1.msra.mxu0 0.0
  %4227 = vmatprep.subr.mxu0 0.0
  %4228 = vmatpush1.msra.mxu0 0.0
  %4229 = vmatprep.subr.mxu0 0.0
  %4230 = vmatpush1.msra.mxu0 0.0
  %4231 = vmatprep.mubr.f32.mxu0 0.0
  %4232 = vmatmul.mubr.f32.gmra.mrb[0].mxu0 %v4165
  %v4233 = vpop.f32.mrb[0].mxu0
  %v4234 = vadd.f32 %v4163, %v4233
  %v4235 = vpop.f32.mrb[0].mxu0
  %4236 = vdwg.mxu0
  %v4237 = vmul.f32 %v4234, 1.442695
  %v4238 = vpow.pop %v4237
  %4239 = vst [vmem:[%s19] sm:$0x1] %v4238
  // Predicated region
  $region78: #{sim_param_forward.1} parent=0 // pred_check
    _
  $region79: #{sim_param_forward.1} parent=0 // pred_check_branch
    %4241 = sbr.rel (0) target = $region81
  $region80: #{sim_param_forward.1} parent=0 // pred_region
    _
  $region81: #{sim_param_forward.1} parent=0 // pred_fallthru
    _
  // Predicated region
  $region82: #{sim_param_forward.1} parent=0 // pred_check
    _
  $region83: #{sim_param_forward.1} parent=0 // pred_check_branch
    %4243 = sbr.rel (0) target = $region85
  $region84: #{sim_param_forward.1} parent=0 // pred_region
    _
  $region85: #{sim_param_forward.1} parent=0 // pred_fallthru
    _

</llo_original>
